<compile_context>
chip_gen: v7x
topology: tpu7x:2x2x1
jax: 0.10.0
libtpu: 0.0.40
codegen_flags: <defaults>
</compile_context>

<pallas_src>
import jax
import jax.numpy as jnp
from jax.experimental import pallas as pl
from jax.experimental.pallas import tpu as pltpu

D_IN, D_H1, D_H2, D_OUT = 4 * 3 * 150, 512, 128, 9
D_OUT_PAD = 128    # lane-dense output store; real 9 columns sliced off in the wrapper


def _round_up(x, m):
    return (x + m - 1) // m * m


def _mlp_kernel(x_ref, w1_ref, b1_ref, w2_ref, b2_ref, w3_ref, b3_ref, out_ref):
    # x_ref: (TB, 1800) f32; weights bf16 (fan_in, fan_out_padded); biases f32 (1, fan_out_padded).
    x = x_ref[...].astype(jnp.bfloat16)                              # cast hidden under DMA
    h1 = jnp.dot(x, w1_ref[...], preferred_element_type=jnp.float32)
    h1 = jnp.maximum(h1 + b1_ref[...], 0.0)                          # f32 bias + ReLU
    h2 = jnp.dot(h1.astype(jnp.bfloat16), w2_ref[...],
                 preferred_element_type=jnp.float32)
    h2 = jnp.maximum(h2 + b2_ref[...], 0.0)
    out = jnp.dot(h2.astype(jnp.bfloat16), w3_ref[...],
                  preferred_element_type=jnp.float32)
    out_ref[...] = (out + b3_ref[...]).astype(out_ref.dtype)


def dnn_forward(x, params, *, tb=1024):
    """x: (B, 4, 3, 150) float32. Returns (B, 3, 3) float32."""
    w1, b1, w2, b2, w3, b3 = params
    B = x.shape[0]

    # nn.Flatten (row-major reshape, free). No dtype/pad pre-pass.
    # TODO(synk): if the producer can hand over bf16 directly, the x HBM read halves again.
    x_flat = x.reshape(B, D_IN)

    # Batch tile: multiple of 16 (bf16 sublane packing); cap it so there are at
    # least 2 grid steps whenever B allows (megacore split on v7x, no-op elsewhere).
    TB = min(tb, _round_up(B, 16))
    if B >= 32 and pl.cdiv(B, TB) < 2:
        TB = _round_up(pl.cdiv(B, 2), 16)
    grid = (pl.cdiv(B, TB),)

    resident = dict(pipeline_mode=pl.Buffered(1))   # constant index_map -> single buffer

    out = pl.pallas_call(
        _mlp_kernel,
        out_shape=jax.ShapeDtypeStruct((B, D_OUT_PAD), jnp.float32),
        grid_spec=pltpu.PrefetchScalarGridSpec(
            num_scalar_prefetch=0,
            grid=grid,
            in_specs=[
                pl.BlockSpec((TB, D_IN), lambda i: (i, 0)),                 # x tile (pipelined)
                pl.BlockSpec((D_IN, D_H1), lambda i: (0, 0), **resident),   # w1 (VMEM-resident)
                pl.BlockSpec((1, D_H1), lambda i: (0, 0), **resident),      # b1
                pl.BlockSpec((D_H1, D_H2), lambda i: (0, 0), **resident),   # w2
                pl.BlockSpec((1, D_H2), lambda i: (0, 0), **resident),      # b2
                pl.BlockSpec((D_H2, D_OUT_PAD), lambda i: (0, 0), **resident),  # w3
                pl.BlockSpec((1, D_OUT_PAD), lambda i: (0, 0), **resident),     # b3
            ],
            out_specs=pl.BlockSpec((TB, D_OUT_PAD), lambda i: (i, 0)),
        ),
        compiler_params=pltpu.CompilerParams(
            dimension_semantics=("parallel",),
            vmem_limit_bytes=32 * 1024 * 1024,
        ),
    )(x_flat, w1, b1, w2, b2, w3, b3)

    return out[:, :D_OUT].reshape(-1, 3, 3)


def init_params(key):
    """Kernel-ready params mimicking nn.Linear init uniform(+-1/sqrt(fan_in)).

    Weights stored as (fan_in, fan_out_padded) bf16 (x @ W == PyTorch x @ W.T),
    biases as (1, fan_out_padded) f32. Padding columns are zero, so they never
    affect the real outputs."""
    ks = jax.random.split(key, 6)

    def lin(kw, kb, fan_in, fan_out, out_pad):
        bound = 1.0 / jnp.sqrt(jnp.float32(fan_in))
        w = jax.random.uniform(kw, (fan_in, fan_out), jnp.float32, -bound, bound)
        b = jax.random.uniform(kb, (1, fan_out), jnp.float32, -bound, bound)
        w = jnp.pad(w, ((0, 0), (0, out_pad - fan_out)))
        b = jnp.pad(b, ((0, 0), (0, out_pad - fan_out)))
        return w.astype(jnp.bfloat16), b.astype(jnp.float32)

    w1, b1 = lin(ks[0], ks[1], D_IN, D_H1, D_H1)
    w2, b2 = lin(ks[2], ks[3], D_H1, D_H2, D_H2)
    w3, b3 = lin(ks[4], ks[5], D_H2, D_OUT, D_OUT_PAD)
    return (w1, b1, w2, b2, w3, b3)


def _reference(x, params):
    """Plain-JAX reference mirroring the kernel math (bf16 MXU inputs, f32 accumulate)."""
    w1, b1, w2, b2, w3, b3 = params
    B = x.shape[0]
    xf = x.reshape(B, D_IN).astype(jnp.bfloat16)
    h = jnp.maximum(jnp.dot(xf, w1, preferred_element_type=jnp.float32) + b1, 0.0)
    h = jnp.maximum(
        jnp.dot(h.astype(jnp.bfloat16), w2, preferred_element_type=jnp.float32) + b2,
        0.0,
    )
    out = jnp.dot(h.astype(jnp.bfloat16), w3, preferred_element_type=jnp.float32) + b3
    return out[:, :D_OUT].reshape(-1, 3, 3)


if __name__ == "__main__":
    key = jax.random.PRNGKey(0)
    k_params, k_x = jax.random.split(key)
    params = init_params(k_params)

    B = 2
    x = jax.random.normal(k_x, (B, 4, 3, 150), jnp.float32)

    y = dnn_forward(x, params)
    y = jax.block_until_ready(y)

    r = _reference(x, params)
    assert y.shape == (B, 3, 3)
    assert jnp.allclose(y, r, atol=1e-2, rtol=1e-2), float(jnp.max(jnp.abs(y - r)))

    print("KERNEL_OK")
</pallas_src>

<mosaic_0001>
module attributes {stable_mosaic.version = 11 : i64} {
  func.func @_mlp_kernel(%arg0: i32, %arg1: memref<16x1800xf32, #tpu.memory_space<vmem>>, %arg2: memref<1800x512xbf16, #tpu.memory_space<vmem>>, %arg3: memref<1x512xf32, #tpu.memory_space<vmem>>, %arg4: memref<512x128xbf16, #tpu.memory_space<vmem>>, %arg5: memref<1x128xf32, #tpu.memory_space<vmem>>, %arg6: memref<128x128xbf16, #tpu.memory_space<vmem>>, %arg7: memref<1x128xf32, #tpu.memory_space<vmem>>, %arg8: memref<16x128xf32, #tpu.memory_space<vmem>>) attributes {dimension_semantics = [#tpu.dimension_semantics<parallel>], iteration_bounds = array<i64: 1>, scalar_prefetch = 0 : i64, scratch_operands = 0 : i64, tpu.core_type = #tpu.core_type<tc>, window_params = [{transform_indices = @transform_0, window_bounds = array<i64: 16, 1800>}, {pipeline_mode = #tpu.pipeline_mode<synchronous>, transform_indices = @transform_1, window_bounds = array<i64: 1800, 512>}, {pipeline_mode = #tpu.pipeline_mode<synchronous>, transform_indices = @transform_2, window_bounds = array<i64: 1, 512>}, {pipeline_mode = #tpu.pipeline_mode<synchronous>, transform_indices = @transform_3, window_bounds = array<i64: 512, 128>}, {pipeline_mode = #tpu.pipeline_mode<synchronous>, transform_indices = @transform_4, window_bounds = array<i64: 1, 128>}, {pipeline_mode = #tpu.pipeline_mode<synchronous>, transform_indices = @transform_5, window_bounds = array<i64: 128, 128>}, {pipeline_mode = #tpu.pipeline_mode<synchronous>, transform_indices = @transform_6, window_bounds = array<i64: 1, 128>}, {transform_indices = @transform_7, window_bounds = array<i64: 16, 128>}]} {
    %c0 = arith.constant 0 : index
    %c0_0 = arith.constant 0 : index
    %0 = vector.load %arg1[%c0, %c0_0] : memref<16x1800xf32, #tpu.memory_space<vmem>>, vector<16x1800xf32>
    %1 = arith.truncf %0 : vector<16x1800xf32> to vector<16x1800xbf16>
    %c0_1 = arith.constant 0 : index
    %c0_2 = arith.constant 0 : index
    %2 = vector.load %arg2[%c0_1, %c0_2] : memref<1800x512xbf16, #tpu.memory_space<vmem>>, vector<1800x512xbf16>
    %cst = arith.constant dense<0.000000e+00> : vector<16x512xf32>
    %3 = tpu.matmul %1, %2, %cst {dimension_numbers = #tpu.dot_dimension_numbers<[1], [0], [0], [1], [0, 0, 1, 1], [], []>} : vector<16x1800xbf16>, vector<1800x512xbf16>, vector<16x512xf32> -> vector<16x512xf32>
    %c0_3 = arith.constant 0 : index
    %c0_4 = arith.constant 0 : index
    %4 = vector.load %arg3[%c0_3, %c0_4] : memref<1x512xf32, #tpu.memory_space<vmem>>, vector<1x512xf32>
    %5 = vector.broadcast %4 : vector<1x512xf32> to vector<16x512xf32>
    %6 = arith.addf %3, %5 : vector<16x512xf32>
    %cst_5 = arith.constant 0.000000e+00 : f32
    %7 = vector.broadcast %cst_5 : f32 to vector<16x512xf32>
    %8 = arith.maximumf %6, %7 : vector<16x512xf32>
    %9 = arith.truncf %8 : vector<16x512xf32> to vector<16x512xbf16>
    %c0_6 = arith.constant 0 : index
    %c0_7 = arith.constant 0 : index
    %10 = vector.load %arg4[%c0_6, %c0_7] : memref<512x128xbf16, #tpu.memory_space<vmem>>, vector<512x128xbf16>
    %cst_8 = arith.constant dense<0.000000e+00> : vector<16x128xf32>
    %11 = tpu.matmul %9, %10, %cst_8 {dimension_numbers = #tpu.dot_dimension_numbers<[1], [0], [0], [1], [0, 0, 1, 1], [], []>} : vector<16x512xbf16>, vector<512x128xbf16>, vector<16x128xf32> -> vector<16x128xf32>
    %c0_9 = arith.constant 0 : index
    %c0_10 = arith.constant 0 : index
    %12 = vector.load %arg5[%c0_9, %c0_10] : memref<1x128xf32, #tpu.memory_space<vmem>>, vector<1x128xf32>
    %13 = vector.broadcast %12 : vector<1x128xf32> to vector<16x128xf32>
    %14 = arith.addf %11, %13 : vector<16x128xf32>
    %cst_11 = arith.constant 0.000000e+00 : f32
    %15 = vector.broadcast %cst_11 : f32 to vector<16x128xf32>
    %16 = arith.maximumf %14, %15 : vector<16x128xf32>
    %17 = arith.truncf %16 : vector<16x128xf32> to vector<16x128xbf16>
    %c0_12 = arith.constant 0 : index
    %c0_13 = arith.constant 0 : index
    %18 = vector.load %arg6[%c0_12, %c0_13] : memref<128x128xbf16, #tpu.memory_space<vmem>>, vector<128x128xbf16>
    %cst_14 = arith.constant dense<0.000000e+00> : vector<16x128xf32>
    %19 = tpu.matmul %17, %18, %cst_14 {dimension_numbers = #tpu.dot_dimension_numbers<[1], [0], [0], [1], [0, 0, 1, 1], [], []>} : vector<16x128xbf16>, vector<128x128xbf16>, vector<16x128xf32> -> vector<16x128xf32>
    %c0_15 = arith.constant 0 : index
    %c0_16 = arith.constant 0 : index
    %20 = vector.load %arg7[%c0_15, %c0_16] : memref<1x128xf32, #tpu.memory_space<vmem>>, vector<1x128xf32>
    %21 = vector.broadcast %20 : vector<1x128xf32> to vector<16x128xf32>
    %22 = arith.addf %19, %21 : vector<16x128xf32>
    %c0_17 = arith.constant 0 : index
    %c0_18 = arith.constant 0 : index
    %23 = vector.load %arg8[%c0_17, %c0_18] : memref<16x128xf32, #tpu.memory_space<vmem>>, vector<16x128xf32>
    tpu.vector_store %arg8[%c0_17, %c0_18], %22 {strides = array<i32>} : memref<16x128xf32, #tpu.memory_space<vmem>>, vector<16x128xf32>,
    return
  }
  func.func @transform_0(%arg0: i32) -> (i32, i32) {
    %c0_i32 = arith.constant 0 : i32
    %c0_i32_0 = arith.constant 0 : i32
    return %arg0, %c0_i32 : i32, i32
  }
  func.func @transform_1(%arg0: i32) -> (i32, i32) {
    %c0_i32 = arith.constant 0 : i32
    %c0_i32_0 = arith.constant 0 : i32
    %c0_i32_1 = arith.constant 0 : i32
    return %c0_i32, %c0_i32_0 : i32, i32
  }
  func.func @transform_2(%arg0: i32) -> (i32, i32) {
    %c0_i32 = arith.constant 0 : i32
    %c0_i32_0 = arith.constant 0 : i32
    %c0_i32_1 = arith.constant 0 : i32
    return %c0_i32, %c0_i32_0 : i32, i32
  }
  func.func @transform_3(%arg0: i32) -> (i32, i32) {
    %c0_i32 = arith.constant 0 : i32
    %c0_i32_0 = arith.constant 0 : i32
    %c0_i32_1 = arith.constant 0 : i32
    return %c0_i32, %c0_i32_0 : i32, i32
  }
  func.func @transform_4(%arg0: i32) -> (i32, i32) {
    %c0_i32 = arith.constant 0 : i32
    %c0_i32_0 = arith.constant 0 : i32
    %c0_i32_1 = arith.constant 0 : i32
    return %c0_i32, %c0_i32_0 : i32, i32
  }
  func.func @transform_5(%arg0: i32) -> (i32, i32) {
    %c0_i32 = arith.constant 0 : i32
    %c0_i32_0 = arith.constant 0 : i32
    %c0_i32_1 = arith.constant 0 : i32
    return %c0_i32, %c0_i32_0 : i32, i32
  }
  func.func @transform_6(%arg0: i32) -> (i32, i32) {
    %c0_i32 = arith.constant 0 : i32
    %c0_i32_0 = arith.constant 0 : i32
    %c0_i32_1 = arith.constant 0 : i32
    return %c0_i32, %c0_i32_0 : i32, i32
  }
  func.func @transform_7(%arg0: i32) -> (i32, i32) {
    %c0_i32 = arith.constant 0 : i32
    %c0_i32_0 = arith.constant 0 : i32
    return %arg0, %c0_i32 : i32, i32
  }
}

</mosaic_0001>

<llo_original>
// kernel: tpu_custom_call.1
$region0: #{tpu_custom_call.1}
  #allocation0 [shape = 'u32[]', space=smem, size = 0x4, offset = 0x4, fixed_abs, tag = 'smem constant byte address 0x4 - core index']
  #allocation1 [shape = 'u32[144,128]{1,0:T(1,128)}', space=vmem, size = 0x12000, scoped, tag = 'internal scratch']
  %s0 = inlined_call_operand.hbm [shape: f32[2,1800], index: 0, kind: input, shape index: {}]
  %s1 = inlined_call_operand.hbm [shape: bf16[1800,512], index: 1, kind: input, shape index: {}]
  %s2 = inlined_call_operand.hbm [shape: f32[1,512], index: 2, kind: input, shape index: {}]
  %s3 = inlined_call_operand.hbm [shape: bf16[512,128], index: 3, kind: input, shape index: {}]
  %s4 = inlined_call_operand.hbm [shape: f32[1,128], index: 4, kind: input, shape index: {}]
  %s5 = inlined_call_operand.hbm [shape: bf16[128,128], index: 5, kind: input, shape index: {}]
  %s6 = inlined_call_operand.hbm [shape: f32[1,128], index: 6, kind: input, shape index: {}]
  %s7 = inlined_call_operand.hbm [shape: f32[2,128], index: 7, kind: output, shape index: {}]
  %s8 = sld [smem:[#allocation0]]
  $region66: #{tpu_custom_call.1} parent=0
    _
  %s10 = ssub.s32 1, %s8
  %s11 = scalar_select 0, %s10, %s8
  $region1: #{tpu_custom_call.1} parent=0
    #allocation2 [shape = 'u8[122880]{0}', space=vmem, size = 0x1e000, scoped, tag = 'input window, operand 0, single buffered']
    #allocation3 [shape = 's32[1]{0}', space=sflag, size = 0x4, scoped, tag = 'scoped memory for tpu_custom_call.1']
    #allocation4 [shape = 's32[1]{0}', space=sflag, size = 0x4, scoped, tag = 'scoped memory for tpu_custom_call.1']
    #allocation5 [shape = 'u8[1843200]{0}', space=vmem, size = 0x1c2000, scoped, tag = 'input window, operand 1, single buffered']
    #allocation6 [shape = 's32[1]{0}', space=sflag, size = 0x4, scoped, tag = 'scoped memory for tpu_custom_call.1']
    #allocation7 [shape = 'u8[2048]{0}', space=vmem, size = 0x800, scoped, tag = 'input window, operand 2, single buffered']
    #allocation8 [shape = 'u8[131072]{0}', space=vmem, size = 0x20000, scoped, tag = 'input window, operand 3, single buffered']
    #allocation9 [shape = 's32[1]{0}', space=sflag, size = 0x4, scoped, tag = 'scoped memory for tpu_custom_call.1']
    #allocation10 [shape = 'u8[512]{0}', space=vmem, size = 0x400, scoped, tag = 'input window, operand 4, single buffered']
    #allocation11 [shape = 'u8[32768]{0}', space=vmem, size = 0x8000, scoped, tag = 'input window, operand 5, single buffered']
    #allocation12 [shape = 's32[1]{0}', space=sflag, size = 0x4, scoped, tag = 'scoped memory for tpu_custom_call.1']
    #allocation13 [shape = 'u8[512]{0}', space=vmem, size = 0x400, scoped, tag = 'input window, operand 6, single buffered']
    #allocation14 [shape = 'u8[8192]{0}', space=vmem, size = 0x2000, scoped, tag = 'output window, operand 0, single buffered']
    %12 = vsyncpa [#allocation3], 0
    %13 = vsyncpa [#allocation6], 0
    %14 = vsyncpa [#allocation9], 0
    %15 = vsyncpa [#allocation12], 0
    %16 = vsyncpa [#allocation4], 0
    // Predicated region
    $region2: #{tpu_custom_call.1} parent=1 // pred_check
      _
    $region3: #{tpu_custom_call.1} parent=1 // pred_check_branch
      %18 = sbr.rel (0) target = $region5
    $region4: #{tpu_custom_call.1} parent=1 // pred_region
      %s20 = ssub.s32 3840, 480
      %21 = vsyncadd [#allocation3], %s20
      %s22 = sshll.u32 [#allocation2], 4
      %s23 = int_to_ptr.vmem [resolvable:$true] %s22
      %28 = dma.hbm_to_vmem [thread:$0]  %s0, 480, %s23, [#allocation3], 480, 480, 30
    $region5: #{tpu_custom_call.1} parent=1 // pred_fallthru
      _
    // Predicated region
    $region6: #{tpu_custom_call.1} parent=1 // pred_check
      _
    $region7: #{tpu_custom_call.1} parent=1 // pred_check_branch
      %30 = sbr.rel (0) target = $region9
    $region8: #{tpu_custom_call.1} parent=1 // pred_region
      %s32 = ssub.s32 57600, 57600
      %33 = vsyncadd [#allocation6], %s32
      %s34 = sshll.u32 [#allocation5], 4
      %s35 = int_to_ptr.vmem [resolvable:$true] %s34
      %40 = dma.hbm_to_vmem [thread:$0]  %s1, 57600, %s35, [#allocation6], 256, 256, 16
    $region9: #{tpu_custom_call.1} parent=1 // pred_fallthru
      _
    // Predicated region
    $region10: #{tpu_custom_call.1} parent=1 // pred_check
      _
    $region11: #{tpu_custom_call.1} parent=1 // pred_check_branch
      %42 = sbr.rel (0) target = $region13
    $region12: #{tpu_custom_call.1} parent=1 // pred_region
      %s44 = ssub.s32 64, 64
      %45 = vsyncadd [#allocation6], %s44
      %s47 = sshll.u32 [#allocation7], 4
      %s48 = int_to_ptr.vmem [resolvable:$true] %s47
      %50 = dma.hbm_to_vmem [thread:$0]  %s2, 64, %s48, [#allocation6]
    $region13: #{tpu_custom_call.1} parent=1 // pred_fallthru
      _
    // Predicated region
    $region14: #{tpu_custom_call.1} parent=1 // pred_check
      _
    $region15: #{tpu_custom_call.1} parent=1 // pred_check_branch
      %52 = sbr.rel (0) target = $region17
    $region16: #{tpu_custom_call.1} parent=1 // pred_region
      %s54 = ssub.s32 4096, 4096
      %55 = vsyncadd [#allocation9], %s54
      %s56 = sshll.u32 [#allocation8], 4
      %s57 = int_to_ptr.vmem [resolvable:$true] %s56
      %62 = dma.hbm_to_vmem [thread:$0]  %s3, 4096, %s57, [#allocation9], 64, 64, 4
    $region17: #{tpu_custom_call.1} parent=1 // pred_fallthru
      _
    // Predicated region
    $region18: #{tpu_custom_call.1} parent=1 // pred_check
      _
    $region19: #{tpu_custom_call.1} parent=1 // pred_check_branch
      %64 = sbr.rel (0) target = $region21
    $region20: #{tpu_custom_call.1} parent=1 // pred_region
      %s66 = ssub.s32 16, 16
      %67 = vsyncadd [#allocation9], %s66
      %s69 = sshll.u32 [#allocation10], 4
      %s70 = int_to_ptr.vmem [resolvable:$true] %s69
      %72 = dma.hbm_to_vmem [thread:$0]  %s4, 16, %s70, [#allocation9]
    $region21: #{tpu_custom_call.1} parent=1 // pred_fallthru
      _
    // Predicated region
    $region22: #{tpu_custom_call.1} parent=1 // pred_check
      _
    $region23: #{tpu_custom_call.1} parent=1 // pred_check_branch
      %74 = sbr.rel (0) target = $region25
    $region24: #{tpu_custom_call.1} parent=1 // pred_region
      %s76 = ssub.s32 1024, 1024
      %77 = vsyncadd [#allocation12], %s76
      %s78 = sshll.u32 [#allocation11], 4
      %s79 = int_to_ptr.vmem [resolvable:$true] %s78
      %84 = dma.hbm_to_vmem [thread:$0]  %s5, 1024, %s79, [#allocation12], 64, 64, 4
    $region25: #{tpu_custom_call.1} parent=1 // pred_fallthru
      _
    // Predicated region
    $region26: #{tpu_custom_call.1} parent=1 // pred_check
      _
    $region27: #{tpu_custom_call.1} parent=1 // pred_check_branch
      %86 = sbr.rel (0) target = $region29
    $region28: #{tpu_custom_call.1} parent=1 // pred_region
      %s88 = ssub.s32 16, 16
      %89 = vsyncadd [#allocation12], %s88
      %s91 = sshll.u32 [#allocation13], 4
      %s92 = int_to_ptr.vmem [resolvable:$true] %s91
      %94 = dma.hbm_to_vmem [thread:$0]  %s6, 16, %s92, [#allocation12]
    $region29: #{tpu_custom_call.1} parent=1 // pred_fallthru
      _
    // Predicated region
    $region30: #{tpu_custom_call.1} parent=1 // pred_check
      _
    $region31: #{tpu_custom_call.1} parent=1 // pred_check_branch
      %96 = sbr.rel (0) target = $region33
    $region32: #{tpu_custom_call.1} parent=1 // pred_region
      %97 = dma.done [#allocation3], 3840
    $region33: #{tpu_custom_call.1} parent=1 // pred_fallthru
      _
    // Predicated region
    $region34: #{tpu_custom_call.1} parent=1 // pred_check
      _
    $region35: #{tpu_custom_call.1} parent=1 // pred_check_branch
      %99 = sbr.rel (0) target = $region37
    $region36: #{tpu_custom_call.1} parent=1 // pred_region
      %100 = dma.done [#allocation6], 57600
    $region37: #{tpu_custom_call.1} parent=1 // pred_fallthru
      _
    // Predicated region
    $region38: #{tpu_custom_call.1} parent=1 // pred_check
      _
    $region39: #{tpu_custom_call.1} parent=1 // pred_check_branch
      %102 = sbr.rel (0) target = $region41
    $region40: #{tpu_custom_call.1} parent=1 // pred_region
      %103 = dma.done [#allocation6], 64
    $region41: #{tpu_custom_call.1} parent=1 // pred_fallthru
      _
    // Predicated region
    $region42: #{tpu_custom_call.1} parent=1 // pred_check
      _
    $region43: #{tpu_custom_call.1} parent=1 // pred_check_branch
      %105 = sbr.rel (0) target = $region45
    $region44: #{tpu_custom_call.1} parent=1 // pred_region
      %106 = dma.done [#allocation9], 4096
    $region45: #{tpu_custom_call.1} parent=1 // pred_fallthru
      _
    // Predicated region
    $region46: #{tpu_custom_call.1} parent=1 // pred_check
      _
    $region47: #{tpu_custom_call.1} parent=1 // pred_check_branch
      %108 = sbr.rel (0) target = $region49
    $region48: #{tpu_custom_call.1} parent=1 // pred_region
      %109 = dma.done [#allocation9], 16
    $region49: #{tpu_custom_call.1} parent=1 // pred_fallthru
      _
    // Predicated region
    $region50: #{tpu_custom_call.1} parent=1 // pred_check
      _
    $region51: #{tpu_custom_call.1} parent=1 // pred_check_branch
      %111 = sbr.rel (0) target = $region53
    $region52: #{tpu_custom_call.1} parent=1 // pred_region
      %112 = dma.done [#allocation12], 1024
    $region53: #{tpu_custom_call.1} parent=1 // pred_fallthru
      _
    // Predicated region
    $region54: #{tpu_custom_call.1} parent=1 // pred_check
      _
    $region55: #{tpu_custom_call.1} parent=1 // pred_check_branch
      %114 = sbr.rel (0) target = $region57
    $region56: #{tpu_custom_call.1} parent=1 // pred_region
      %115 = dma.done [#allocation12], 16
    $region57: #{tpu_custom_call.1} parent=1 // pred_fallthru
      _
    %v117 = vld [vmem:[#allocation2] sm:$0xff]
    %v118 = vld [vmem:[#allocation2 + $0x8] sm:$0xff]
    %v119 = vld [vmem:[#allocation2 + $0x10] sm:$0xff]
    %v120 = vld [vmem:[#allocation2 + $0x18] sm:$0x3f]
    %v121 = vld [vmem:[#allocation2 + $0x1e] sm:$0xff]
    %v122 = vld [vmem:[#allocation2 + $0x26] sm:$0xff]
    %v123 = vld [vmem:[#allocation2 + $0x2e] sm:$0xff]
    %v124 = vld [vmem:[#allocation2 + $0x36] sm:$0x3f]
    %v125 = vld [vmem:[#allocation2 + $0x3c] sm:$0xff]
    %v126 = vld [vmem:[#allocation2 + $0x44] sm:$0xff]
    %v127 = vld [vmem:[#allocation2 + $0x4c] sm:$0xff]
    %v128 = vld [vmem:[#allocation2 + $0x54] sm:$0x3f]
    %v129 = vld [vmem:[#allocation2 + $0x5a] sm:$0xff]
    %v130 = vld [vmem:[#allocation2 + $0x62] sm:$0xff]
    %v131 = vld [vmem:[#allocation2 + $0x6a] sm:$0xff]
    %v132 = vld [vmem:[#allocation2 + $0x72] sm:$0x3f]
    %v133 = vld [vmem:[#allocation2 + $0x78] sm:$0xff]
    %v134 = vld [vmem:[#allocation2 + $0x80] sm:$0xff]
    %v135 = vld [vmem:[#allocation2 + $0x88] sm:$0xff]
    %v136 = vld [vmem:[#allocation2 + $0x90] sm:$0x3f]
    %v137 = vld [vmem:[#allocation2 + $0x96] sm:$0xff]
    %v138 = vld [vmem:[#allocation2 + $0x9e] sm:$0xff]
    %v139 = vld [vmem:[#allocation2 + $0xa6] sm:$0xff]
    %v140 = vld [vmem:[#allocation2 + $0xae] sm:$0x3f]
    %v141 = vld [vmem:[#allocation2 + $0xb4] sm:$0xff]
    %v142 = vld [vmem:[#allocation2 + $0xbc] sm:$0xff]
    %v143 = vld [vmem:[#allocation2 + $0xc4] sm:$0xff]
    %v144 = vld [vmem:[#allocation2 + $0xcc] sm:$0x3f]
    %v145 = vld [vmem:[#allocation2 + $0xd2] sm:$0xff]
    %v146 = vld [vmem:[#allocation2 + $0xda] sm:$0xff]
    %v147 = vld [vmem:[#allocation2 + $0xe2] sm:$0xff]
    %v148 = vld [vmem:[#allocation2 + $0xea] sm:$0x3f]
    %v181 = vcombine.low %v117, %v121
    %v182 = vcombine.high %v117, %v121
    %v183 = vcombine.low %v125, %v129
    %v184 = vcombine.high %v125, %v129
    %v186 = vunpack.c.l.s4 1983009808
    %v187 = vunpack.c.0.s8 %v186
    %v188 = vlaneseq
    %v189 = vshrl.u32 %v188, 7
    %v190 = vsub.s32 %v187, %v189
    %v191 = vrot.slane %v181, %v190
    %v193 = vunpack.c.l.s4 1983009808
    %v194 = vunpack.c.0.s8 %v193
    %v195 = vlaneseq
    %v196 = vshrl.u32 %v195, 7
    %v197 = vsub.s32 %v194, %v196
    %v198 = vrot.slane %v182, %v197
    %v200 = vunpack.c.l.s4 1983009808
    %v201 = vunpack.c.0.s8 %v200
    %v202 = vlaneseq
    %v203 = vshrl.u32 %v202, 7
    %v204 = vsub.s32 %v201, %v203
    %v205 = vrot.slane %v183, %v204
    %v207 = vunpack.c.l.s4 1983009808
    %v208 = vunpack.c.0.s8 %v207
    %v209 = vlaneseq
    %v210 = vshrl.u32 %v209, 7
    %v211 = vsub.s32 %v208, %v210
    %v212 = vrot.slane %v184, %v211
    %v213 = vcombine.low %v191, %v205
    %v214 = vcombine.high %v191, %v205
    %v215 = vcombine.low %v198, %v212
    %v216 = vcombine.high %v198, %v212
    %v217 = vcombine.low %v118, %v122
    %v218 = vcombine.high %v118, %v122
    %v219 = vcombine.low %v126, %v130
    %v220 = vcombine.high %v126, %v130
    %v222 = vunpack.c.l.s4 1983009808
    %v223 = vunpack.c.0.s8 %v222
    %v224 = vlaneseq
    %v225 = vshrl.u32 %v224, 7
    %v226 = vsub.s32 %v223, %v225
    %v227 = vrot.slane %v217, %v226
    %v229 = vunpack.c.l.s4 1983009808
    %v230 = vunpack.c.0.s8 %v229
    %v231 = vlaneseq
    %v232 = vshrl.u32 %v231, 7
    %v233 = vsub.s32 %v230, %v232
    %v234 = vrot.slane %v218, %v233
    %v236 = vunpack.c.l.s4 1983009808
    %v237 = vunpack.c.0.s8 %v236
    %v238 = vlaneseq
    %v239 = vshrl.u32 %v238, 7
    %v240 = vsub.s32 %v237, %v239
    %v241 = vrot.slane %v219, %v240
    %v243 = vunpack.c.l.s4 1983009808
    %v244 = vunpack.c.0.s8 %v243
    %v245 = vlaneseq
    %v246 = vshrl.u32 %v245, 7
    %v247 = vsub.s32 %v244, %v246
    %v248 = vrot.slane %v220, %v247
    %v249 = vcombine.low %v227, %v241
    %v250 = vcombine.high %v227, %v241
    %v251 = vcombine.low %v234, %v248
    %v252 = vcombine.high %v234, %v248
    %v253 = vcombine.low %v119, %v123
    %v254 = vcombine.high %v119, %v123
    %v255 = vcombine.low %v127, %v131
    %v256 = vcombine.high %v127, %v131
    %v258 = vunpack.c.l.s4 1983009808
    %v259 = vunpack.c.0.s8 %v258
    %v260 = vlaneseq
    %v261 = vshrl.u32 %v260, 7
    %v262 = vsub.s32 %v259, %v261
    %v263 = vrot.slane %v253, %v262
    %v265 = vunpack.c.l.s4 1983009808
    %v266 = vunpack.c.0.s8 %v265
    %v267 = vlaneseq
    %v268 = vshrl.u32 %v267, 7
    %v269 = vsub.s32 %v266, %v268
    %v270 = vrot.slane %v254, %v269
    %v272 = vunpack.c.l.s4 1983009808
    %v273 = vunpack.c.0.s8 %v272
    %v274 = vlaneseq
    %v275 = vshrl.u32 %v274, 7
    %v276 = vsub.s32 %v273, %v275
    %v277 = vrot.slane %v255, %v276
    %v279 = vunpack.c.l.s4 1983009808
    %v280 = vunpack.c.0.s8 %v279
    %v281 = vlaneseq
    %v282 = vshrl.u32 %v281, 7
    %v283 = vsub.s32 %v280, %v282
    %v284 = vrot.slane %v256, %v283
    %v285 = vcombine.low %v263, %v277
    %v286 = vcombine.high %v263, %v277
    %v287 = vcombine.low %v270, %v284
    %v288 = vcombine.high %v270, %v284
    %v289 = vcombine.low %v120, %v124
    %v290 = vcombine.high %v120, %v124
    %v291 = vcombine.low %v128, %v132
    %v292 = vcombine.high %v128, %v132
    %v294 = vunpack.c.l.s4 1983009808
    %v295 = vunpack.c.0.s8 %v294
    %v296 = vlaneseq
    %v297 = vshrl.u32 %v296, 7
    %v298 = vsub.s32 %v295, %v297
    %v299 = vrot.slane %v289, %v298
    %v301 = vunpack.c.l.s4 1983009808
    %v302 = vunpack.c.0.s8 %v301
    %v303 = vlaneseq
    %v304 = vshrl.u32 %v303, 7
    %v305 = vsub.s32 %v302, %v304
    %v306 = vrot.slane %v290, %v305
    %v308 = vunpack.c.l.s4 1983009808
    %v309 = vunpack.c.0.s8 %v308
    %v310 = vlaneseq
    %v311 = vshrl.u32 %v310, 7
    %v312 = vsub.s32 %v309, %v311
    %v313 = vrot.slane %v291, %v312
    %v315 = vunpack.c.l.s4 1983009808
    %v316 = vunpack.c.0.s8 %v315
    %v317 = vlaneseq
    %v318 = vshrl.u32 %v317, 7
    %v319 = vsub.s32 %v316, %v318
    %v320 = vrot.slane %v292, %v319
    %v321 = vcombine.low %v299, %v313
    %v322 = vcombine.high %v299, %v313
    %v323 = vcombine.low %v306, %v320
    %v324 = vcombine.low %v133, %v137
    %v325 = vcombine.high %v133, %v137
    %v326 = vcombine.low %v141, %v145
    %v327 = vcombine.high %v141, %v145
    %v329 = vunpack.c.l.s4 1983009808
    %v330 = vunpack.c.0.s8 %v329
    %v331 = vlaneseq
    %v332 = vshrl.u32 %v331, 7
    %v333 = vsub.s32 %v330, %v332
    %v334 = vrot.slane %v324, %v333
    %v336 = vunpack.c.l.s4 1983009808
    %v337 = vunpack.c.0.s8 %v336
    %v338 = vlaneseq
    %v339 = vshrl.u32 %v338, 7
    %v340 = vsub.s32 %v337, %v339
    %v341 = vrot.slane %v325, %v340
    %v343 = vunpack.c.l.s4 1983009808
    %v344 = vunpack.c.0.s8 %v343
    %v345 = vlaneseq
    %v346 = vshrl.u32 %v345, 7
    %v347 = vsub.s32 %v344, %v346
    %v348 = vrot.slane %v326, %v347
    %v350 = vunpack.c.l.s4 1983009808
    %v351 = vunpack.c.0.s8 %v350
    %v352 = vlaneseq
    %v353 = vshrl.u32 %v352, 7
    %v354 = vsub.s32 %v351, %v353
    %v355 = vrot.slane %v327, %v354
    %v356 = vcombine.low %v334, %v348
    %v357 = vcombine.high %v334, %v348
    %v358 = vcombine.low %v341, %v355
    %v359 = vcombine.high %v341, %v355
    %v360 = vcombine.low %v134, %v138
    %v361 = vcombine.high %v134, %v138
    %v362 = vcombine.low %v142, %v146
    %v363 = vcombine.high %v142, %v146
    %v365 = vunpack.c.l.s4 1983009808
    %v366 = vunpack.c.0.s8 %v365
    %v367 = vlaneseq
    %v368 = vshrl.u32 %v367, 7
    %v369 = vsub.s32 %v366, %v368
    %v370 = vrot.slane %v360, %v369
    %v372 = vunpack.c.l.s4 1983009808
    %v373 = vunpack.c.0.s8 %v372
    %v374 = vlaneseq
    %v375 = vshrl.u32 %v374, 7
    %v376 = vsub.s32 %v373, %v375
    %v377 = vrot.slane %v361, %v376
    %v379 = vunpack.c.l.s4 1983009808
    %v380 = vunpack.c.0.s8 %v379
    %v381 = vlaneseq
    %v382 = vshrl.u32 %v381, 7
    %v383 = vsub.s32 %v380, %v382
    %v384 = vrot.slane %v362, %v383
    %v386 = vunpack.c.l.s4 1983009808
    %v387 = vunpack.c.0.s8 %v386
    %v388 = vlaneseq
    %v389 = vshrl.u32 %v388, 7
    %v390 = vsub.s32 %v387, %v389
    %v391 = vrot.slane %v363, %v390
    %v392 = vcombine.low %v370, %v384
    %v393 = vcombine.high %v370, %v384
    %v394 = vcombine.low %v377, %v391
    %v395 = vcombine.high %v377, %v391
    %v396 = vcombine.low %v135, %v139
    %v397 = vcombine.high %v135, %v139
    %v398 = vcombine.low %v143, %v147
    %v399 = vcombine.high %v143, %v147
    %v401 = vunpack.c.l.s4 1983009808
    %v402 = vunpack.c.0.s8 %v401
    %v403 = vlaneseq
    %v404 = vshrl.u32 %v403, 7
    %v405 = vsub.s32 %v402, %v404
    %v406 = vrot.slane %v396, %v405
    %v408 = vunpack.c.l.s4 1983009808
    %v409 = vunpack.c.0.s8 %v408
    %v410 = vlaneseq
    %v411 = vshrl.u32 %v410, 7
    %v412 = vsub.s32 %v409, %v411
    %v413 = vrot.slane %v397, %v412
    %v415 = vunpack.c.l.s4 1983009808
    %v416 = vunpack.c.0.s8 %v415
    %v417 = vlaneseq
    %v418 = vshrl.u32 %v417, 7
    %v419 = vsub.s32 %v416, %v418
    %v420 = vrot.slane %v398, %v419
    %v422 = vunpack.c.l.s4 1983009808
    %v423 = vunpack.c.0.s8 %v422
    %v424 = vlaneseq
    %v425 = vshrl.u32 %v424, 7
    %v426 = vsub.s32 %v423, %v425
    %v427 = vrot.slane %v399, %v426
    %v428 = vcombine.low %v406, %v420
    %v429 = vcombine.high %v406, %v420
    %v430 = vcombine.low %v413, %v427
    %v431 = vcombine.high %v413, %v427
    %v432 = vcombine.low %v136, %v140
    %v433 = vcombine.high %v136, %v140
    %v434 = vcombine.low %v144, %v148
    %v435 = vcombine.high %v144, %v148
    %v437 = vunpack.c.l.s4 1983009808
    %v438 = vunpack.c.0.s8 %v437
    %v439 = vlaneseq
    %v440 = vshrl.u32 %v439, 7
    %v441 = vsub.s32 %v438, %v440
    %v442 = vrot.slane %v432, %v441
    %v444 = vunpack.c.l.s4 1983009808
    %v445 = vunpack.c.0.s8 %v444
    %v446 = vlaneseq
    %v447 = vshrl.u32 %v446, 7
    %v448 = vsub.s32 %v445, %v447
    %v449 = vrot.slane %v433, %v448
    %v451 = vunpack.c.l.s4 1983009808
    %v452 = vunpack.c.0.s8 %v451
    %v453 = vlaneseq
    %v454 = vshrl.u32 %v453, 7
    %v455 = vsub.s32 %v452, %v454
    %v456 = vrot.slane %v434, %v455
    %v458 = vunpack.c.l.s4 1983009808
    %v459 = vunpack.c.0.s8 %v458
    %v460 = vlaneseq
    %v461 = vshrl.u32 %v460, 7
    %v462 = vsub.s32 %v459, %v461
    %v463 = vrot.slane %v435, %v462
    %v464 = vcombine.low %v442, %v456
    %v465 = vcombine.high %v442, %v456
    %v466 = vcombine.low %v449, %v463
    %v497 = vpack.c.bf16 %v356, %v213
    %v498 = vpack.c.bf16 %v357, %v214
    %v499 = vpack.c.bf16 %v358, %v215
    %v500 = vpack.c.bf16 %v359, %v216
    %v501 = vpack.c.bf16 %v392, %v249
    %v502 = vpack.c.bf16 %v393, %v250
    %v503 = vpack.c.bf16 %v394, %v251
    %v504 = vpack.c.bf16 %v395, %v252
    %v505 = vpack.c.bf16 %v428, %v285
    %v506 = vpack.c.bf16 %v429, %v286
    %v507 = vpack.c.bf16 %v430, %v287
    %v508 = vpack.c.bf16 %v431, %v288
    %v509 = vpack.c.bf16 %v464, %v321
    %v510 = vpack.c.bf16 %v465, %v322
    %v511 = vpack.c.bf16 %v466, %v323
    %v512 = vld [vmem:[#allocation5] sm:$0xff]
    %v513 = vld [vmem:[#allocation5 + $0x8] sm:$0xff]
    %v514 = vld [vmem:[#allocation5 + $0x10] sm:$0xff]
    %v515 = vld [vmem:[#allocation5 + $0x18] sm:$0xff]
    %v516 = vld [vmem:[#allocation5 + $0x20] sm:$0xff]
    %v517 = vld [vmem:[#allocation5 + $0x28] sm:$0xff]
    %v518 = vld [vmem:[#allocation5 + $0x30] sm:$0xff]
    %v519 = vld [vmem:[#allocation5 + $0x38] sm:$0xff]
    %v520 = vld [vmem:[#allocation5 + $0x40] sm:$0xff]
    %v521 = vld [vmem:[#allocation5 + $0x48] sm:$0xff]
    %v522 = vld [vmem:[#allocation5 + $0x50] sm:$0xff]
    %v523 = vld [vmem:[#allocation5 + $0x58] sm:$0xff]
    %v524 = vld [vmem:[#allocation5 + $0x60] sm:$0xff]
    %v525 = vld [vmem:[#allocation5 + $0x68] sm:$0xff]
    %v526 = vld [vmem:[#allocation5 + $0x70] sm:$0xff]
    %v527 = vld [vmem:[#allocation5 + $0x78] sm:$0xff]
    %v528 = vld [vmem:[#allocation5 + $0x80] sm:$0xff]
    %v529 = vld [vmem:[#allocation5 + $0x88] sm:$0xff]
    %v530 = vld [vmem:[#allocation5 + $0x90] sm:$0xff]
    %v531 = vld [vmem:[#allocation5 + $0x98] sm:$0xff]
    %v532 = vld [vmem:[#allocation5 + $0xa0] sm:$0xff]
    %v533 = vld [vmem:[#allocation5 + $0xa8] sm:$0xff]
    %v534 = vld [vmem:[#allocation5 + $0xb0] sm:$0xff]
    %v535 = vld [vmem:[#allocation5 + $0xb8] sm:$0xff]
    %v536 = vld [vmem:[#allocation5 + $0xc0] sm:$0xff]
    %v537 = vld [vmem:[#allocation5 + $0xc8] sm:$0xff]
    %v538 = vld [vmem:[#allocation5 + $0xd0] sm:$0xff]
    %v539 = vld [vmem:[#allocation5 + $0xd8] sm:$0xff]
    %v540 = vld [vmem:[#allocation5 + $0xe0] sm:$0xff]
    %v541 = vld [vmem:[#allocation5 + $0xe8] sm:$0xff]
    %v542 = vld [vmem:[#allocation5 + $0xf0] sm:$0xff]
    %v543 = vld [vmem:[#allocation5 + $0xf8] sm:$0xff]
    %v544 = vld [vmem:[#allocation5 + $0x100] sm:$0xff]
    %v545 = vld [vmem:[#allocation5 + $0x108] sm:$0xff]
    %v546 = vld [vmem:[#allocation5 + $0x110] sm:$0xff]
    %v547 = vld [vmem:[#allocation5 + $0x118] sm:$0xff]
    %v548 = vld [vmem:[#allocation5 + $0x120] sm:$0xff]
    %v549 = vld [vmem:[#allocation5 + $0x128] sm:$0xff]
    %v550 = vld [vmem:[#allocation5 + $0x130] sm:$0xff]
    %v551 = vld [vmem:[#allocation5 + $0x138] sm:$0xff]
    %v552 = vld [vmem:[#allocation5 + $0x140] sm:$0xff]
    %v553 = vld [vmem:[#allocation5 + $0x148] sm:$0xff]
    %v554 = vld [vmem:[#allocation5 + $0x150] sm:$0xff]
    %v555 = vld [vmem:[#allocation5 + $0x158] sm:$0xff]
    %v556 = vld [vmem:[#allocation5 + $0x160] sm:$0xff]
    %v557 = vld [vmem:[#allocation5 + $0x168] sm:$0xff]
    %v558 = vld [vmem:[#allocation5 + $0x170] sm:$0xff]
    %v559 = vld [vmem:[#allocation5 + $0x178] sm:$0xff]
    %v560 = vld [vmem:[#allocation5 + $0x180] sm:$0xff]
    %v561 = vld [vmem:[#allocation5 + $0x188] sm:$0xff]
    %v562 = vld [vmem:[#allocation5 + $0x190] sm:$0xff]
    %v563 = vld [vmem:[#allocation5 + $0x198] sm:$0xff]
    %v564 = vld [vmem:[#allocation5 + $0x1a0] sm:$0xff]
    %v565 = vld [vmem:[#allocation5 + $0x1a8] sm:$0xff]
    %v566 = vld [vmem:[#allocation5 + $0x1b0] sm:$0xff]
    %v567 = vld [vmem:[#allocation5 + $0x1b8] sm:$0xff]
    %v568 = vld [vmem:[#allocation5 + $0x1c0] sm:$0xff]
    %v569 = vld [vmem:[#allocation5 + $0x1c8] sm:$0xff]
    %v570 = vld [vmem:[#allocation5 + $0x1d0] sm:$0xff]
    %v571 = vld [vmem:[#allocation5 + $0x1d8] sm:$0xff]
    %v572 = vld [vmem:[#allocation5 + $0x1e0] sm:$0xff]
    %v573 = vld [vmem:[#allocation5 + $0x1e8] sm:$0xff]
    %v574 = vld [vmem:[#allocation5 + $0x1f0] sm:$0xff]
    %v575 = vld [vmem:[#allocation5 + $0x1f8] sm:$0xff]
    %v576 = vld [vmem:[#allocation5 + $0x200] sm:$0xff]
    %v577 = vld [vmem:[#allocation5 + $0x208] sm:$0xff]
    %v578 = vld [vmem:[#allocation5 + $0x210] sm:$0xff]
    %v579 = vld [vmem:[#allocation5 + $0x218] sm:$0xff]
    %v580 = vld [vmem:[#allocation5 + $0x220] sm:$0xff]
    %v581 = vld [vmem:[#allocation5 + $0x228] sm:$0xff]
    %v582 = vld [vmem:[#allocation5 + $0x230] sm:$0xff]
    %v583 = vld [vmem:[#allocation5 + $0x238] sm:$0xff]
    %v584 = vld [vmem:[#allocation5 + $0x240] sm:$0xff]
    %v585 = vld [vmem:[#allocation5 + $0x248] sm:$0xff]
    %v586 = vld [vmem:[#allocation5 + $0x250] sm:$0xff]
    %v587 = vld [vmem:[#allocation5 + $0x258] sm:$0xff]
    %v588 = vld [vmem:[#allocation5 + $0x260] sm:$0xff]
    %v589 = vld [vmem:[#allocation5 + $0x268] sm:$0xff]
    %v590 = vld [vmem:[#allocation5 + $0x270] sm:$0xff]
    %v591 = vld [vmem:[#allocation5 + $0x278] sm:$0xff]
    %v592 = vld [vmem:[#allocation5 + $0x280] sm:$0xff]
    %v593 = vld [vmem:[#allocation5 + $0x288] sm:$0xff]
    %v594 = vld [vmem:[#allocation5 + $0x290] sm:$0xff]
    %v595 = vld [vmem:[#allocation5 + $0x298] sm:$0xff]
    %v596 = vld [vmem:[#allocation5 + $0x2a0] sm:$0xff]
    %v597 = vld [vmem:[#allocation5 + $0x2a8] sm:$0xff]
    %v598 = vld [vmem:[#allocation5 + $0x2b0] sm:$0xff]
    %v599 = vld [vmem:[#allocation5 + $0x2b8] sm:$0xff]
    %v600 = vld [vmem:[#allocation5 + $0x2c0] sm:$0xff]
    %v601 = vld [vmem:[#allocation5 + $0x2c8] sm:$0xff]
    %v602 = vld [vmem:[#allocation5 + $0x2d0] sm:$0xff]
    %v603 = vld [vmem:[#allocation5 + $0x2d8] sm:$0xff]
    %v604 = vld [vmem:[#allocation5 + $0x2e0] sm:$0xff]
    %v605 = vld [vmem:[#allocation5 + $0x2e8] sm:$0xff]
    %v606 = vld [vmem:[#allocation5 + $0x2f0] sm:$0xff]
    %v607 = vld [vmem:[#allocation5 + $0x2f8] sm:$0xff]
    %v608 = vld [vmem:[#allocation5 + $0x300] sm:$0xff]
    %v609 = vld [vmem:[#allocation5 + $0x308] sm:$0xff]
    %v610 = vld [vmem:[#allocation5 + $0x310] sm:$0xff]
    %v611 = vld [vmem:[#allocation5 + $0x318] sm:$0xff]
    %v612 = vld [vmem:[#allocation5 + $0x320] sm:$0xff]
    %v613 = vld [vmem:[#allocation5 + $0x328] sm:$0xff]
    %v614 = vld [vmem:[#allocation5 + $0x330] sm:$0xff]
    %v615 = vld [vmem:[#allocation5 + $0x338] sm:$0xff]
    %v616 = vld [vmem:[#allocation5 + $0x340] sm:$0xff]
    %v617 = vld [vmem:[#allocation5 + $0x348] sm:$0xff]
    %v618 = vld [vmem:[#allocation5 + $0x350] sm:$0xff]
    %v619 = vld [vmem:[#allocation5 + $0x358] sm:$0xff]
    %v620 = vld [vmem:[#allocation5 + $0x360] sm:$0xff]
    %v621 = vld [vmem:[#allocation5 + $0x368] sm:$0xff]
    %v622 = vld [vmem:[#allocation5 + $0x370] sm:$0xff]
    %v623 = vld [vmem:[#allocation5 + $0x378] sm:$0xff]
    %v624 = vld [vmem:[#allocation5 + $0x380] sm:$0xff]
    %v625 = vld [vmem:[#allocation5 + $0x388] sm:$0xff]
    %v626 = vld [vmem:[#allocation5 + $0x390] sm:$0xff]
    %v627 = vld [vmem:[#allocation5 + $0x398] sm:$0xff]
    %v628 = vld [vmem:[#allocation5 + $0x3a0] sm:$0xff]
    %v629 = vld [vmem:[#allocation5 + $0x3a8] sm:$0xff]
    %v630 = vld [vmem:[#allocation5 + $0x3b0] sm:$0xff]
    %v631 = vld [vmem:[#allocation5 + $0x3b8] sm:$0xff]
    %v632 = vld [vmem:[#allocation5 + $0x3c0] sm:$0xff]
    %v633 = vld [vmem:[#allocation5 + $0x3c8] sm:$0xff]
    %v634 = vld [vmem:[#allocation5 + $0x3d0] sm:$0xff]
    %v635 = vld [vmem:[#allocation5 + $0x3d8] sm:$0xff]
    %v636 = vld [vmem:[#allocation5 + $0x3e0] sm:$0xff]
    %v637 = vld [vmem:[#allocation5 + $0x3e8] sm:$0xff]
    %v638 = vld [vmem:[#allocation5 + $0x3f0] sm:$0xff]
    %v639 = vld [vmem:[#allocation5 + $0x3f8] sm:$0xff]
    %v640 = vld [vmem:[#allocation5 + $0x400] sm:$0xff]
    %v641 = vld [vmem:[#allocation5 + $0x408] sm:$0xff]
    %v642 = vld [vmem:[#allocation5 + $0x410] sm:$0xff]
    %v643 = vld [vmem:[#allocation5 + $0x418] sm:$0xff]
    %v644 = vld [vmem:[#allocation5 + $0x420] sm:$0xff]
    %v645 = vld [vmem:[#allocation5 + $0x428] sm:$0xff]
    %v646 = vld [vmem:[#allocation5 + $0x430] sm:$0xff]
    %v647 = vld [vmem:[#allocation5 + $0x438] sm:$0xff]
    %v648 = vld [vmem:[#allocation5 + $0x440] sm:$0xff]
    %v649 = vld [vmem:[#allocation5 + $0x448] sm:$0xff]
    %v650 = vld [vmem:[#allocation5 + $0x450] sm:$0xff]
    %v651 = vld [vmem:[#allocation5 + $0x458] sm:$0xff]
    %v652 = vld [vmem:[#allocation5 + $0x460] sm:$0xff]
    %v653 = vld [vmem:[#allocation5 + $0x468] sm:$0xff]
    %v654 = vld [vmem:[#allocation5 + $0x470] sm:$0xff]
    %v655 = vld [vmem:[#allocation5 + $0x478] sm:$0xff]
    %v656 = vld [vmem:[#allocation5 + $0x480] sm:$0xff]
    %v657 = vld [vmem:[#allocation5 + $0x488] sm:$0xff]
    %v658 = vld [vmem:[#allocation5 + $0x490] sm:$0xff]
    %v659 = vld [vmem:[#allocation5 + $0x498] sm:$0xff]
    %v660 = vld [vmem:[#allocation5 + $0x4a0] sm:$0xff]
    %v661 = vld [vmem:[#allocation5 + $0x4a8] sm:$0xff]
    %v662 = vld [vmem:[#allocation5 + $0x4b0] sm:$0xff]
    %v663 = vld [vmem:[#allocation5 + $0x4b8] sm:$0xff]
    %v664 = vld [vmem:[#allocation5 + $0x4c0] sm:$0xff]
    %v665 = vld [vmem:[#allocation5 + $0x4c8] sm:$0xff]
    %v666 = vld [vmem:[#allocation5 + $0x4d0] sm:$0xff]
    %v667 = vld [vmem:[#allocation5 + $0x4d8] sm:$0xff]
    %v668 = vld [vmem:[#allocation5 + $0x4e0] sm:$0xff]
    %v669 = vld [vmem:[#allocation5 + $0x4e8] sm:$0xff]
    %v670 = vld [vmem:[#allocation5 + $0x4f0] sm:$0xff]
    %v671 = vld [vmem:[#allocation5 + $0x4f8] sm:$0xff]
    %v672 = vld [vmem:[#allocation5 + $0x500] sm:$0xff]
    %v673 = vld [vmem:[#allocation5 + $0x508] sm:$0xff]
    %v674 = vld [vmem:[#allocation5 + $0x510] sm:$0xff]
    %v675 = vld [vmem:[#allocation5 + $0x518] sm:$0xff]
    %v676 = vld [vmem:[#allocation5 + $0x520] sm:$0xff]
    %v677 = vld [vmem:[#allocation5 + $0x528] sm:$0xff]
    %v678 = vld [vmem:[#allocation5 + $0x530] sm:$0xff]
    %v679 = vld [vmem:[#allocation5 + $0x538] sm:$0xff]
    %v680 = vld [vmem:[#allocation5 + $0x540] sm:$0xff]
    %v681 = vld [vmem:[#allocation5 + $0x548] sm:$0xff]
    %v682 = vld [vmem:[#allocation5 + $0x550] sm:$0xff]
    %v683 = vld [vmem:[#allocation5 + $0x558] sm:$0xff]
    %v684 = vld [vmem:[#allocation5 + $0x560] sm:$0xff]
    %v685 = vld [vmem:[#allocation5 + $0x568] sm:$0xff]
    %v686 = vld [vmem:[#allocation5 + $0x570] sm:$0xff]
    %v687 = vld [vmem:[#allocation5 + $0x578] sm:$0xff]
    %v688 = vld [vmem:[#allocation5 + $0x580] sm:$0xff]
    %v689 = vld [vmem:[#allocation5 + $0x588] sm:$0xff]
    %v690 = vld [vmem:[#allocation5 + $0x590] sm:$0xff]
    %v691 = vld [vmem:[#allocation5 + $0x598] sm:$0xff]
    %v692 = vld [vmem:[#allocation5 + $0x5a0] sm:$0xff]
    %v693 = vld [vmem:[#allocation5 + $0x5a8] sm:$0xff]
    %v694 = vld [vmem:[#allocation5 + $0x5b0] sm:$0xff]
    %v695 = vld [vmem:[#allocation5 + $0x5b8] sm:$0xff]
    %v696 = vld [vmem:[#allocation5 + $0x5c0] sm:$0xff]
    %v697 = vld [vmem:[#allocation5 + $0x5c8] sm:$0xff]
    %v698 = vld [vmem:[#allocation5 + $0x5d0] sm:$0xff]
    %v699 = vld [vmem:[#allocation5 + $0x5d8] sm:$0xff]
    %v700 = vld [vmem:[#allocation5 + $0x5e0] sm:$0xff]
    %v701 = vld [vmem:[#allocation5 + $0x5e8] sm:$0xff]
    %v702 = vld [vmem:[#allocation5 + $0x5f0] sm:$0xff]
    %v703 = vld [vmem:[#allocation5 + $0x5f8] sm:$0xff]
    %v704 = vld [vmem:[#allocation5 + $0x600] sm:$0xff]
    %v705 = vld [vmem:[#allocation5 + $0x608] sm:$0xff]
    %v706 = vld [vmem:[#allocation5 + $0x610] sm:$0xff]
    %v707 = vld [vmem:[#allocation5 + $0x618] sm:$0xff]
    %v708 = vld [vmem:[#allocation5 + $0x620] sm:$0xff]
    %v709 = vld [vmem:[#allocation5 + $0x628] sm:$0xff]
    %v710 = vld [vmem:[#allocation5 + $0x630] sm:$0xff]
    %v711 = vld [vmem:[#allocation5 + $0x638] sm:$0xff]
    %v712 = vld [vmem:[#allocation5 + $0x640] sm:$0xff]
    %v713 = vld [vmem:[#allocation5 + $0x648] sm:$0xff]
    %v714 = vld [vmem:[#allocation5 + $0x650] sm:$0xff]
    %v715 = vld [vmem:[#allocation5 + $0x658] sm:$0xff]
    %v716 = vld [vmem:[#allocation5 + $0x660] sm:$0xff]
    %v717 = vld [vmem:[#allocation5 + $0x668] sm:$0xff]
    %v718 = vld [vmem:[#allocation5 + $0x670] sm:$0xff]
    %v719 = vld [vmem:[#allocation5 + $0x678] sm:$0xff]
    %v720 = vld [vmem:[#allocation5 + $0x680] sm:$0xff]
    %v721 = vld [vmem:[#allocation5 + $0x688] sm:$0xff]
    %v722 = vld [vmem:[#allocation5 + $0x690] sm:$0xff]
    %v723 = vld [vmem:[#allocation5 + $0x698] sm:$0xff]
    %v724 = vld [vmem:[#allocation5 + $0x6a0] sm:$0xff]
    %v725 = vld [vmem:[#allocation5 + $0x6a8] sm:$0xff]
    %v726 = vld [vmem:[#allocation5 + $0x6b0] sm:$0xff]
    %v727 = vld [vmem:[#allocation5 + $0x6b8] sm:$0xff]
    %v728 = vld [vmem:[#allocation5 + $0x6c0] sm:$0xff]
    %v729 = vld [vmem:[#allocation5 + $0x6c8] sm:$0xff]
    %v730 = vld [vmem:[#allocation5 + $0x6d0] sm:$0xff]
    %v731 = vld [vmem:[#allocation5 + $0x6d8] sm:$0xff]
    %v732 = vld [vmem:[#allocation5 + $0x6e0] sm:$0xff]
    %v733 = vld [vmem:[#allocation5 + $0x6e8] sm:$0xff]
    %v734 = vld [vmem:[#allocation5 + $0x6f0] sm:$0xff]
    %v735 = vld [vmem:[#allocation5 + $0x6f8] sm:$0xff]
    %v736 = vld [vmem:[#allocation5 + $0x700] sm:$0xff]
    %v737 = vld [vmem:[#allocation5 + $0x708] sm:$0xff]
    %v738 = vld [vmem:[#allocation5 + $0x710] sm:$0xff]
    %v739 = vld [vmem:[#allocation5 + $0x718] sm:$0xff]
    %v740 = vld [vmem:[#allocation5 + $0x720] sm:$0xff]
    %v741 = vld [vmem:[#allocation5 + $0x728] sm:$0xff]
    %v742 = vld [vmem:[#allocation5 + $0x730] sm:$0xff]
    %v743 = vld [vmem:[#allocation5 + $0x738] sm:$0xff]
    %v744 = vld [vmem:[#allocation5 + $0x740] sm:$0xff]
    %v745 = vld [vmem:[#allocation5 + $0x748] sm:$0xff]
    %v746 = vld [vmem:[#allocation5 + $0x750] sm:$0xff]
    %v747 = vld [vmem:[#allocation5 + $0x758] sm:$0xff]
    %v748 = vld [vmem:[#allocation5 + $0x760] sm:$0xff]
    %v749 = vld [vmem:[#allocation5 + $0x768] sm:$0xff]
    %v750 = vld [vmem:[#allocation5 + $0x770] sm:$0xff]
    %v751 = vld [vmem:[#allocation5 + $0x778] sm:$0xff]
    %v752 = vld [vmem:[#allocation5 + $0x780] sm:$0xff]
    %v753 = vld [vmem:[#allocation5 + $0x788] sm:$0xff]
    %v754 = vld [vmem:[#allocation5 + $0x790] sm:$0xff]
    %v755 = vld [vmem:[#allocation5 + $0x798] sm:$0xff]
    %v756 = vld [vmem:[#allocation5 + $0x7a0] sm:$0xff]
    %v757 = vld [vmem:[#allocation5 + $0x7a8] sm:$0xff]
    %v758 = vld [vmem:[#allocation5 + $0x7b0] sm:$0xff]
    %v759 = vld [vmem:[#allocation5 + $0x7b8] sm:$0xff]
    %v760 = vld [vmem:[#allocation5 + $0x7c0] sm:$0xff]
    %v761 = vld [vmem:[#allocation5 + $0x7c8] sm:$0xff]
    %v762 = vld [vmem:[#allocation5 + $0x7d0] sm:$0xff]
    %v763 = vld [vmem:[#allocation5 + $0x7d8] sm:$0xff]
    %v764 = vld [vmem:[#allocation5 + $0x7e0] sm:$0xff]
    %v765 = vld [vmem:[#allocation5 + $0x7e8] sm:$0xff]
    %v766 = vld [vmem:[#allocation5 + $0x7f0] sm:$0xff]
    %v767 = vld [vmem:[#allocation5 + $0x7f8] sm:$0xff]
    %v768 = vld [vmem:[#allocation5 + $0x800] sm:$0xff]
    %v769 = vld [vmem:[#allocation5 + $0x808] sm:$0xff]
    %v770 = vld [vmem:[#allocation5 + $0x810] sm:$0xff]
    %v771 = vld [vmem:[#allocation5 + $0x818] sm:$0xff]
    %v772 = vld [vmem:[#allocation5 + $0x820] sm:$0xff]
    %v773 = vld [vmem:[#allocation5 + $0x828] sm:$0xff]
    %v774 = vld [vmem:[#allocation5 + $0x830] sm:$0xff]
    %v775 = vld [vmem:[#allocation5 + $0x838] sm:$0xff]
    %v776 = vld [vmem:[#allocation5 + $0x840] sm:$0xff]
    %v777 = vld [vmem:[#allocation5 + $0x848] sm:$0xff]
    %v778 = vld [vmem:[#allocation5 + $0x850] sm:$0xff]
    %v779 = vld [vmem:[#allocation5 + $0x858] sm:$0xff]
    %v780 = vld [vmem:[#allocation5 + $0x860] sm:$0xff]
    %v781 = vld [vmem:[#allocation5 + $0x868] sm:$0xff]
    %v782 = vld [vmem:[#allocation5 + $0x870] sm:$0xff]
    %v783 = vld [vmem:[#allocation5 + $0x878] sm:$0xff]
    %v784 = vld [vmem:[#allocation5 + $0x880] sm:$0xff]
    %v785 = vld [vmem:[#allocation5 + $0x888] sm:$0xff]
    %v786 = vld [vmem:[#allocation5 + $0x890] sm:$0xff]
    %v787 = vld [vmem:[#allocation5 + $0x898] sm:$0xff]
    %v788 = vld [vmem:[#allocation5 + $0x8a0] sm:$0xff]
    %v789 = vld [vmem:[#allocation5 + $0x8a8] sm:$0xff]
    %v790 = vld [vmem:[#allocation5 + $0x8b0] sm:$0xff]
    %v791 = vld [vmem:[#allocation5 + $0x8b8] sm:$0xff]
    %v792 = vld [vmem:[#allocation5 + $0x8c0] sm:$0xff]
    %v793 = vld [vmem:[#allocation5 + $0x8c8] sm:$0xff]
    %v794 = vld [vmem:[#allocation5 + $0x8d0] sm:$0xff]
    %v795 = vld [vmem:[#allocation5 + $0x8d8] sm:$0xff]
    %v796 = vld [vmem:[#allocation5 + $0x8e0] sm:$0xff]
    %v797 = vld [vmem:[#allocation5 + $0x8e8] sm:$0xff]
    %v798 = vld [vmem:[#allocation5 + $0x8f0] sm:$0xff]
    %v799 = vld [vmem:[#allocation5 + $0x8f8] sm:$0xff]
    %v800 = vld [vmem:[#allocation5 + $0x900] sm:$0xff]
    %v801 = vld [vmem:[#allocation5 + $0x908] sm:$0xff]
    %v802 = vld [vmem:[#allocation5 + $0x910] sm:$0xff]
    %v803 = vld [vmem:[#allocation5 + $0x918] sm:$0xff]
    %v804 = vld [vmem:[#allocation5 + $0x920] sm:$0xff]
    %v805 = vld [vmem:[#allocation5 + $0x928] sm:$0xff]
    %v806 = vld [vmem:[#allocation5 + $0x930] sm:$0xff]
    %v807 = vld [vmem:[#allocation5 + $0x938] sm:$0xff]
    %v808 = vld [vmem:[#allocation5 + $0x940] sm:$0xff]
    %v809 = vld [vmem:[#allocation5 + $0x948] sm:$0xff]
    %v810 = vld [vmem:[#allocation5 + $0x950] sm:$0xff]
    %v811 = vld [vmem:[#allocation5 + $0x958] sm:$0xff]
    %v812 = vld [vmem:[#allocation5 + $0x960] sm:$0xff]
    %v813 = vld [vmem:[#allocation5 + $0x968] sm:$0xff]
    %v814 = vld [vmem:[#allocation5 + $0x970] sm:$0xff]
    %v815 = vld [vmem:[#allocation5 + $0x978] sm:$0xff]
    %v816 = vld [vmem:[#allocation5 + $0x980] sm:$0xff]
    %v817 = vld [vmem:[#allocation5 + $0x988] sm:$0xff]
    %v818 = vld [vmem:[#allocation5 + $0x990] sm:$0xff]
    %v819 = vld [vmem:[#allocation5 + $0x998] sm:$0xff]
    %v820 = vld [vmem:[#allocation5 + $0x9a0] sm:$0xff]
    %v821 = vld [vmem:[#allocation5 + $0x9a8] sm:$0xff]
    %v822 = vld [vmem:[#allocation5 + $0x9b0] sm:$0xff]
    %v823 = vld [vmem:[#allocation5 + $0x9b8] sm:$0xff]
    %v824 = vld [vmem:[#allocation5 + $0x9c0] sm:$0xff]
    %v825 = vld [vmem:[#allocation5 + $0x9c8] sm:$0xff]
    %v826 = vld [vmem:[#allocation5 + $0x9d0] sm:$0xff]
    %v827 = vld [vmem:[#allocation5 + $0x9d8] sm:$0xff]
    %v828 = vld [vmem:[#allocation5 + $0x9e0] sm:$0xff]
    %v829 = vld [vmem:[#allocation5 + $0x9e8] sm:$0xff]
    %v830 = vld [vmem:[#allocation5 + $0x9f0] sm:$0xff]
    %v831 = vld [vmem:[#allocation5 + $0x9f8] sm:$0xff]
    %v832 = vld [vmem:[#allocation5 + $0xa00] sm:$0xff]
    %v833 = vld [vmem:[#allocation5 + $0xa08] sm:$0xff]
    %v834 = vld [vmem:[#allocation5 + $0xa10] sm:$0xff]
    %v835 = vld [vmem:[#allocation5 + $0xa18] sm:$0xff]
    %v836 = vld [vmem:[#allocation5 + $0xa20] sm:$0xff]
    %v837 = vld [vmem:[#allocation5 + $0xa28] sm:$0xff]
    %v838 = vld [vmem:[#allocation5 + $0xa30] sm:$0xff]
    %v839 = vld [vmem:[#allocation5 + $0xa38] sm:$0xff]
    %v840 = vld [vmem:[#allocation5 + $0xa40] sm:$0xff]
    %v841 = vld [vmem:[#allocation5 + $0xa48] sm:$0xff]
    %v842 = vld [vmem:[#allocation5 + $0xa50] sm:$0xff]
    %v843 = vld [vmem:[#allocation5 + $0xa58] sm:$0xff]
    %v844 = vld [vmem:[#allocation5 + $0xa60] sm:$0xff]
    %v845 = vld [vmem:[#allocation5 + $0xa68] sm:$0xff]
    %v846 = vld [vmem:[#allocation5 + $0xa70] sm:$0xff]
    %v847 = vld [vmem:[#allocation5 + $0xa78] sm:$0xff]
    %v848 = vld [vmem:[#allocation5 + $0xa80] sm:$0xff]
    %v849 = vld [vmem:[#allocation5 + $0xa88] sm:$0xff]
    %v850 = vld [vmem:[#allocation5 + $0xa90] sm:$0xff]
    %v851 = vld [vmem:[#allocation5 + $0xa98] sm:$0xff]
    %v852 = vld [vmem:[#allocation5 + $0xaa0] sm:$0xff]
    %v853 = vld [vmem:[#allocation5 + $0xaa8] sm:$0xff]
    %v854 = vld [vmem:[#allocation5 + $0xab0] sm:$0xff]
    %v855 = vld [vmem:[#allocation5 + $0xab8] sm:$0xff]
    %v856 = vld [vmem:[#allocation5 + $0xac0] sm:$0xff]
    %v857 = vld [vmem:[#allocation5 + $0xac8] sm:$0xff]
    %v858 = vld [vmem:[#allocation5 + $0xad0] sm:$0xff]
    %v859 = vld [vmem:[#allocation5 + $0xad8] sm:$0xff]
    %v860 = vld [vmem:[#allocation5 + $0xae0] sm:$0xff]
    %v861 = vld [vmem:[#allocation5 + $0xae8] sm:$0xff]
    %v862 = vld [vmem:[#allocation5 + $0xaf0] sm:$0xff]
    %v863 = vld [vmem:[#allocation5 + $0xaf8] sm:$0xff]
    %v864 = vld [vmem:[#allocation5 + $0xb00] sm:$0xff]
    %v865 = vld [vmem:[#allocation5 + $0xb08] sm:$0xff]
    %v866 = vld [vmem:[#allocation5 + $0xb10] sm:$0xff]
    %v867 = vld [vmem:[#allocation5 + $0xb18] sm:$0xff]
    %v868 = vld [vmem:[#allocation5 + $0xb20] sm:$0xff]
    %v869 = vld [vmem:[#allocation5 + $0xb28] sm:$0xff]
    %v870 = vld [vmem:[#allocation5 + $0xb30] sm:$0xff]
    %v871 = vld [vmem:[#allocation5 + $0xb38] sm:$0xff]
    %v872 = vld [vmem:[#allocation5 + $0xb40] sm:$0xff]
    %v873 = vld [vmem:[#allocation5 + $0xb48] sm:$0xff]
    %v874 = vld [vmem:[#allocation5 + $0xb50] sm:$0xff]
    %v875 = vld [vmem:[#allocation5 + $0xb58] sm:$0xff]
    %v876 = vld [vmem:[#allocation5 + $0xb60] sm:$0xff]
    %v877 = vld [vmem:[#allocation5 + $0xb68] sm:$0xff]
    %v878 = vld [vmem:[#allocation5 + $0xb70] sm:$0xff]
    %v879 = vld [vmem:[#allocation5 + $0xb78] sm:$0xff]
    %v880 = vld [vmem:[#allocation5 + $0xb80] sm:$0xff]
    %v881 = vld [vmem:[#allocation5 + $0xb88] sm:$0xff]
    %v882 = vld [vmem:[#allocation5 + $0xb90] sm:$0xff]
    %v883 = vld [vmem:[#allocation5 + $0xb98] sm:$0xff]
    %v884 = vld [vmem:[#allocation5 + $0xba0] sm:$0xff]
    %v885 = vld [vmem:[#allocation5 + $0xba8] sm:$0xff]
    %v886 = vld [vmem:[#allocation5 + $0xbb0] sm:$0xff]
    %v887 = vld [vmem:[#allocation5 + $0xbb8] sm:$0xff]
    %v888 = vld [vmem:[#allocation5 + $0xbc0] sm:$0xff]
    %v889 = vld [vmem:[#allocation5 + $0xbc8] sm:$0xff]
    %v890 = vld [vmem:[#allocation5 + $0xbd0] sm:$0xff]
    %v891 = vld [vmem:[#allocation5 + $0xbd8] sm:$0xff]
    %v892 = vld [vmem:[#allocation5 + $0xbe0] sm:$0xff]
    %v893 = vld [vmem:[#allocation5 + $0xbe8] sm:$0xff]
    %v894 = vld [vmem:[#allocation5 + $0xbf0] sm:$0xff]
    %v895 = vld [vmem:[#allocation5 + $0xbf8] sm:$0xff]
    %v896 = vld [vmem:[#allocation5 + $0xc00] sm:$0xff]
    %v897 = vld [vmem:[#allocation5 + $0xc08] sm:$0xff]
    %v898 = vld [vmem:[#allocation5 + $0xc10] sm:$0xff]
    %v899 = vld [vmem:[#allocation5 + $0xc18] sm:$0xff]
    %v900 = vld [vmem:[#allocation5 + $0xc20] sm:$0xff]
    %v901 = vld [vmem:[#allocation5 + $0xc28] sm:$0xff]
    %v902 = vld [vmem:[#allocation5 + $0xc30] sm:$0xff]
    %v903 = vld [vmem:[#allocation5 + $0xc38] sm:$0xff]
    %v904 = vld [vmem:[#allocation5 + $0xc40] sm:$0xff]
    %v905 = vld [vmem:[#allocation5 + $0xc48] sm:$0xff]
    %v906 = vld [vmem:[#allocation5 + $0xc50] sm:$0xff]
    %v907 = vld [vmem:[#allocation5 + $0xc58] sm:$0xff]
    %v908 = vld [vmem:[#allocation5 + $0xc60] sm:$0xff]
    %v909 = vld [vmem:[#allocation5 + $0xc68] sm:$0xff]
    %v910 = vld [vmem:[#allocation5 + $0xc70] sm:$0xff]
    %v911 = vld [vmem:[#allocation5 + $0xc78] sm:$0xff]
    %v912 = vld [vmem:[#allocation5 + $0xc80] sm:$0xff]
    %v913 = vld [vmem:[#allocation5 + $0xc88] sm:$0xff]
    %v914 = vld [vmem:[#allocation5 + $0xc90] sm:$0xff]
    %v915 = vld [vmem:[#allocation5 + $0xc98] sm:$0xff]
    %v916 = vld [vmem:[#allocation5 + $0xca0] sm:$0xff]
    %v917 = vld [vmem:[#allocation5 + $0xca8] sm:$0xff]
    %v918 = vld [vmem:[#allocation5 + $0xcb0] sm:$0xff]
    %v919 = vld [vmem:[#allocation5 + $0xcb8] sm:$0xff]
    %v920 = vld [vmem:[#allocation5 + $0xcc0] sm:$0xff]
    %v921 = vld [vmem:[#allocation5 + $0xcc8] sm:$0xff]
    %v922 = vld [vmem:[#allocation5 + $0xcd0] sm:$0xff]
    %v923 = vld [vmem:[#allocation5 + $0xcd8] sm:$0xff]
    %v924 = vld [vmem:[#allocation5 + $0xce0] sm:$0xff]
    %v925 = vld [vmem:[#allocation5 + $0xce8] sm:$0xff]
    %v926 = vld [vmem:[#allocation5 + $0xcf0] sm:$0xff]
    %v927 = vld [vmem:[#allocation5 + $0xcf8] sm:$0xff]
    %v928 = vld [vmem:[#allocation5 + $0xd00] sm:$0xff]
    %v929 = vld [vmem:[#allocation5 + $0xd08] sm:$0xff]
    %v930 = vld [vmem:[#allocation5 + $0xd10] sm:$0xff]
    %v931 = vld [vmem:[#allocation5 + $0xd18] sm:$0xff]
    %v932 = vld [vmem:[#allocation5 + $0xd20] sm:$0xff]
    %v933 = vld [vmem:[#allocation5 + $0xd28] sm:$0xff]
    %v934 = vld [vmem:[#allocation5 + $0xd30] sm:$0xff]
    %v935 = vld [vmem:[#allocation5 + $0xd38] sm:$0xff]
    %v936 = vld [vmem:[#allocation5 + $0xd40] sm:$0xff]
    %v937 = vld [vmem:[#allocation5 + $0xd48] sm:$0xff]
    %v938 = vld [vmem:[#allocation5 + $0xd50] sm:$0xff]
    %v939 = vld [vmem:[#allocation5 + $0xd58] sm:$0xff]
    %v940 = vld [vmem:[#allocation5 + $0xd60] sm:$0xff]
    %v941 = vld [vmem:[#allocation5 + $0xd68] sm:$0xff]
    %v942 = vld [vmem:[#allocation5 + $0xd70] sm:$0xff]
    %v943 = vld [vmem:[#allocation5 + $0xd78] sm:$0xff]
    %v944 = vld [vmem:[#allocation5 + $0xd80] sm:$0xff]
    %v945 = vld [vmem:[#allocation5 + $0xd88] sm:$0xff]
    %v946 = vld [vmem:[#allocation5 + $0xd90] sm:$0xff]
    %v947 = vld [vmem:[#allocation5 + $0xd98] sm:$0xff]
    %v948 = vld [vmem:[#allocation5 + $0xda0] sm:$0xff]
    %v949 = vld [vmem:[#allocation5 + $0xda8] sm:$0xff]
    %v950 = vld [vmem:[#allocation5 + $0xdb0] sm:$0xff]
    %v951 = vld [vmem:[#allocation5 + $0xdb8] sm:$0xff]
    %v952 = vld [vmem:[#allocation5 + $0xdc0] sm:$0xff]
    %v953 = vld [vmem:[#allocation5 + $0xdc8] sm:$0xff]
    %v954 = vld [vmem:[#allocation5 + $0xdd0] sm:$0xff]
    %v955 = vld [vmem:[#allocation5 + $0xdd8] sm:$0xff]
    %v956 = vld [vmem:[#allocation5 + $0xde0] sm:$0xff]
    %v957 = vld [vmem:[#allocation5 + $0xde8] sm:$0xff]
    %v958 = vld [vmem:[#allocation5 + $0xdf0] sm:$0xff]
    %v959 = vld [vmem:[#allocation5 + $0xdf8] sm:$0xff]
    %v960 = vld [vmem:[#allocation5 + $0xe00] sm:$0xff]
    %v961 = vld [vmem:[#allocation5 + $0xe08] sm:$0xff]
    %v962 = vld [vmem:[#allocation7] sm:$0xf]
    %v964 = vlaneseq
    %v965 = vshrl.u32 %v964, 7
    %v966 = vsub.s32 0, %v965
    %v967 = vrot.slane %v962, %v966
    %v968 = vlaneseq
    %v969 = vshrl.u32 %v968, 7
    %v970 = vsub.s32 1, %v969
    %v971 = vrot.slane %v962, %v970
    %v972 = vlaneseq
    %v973 = vshrl.u32 %v972, 7
    %v974 = vsub.s32 2, %v973
    %v975 = vrot.slane %v962, %v974
    %v976 = vlaneseq
    %v977 = vshrl.u32 %v976, 7
    %v978 = vsub.s32 3, %v977
    %v979 = vrot.slane %v962, %v978
    %v1434 = vunpack.c.l.b16 %v512
    %v1435 = vunpack.c.h.b16 %v512
    %v1436 = vunpack.c.l.b16 %v513
    %v1437 = vunpack.c.h.b16 %v513
    %v1438 = vunpack.c.l.b16 %v514
    %v1439 = vunpack.c.h.b16 %v514
    %v1440 = vunpack.c.l.b16 %v515
    %v1441 = vunpack.c.h.b16 %v515
    %v1442 = vunpack.c.l.b16 %v516
    %v1443 = vunpack.c.h.b16 %v516
    %v1444 = vunpack.c.l.b16 %v517
    %v1445 = vunpack.c.h.b16 %v517
    %v1446 = vunpack.c.l.b16 %v518
    %v1447 = vunpack.c.h.b16 %v518
    %v1448 = vunpack.c.l.b16 %v519
    %v1449 = vunpack.c.h.b16 %v519
    %v1450 = vunpack.c.l.b16 %v520
    %v1451 = vunpack.c.h.b16 %v520
    %v1452 = vunpack.c.l.b16 %v521
    %v1453 = vunpack.c.h.b16 %v521
    %v1454 = vunpack.c.l.b16 %v522
    %v1455 = vunpack.c.h.b16 %v522
    %v1456 = vunpack.c.l.b16 %v523
    %v1457 = vunpack.c.h.b16 %v523
    %v1458 = vunpack.c.l.b16 %v524
    %v1459 = vunpack.c.h.b16 %v524
    %v1460 = vunpack.c.l.b16 %v525
    %v1461 = vunpack.c.h.b16 %v525
    %v1462 = vunpack.c.l.b16 %v526
    %v1463 = vunpack.c.h.b16 %v526
    %v1464 = vunpack.c.l.b16 %v527
    %v1465 = vunpack.c.h.b16 %v527
    %v1466 = vunpack.c.l.b16 %v528
    %v1467 = vunpack.c.h.b16 %v528
    %v1468 = vunpack.c.l.b16 %v529
    %v1469 = vunpack.c.h.b16 %v529
    %v1470 = vunpack.c.l.b16 %v530
    %v1471 = vunpack.c.h.b16 %v530
    %v1472 = vunpack.c.l.b16 %v531
    %v1473 = vunpack.c.h.b16 %v531
    %v1474 = vunpack.c.l.b16 %v532
    %v1475 = vunpack.c.h.b16 %v532
    %v1476 = vunpack.c.l.b16 %v533
    %v1477 = vunpack.c.h.b16 %v533
    %v1478 = vunpack.c.l.b16 %v534
    %v1479 = vunpack.c.h.b16 %v534
    %v1480 = vunpack.c.l.b16 %v535
    %v1481 = vunpack.c.h.b16 %v535
    %v1482 = vunpack.c.l.b16 %v536
    %v1483 = vunpack.c.h.b16 %v536
    %v1484 = vunpack.c.l.b16 %v537
    %v1485 = vunpack.c.h.b16 %v537
    %v1486 = vunpack.c.l.b16 %v538
    %v1487 = vunpack.c.h.b16 %v538
    %v1488 = vunpack.c.l.b16 %v539
    %v1489 = vunpack.c.h.b16 %v539
    %v1490 = vunpack.c.l.b16 %v540
    %v1491 = vunpack.c.h.b16 %v540
    %v1492 = vunpack.c.l.b16 %v541
    %v1493 = vunpack.c.h.b16 %v541
    %v1494 = vunpack.c.l.b16 %v542
    %v1495 = vunpack.c.h.b16 %v542
    %v1496 = vunpack.c.l.b16 %v543
    %v1497 = vunpack.c.h.b16 %v543
    %v1498 = vunpack.c.l.b16 %v544
    %v1499 = vunpack.c.h.b16 %v544
    %v1500 = vunpack.c.l.b16 %v545
    %v1501 = vunpack.c.h.b16 %v545
    %v1502 = vunpack.c.l.b16 %v546
    %v1503 = vunpack.c.h.b16 %v546
    %v1504 = vunpack.c.l.b16 %v547
    %v1505 = vunpack.c.h.b16 %v547
    %v1506 = vunpack.c.l.b16 %v548
    %v1507 = vunpack.c.h.b16 %v548
    %v1508 = vunpack.c.l.b16 %v549
    %v1509 = vunpack.c.h.b16 %v549
    %v1510 = vunpack.c.l.b16 %v550
    %v1511 = vunpack.c.h.b16 %v550
    %v1512 = vunpack.c.l.b16 %v551
    %v1513 = vunpack.c.h.b16 %v551
    %v1514 = vunpack.c.l.b16 %v552
    %v1515 = vunpack.c.h.b16 %v552
    %v1516 = vunpack.c.l.b16 %v553
    %v1517 = vunpack.c.h.b16 %v553
    %v1518 = vunpack.c.l.b16 %v554
    %v1519 = vunpack.c.h.b16 %v554
    %v1520 = vunpack.c.l.b16 %v555
    %v1521 = vunpack.c.h.b16 %v555
    %v1522 = vunpack.c.l.b16 %v556
    %v1523 = vunpack.c.h.b16 %v556
    %v1524 = vunpack.c.l.b16 %v557
    %v1525 = vunpack.c.h.b16 %v557
    %v1526 = vunpack.c.l.b16 %v558
    %v1527 = vunpack.c.h.b16 %v558
    %v1528 = vunpack.c.l.b16 %v559
    %v1529 = vunpack.c.h.b16 %v559
    %v1530 = vunpack.c.l.b16 %v560
    %v1531 = vunpack.c.h.b16 %v560
    %v1532 = vunpack.c.l.b16 %v561
    %v1533 = vunpack.c.h.b16 %v561
    %v1534 = vunpack.c.l.b16 %v562
    %v1535 = vunpack.c.h.b16 %v562
    %v1536 = vunpack.c.l.b16 %v563
    %v1537 = vunpack.c.h.b16 %v563
    %v1538 = vunpack.c.l.b16 %v564
    %v1539 = vunpack.c.h.b16 %v564
    %v1540 = vunpack.c.l.b16 %v565
    %v1541 = vunpack.c.h.b16 %v565
    %v1542 = vunpack.c.l.b16 %v566
    %v1543 = vunpack.c.h.b16 %v566
    %v1544 = vunpack.c.l.b16 %v567
    %v1545 = vunpack.c.h.b16 %v567
    %v1546 = vunpack.c.l.b16 %v568
    %v1547 = vunpack.c.h.b16 %v568
    %v1548 = vunpack.c.l.b16 %v569
    %v1549 = vunpack.c.h.b16 %v569
    %v1550 = vunpack.c.l.b16 %v570
    %v1551 = vunpack.c.h.b16 %v570
    %v1552 = vunpack.c.l.b16 %v571
    %v1553 = vunpack.c.h.b16 %v571
    %v1554 = vunpack.c.l.b16 %v572
    %v1555 = vunpack.c.h.b16 %v572
    %v1556 = vunpack.c.l.b16 %v573
    %v1557 = vunpack.c.h.b16 %v573
    %v1558 = vunpack.c.l.b16 %v574
    %v1559 = vunpack.c.h.b16 %v574
    %v1560 = vunpack.c.l.b16 %v575
    %v1561 = vunpack.c.h.b16 %v575
    %v1562 = vunpack.c.l.b16 %v576
    %v1563 = vunpack.c.h.b16 %v576
    %v1564 = vunpack.c.l.b16 %v577
    %v1565 = vunpack.c.h.b16 %v577
    %v1566 = vunpack.c.l.b16 %v578
    %v1567 = vunpack.c.h.b16 %v578
    %v1568 = vunpack.c.l.b16 %v579
    %v1569 = vunpack.c.h.b16 %v579
    %v1570 = vunpack.c.l.b16 %v580
    %v1571 = vunpack.c.h.b16 %v580
    %v1572 = vunpack.c.l.b16 %v581
    %v1573 = vunpack.c.h.b16 %v581
    %v1574 = vunpack.c.l.b16 %v582
    %v1575 = vunpack.c.h.b16 %v582
    %v1576 = vunpack.c.l.b16 %v583
    %v1577 = vunpack.c.h.b16 %v583
    %v1578 = vunpack.c.l.b16 %v584
    %v1579 = vunpack.c.h.b16 %v584
    %v1580 = vunpack.c.l.b16 %v585
    %v1581 = vunpack.c.h.b16 %v585
    %v1582 = vunpack.c.l.b16 %v586
    %v1583 = vunpack.c.h.b16 %v586
    %v1584 = vunpack.c.l.b16 %v587
    %v1585 = vunpack.c.h.b16 %v587
    %v1586 = vunpack.c.l.b16 %v588
    %v1587 = vunpack.c.h.b16 %v588
    %v1588 = vunpack.c.l.b16 %v589
    %v1589 = vunpack.c.h.b16 %v589
    %v1590 = vunpack.c.l.b16 %v590
    %v1591 = vunpack.c.h.b16 %v590
    %v1592 = vunpack.c.l.b16 %v591
    %v1593 = vunpack.c.h.b16 %v591
    %v1594 = vunpack.c.l.b16 %v592
    %v1595 = vunpack.c.h.b16 %v592
    %v1596 = vunpack.c.l.b16 %v593
    %v1597 = vunpack.c.h.b16 %v593
    %v1598 = vunpack.c.l.b16 %v594
    %v1599 = vunpack.c.h.b16 %v594
    %v1600 = vunpack.c.l.b16 %v595
    %v1601 = vunpack.c.h.b16 %v595
    %v1602 = vunpack.c.l.b16 %v596
    %v1603 = vunpack.c.h.b16 %v596
    %v1604 = vunpack.c.l.b16 %v597
    %v1605 = vunpack.c.h.b16 %v597
    %v1606 = vunpack.c.l.b16 %v598
    %v1607 = vunpack.c.h.b16 %v598
    %v1608 = vunpack.c.l.b16 %v599
    %v1609 = vunpack.c.h.b16 %v599
    %v1610 = vunpack.c.l.b16 %v600
    %v1611 = vunpack.c.h.b16 %v600
    %v1612 = vunpack.c.l.b16 %v601
    %v1613 = vunpack.c.h.b16 %v601
    %v1614 = vunpack.c.l.b16 %v602
    %v1615 = vunpack.c.h.b16 %v602
    %v1616 = vunpack.c.l.b16 %v603
    %v1617 = vunpack.c.h.b16 %v603
    %v1618 = vunpack.c.l.b16 %v604
    %v1619 = vunpack.c.h.b16 %v604
    %v1620 = vunpack.c.l.b16 %v605
    %v1621 = vunpack.c.h.b16 %v605
    %v1622 = vunpack.c.l.b16 %v606
    %v1623 = vunpack.c.h.b16 %v606
    %v1624 = vunpack.c.l.b16 %v607
    %v1625 = vunpack.c.h.b16 %v607
    %v1626 = vunpack.c.l.b16 %v608
    %v1627 = vunpack.c.h.b16 %v608
    %v1628 = vunpack.c.l.b16 %v609
    %v1629 = vunpack.c.h.b16 %v609
    %v1630 = vunpack.c.l.b16 %v610
    %v1631 = vunpack.c.h.b16 %v610
    %v1632 = vunpack.c.l.b16 %v611
    %v1633 = vunpack.c.h.b16 %v611
    %v1634 = vunpack.c.l.b16 %v612
    %v1635 = vunpack.c.h.b16 %v612
    %v1636 = vunpack.c.l.b16 %v613
    %v1637 = vunpack.c.h.b16 %v613
    %v1638 = vunpack.c.l.b16 %v614
    %v1639 = vunpack.c.h.b16 %v614
    %v1640 = vunpack.c.l.b16 %v615
    %v1641 = vunpack.c.h.b16 %v615
    %v1642 = vunpack.c.l.b16 %v616
    %v1643 = vunpack.c.h.b16 %v616
    %v1644 = vunpack.c.l.b16 %v617
    %v1645 = vunpack.c.h.b16 %v617
    %v1646 = vunpack.c.l.b16 %v618
    %v1647 = vunpack.c.h.b16 %v618
    %v1648 = vunpack.c.l.b16 %v619
    %v1649 = vunpack.c.h.b16 %v619
    %v1650 = vunpack.c.l.b16 %v620
    %v1651 = vunpack.c.h.b16 %v620
    %v1652 = vunpack.c.l.b16 %v621
    %v1653 = vunpack.c.h.b16 %v621
    %v1654 = vunpack.c.l.b16 %v622
    %v1655 = vunpack.c.h.b16 %v622
    %v1656 = vunpack.c.l.b16 %v623
    %v1657 = vunpack.c.h.b16 %v623
    %v1658 = vunpack.c.l.b16 %v624
    %v1659 = vunpack.c.h.b16 %v624
    %v1660 = vunpack.c.l.b16 %v625
    %v1661 = vunpack.c.h.b16 %v625
    %v1662 = vunpack.c.l.b16 %v626
    %v1663 = vunpack.c.h.b16 %v626
    %v1664 = vunpack.c.l.b16 %v627
    %v1665 = vunpack.c.h.b16 %v627
    %v1666 = vunpack.c.l.b16 %v628
    %v1667 = vunpack.c.h.b16 %v628
    %v1668 = vunpack.c.l.b16 %v629
    %v1669 = vunpack.c.h.b16 %v629
    %v1670 = vunpack.c.l.b16 %v630
    %v1671 = vunpack.c.h.b16 %v630
    %v1672 = vunpack.c.l.b16 %v631
    %v1673 = vunpack.c.h.b16 %v631
    %v1674 = vunpack.c.l.b16 %v632
    %v1675 = vunpack.c.h.b16 %v632
    %v1676 = vunpack.c.l.b16 %v633
    %v1677 = vunpack.c.h.b16 %v633
    %v1678 = vunpack.c.l.b16 %v634
    %v1679 = vunpack.c.h.b16 %v634
    %v1680 = vunpack.c.l.b16 %v635
    %v1681 = vunpack.c.h.b16 %v635
    %v1682 = vunpack.c.l.b16 %v636
    %v1683 = vunpack.c.h.b16 %v636
    %v1684 = vunpack.c.l.b16 %v637
    %v1685 = vunpack.c.h.b16 %v637
    %v1686 = vunpack.c.l.b16 %v638
    %v1687 = vunpack.c.h.b16 %v638
    %v1688 = vunpack.c.l.b16 %v639
    %v1689 = vunpack.c.h.b16 %v639
    %v1690 = vunpack.c.l.b16 %v640
    %v1691 = vunpack.c.h.b16 %v640
    %v1692 = vunpack.c.l.b16 %v641
    %v1693 = vunpack.c.h.b16 %v641
    %v1694 = vunpack.c.l.b16 %v642
    %v1695 = vunpack.c.h.b16 %v642
    %v1696 = vunpack.c.l.b16 %v643
    %v1697 = vunpack.c.h.b16 %v643
    %v1698 = vunpack.c.l.b16 %v644
    %v1699 = vunpack.c.h.b16 %v644
    %v1700 = vunpack.c.l.b16 %v645
    %v1701 = vunpack.c.h.b16 %v645
    %v1702 = vunpack.c.l.b16 %v646
    %v1703 = vunpack.c.h.b16 %v646
    %v1704 = vunpack.c.l.b16 %v647
    %v1705 = vunpack.c.h.b16 %v647
    %v1706 = vunpack.c.l.b16 %v648
    %v1707 = vunpack.c.h.b16 %v648
    %v1708 = vunpack.c.l.b16 %v649
    %v1709 = vunpack.c.h.b16 %v649
    %v1710 = vunpack.c.l.b16 %v650
    %v1711 = vunpack.c.h.b16 %v650
    %v1712 = vunpack.c.l.b16 %v651
    %v1713 = vunpack.c.h.b16 %v651
    %v1714 = vunpack.c.l.b16 %v652
    %v1715 = vunpack.c.h.b16 %v652
    %v1716 = vunpack.c.l.b16 %v653
    %v1717 = vunpack.c.h.b16 %v653
    %v1718 = vunpack.c.l.b16 %v654
    %v1719 = vunpack.c.h.b16 %v654
    %v1720 = vunpack.c.l.b16 %v655
    %v1721 = vunpack.c.h.b16 %v655
    %v1722 = vunpack.c.l.b16 %v656
    %v1723 = vunpack.c.h.b16 %v656
    %v1724 = vunpack.c.l.b16 %v657
    %v1725 = vunpack.c.h.b16 %v657
    %v1726 = vunpack.c.l.b16 %v658
    %v1727 = vunpack.c.h.b16 %v658
    %v1728 = vunpack.c.l.b16 %v659
    %v1729 = vunpack.c.h.b16 %v659
    %v1730 = vunpack.c.l.b16 %v660
    %v1731 = vunpack.c.h.b16 %v660
    %v1732 = vunpack.c.l.b16 %v661
    %v1733 = vunpack.c.h.b16 %v661
    %v1734 = vunpack.c.l.b16 %v662
    %v1735 = vunpack.c.h.b16 %v662
    %v1736 = vunpack.c.l.b16 %v663
    %v1737 = vunpack.c.h.b16 %v663
    %v1738 = vunpack.c.l.b16 %v664
    %v1739 = vunpack.c.h.b16 %v664
    %v1740 = vunpack.c.l.b16 %v665
    %v1741 = vunpack.c.h.b16 %v665
    %v1742 = vunpack.c.l.b16 %v666
    %v1743 = vunpack.c.h.b16 %v666
    %v1744 = vunpack.c.l.b16 %v667
    %v1745 = vunpack.c.h.b16 %v667
    %v1746 = vunpack.c.l.b16 %v668
    %v1747 = vunpack.c.h.b16 %v668
    %v1748 = vunpack.c.l.b16 %v669
    %v1749 = vunpack.c.h.b16 %v669
    %v1750 = vunpack.c.l.b16 %v670
    %v1751 = vunpack.c.h.b16 %v670
    %v1752 = vunpack.c.l.b16 %v671
    %v1753 = vunpack.c.h.b16 %v671
    %v1754 = vunpack.c.l.b16 %v672
    %v1755 = vunpack.c.h.b16 %v672
    %v1756 = vunpack.c.l.b16 %v673
    %v1757 = vunpack.c.h.b16 %v673
    %v1758 = vunpack.c.l.b16 %v674
    %v1759 = vunpack.c.h.b16 %v674
    %v1760 = vunpack.c.l.b16 %v675
    %v1761 = vunpack.c.h.b16 %v675
    %v1762 = vunpack.c.l.b16 %v676
    %v1763 = vunpack.c.h.b16 %v676
    %v1764 = vunpack.c.l.b16 %v677
    %v1765 = vunpack.c.h.b16 %v677
    %v1766 = vunpack.c.l.b16 %v678
    %v1767 = vunpack.c.h.b16 %v678
    %v1768 = vunpack.c.l.b16 %v679
    %v1769 = vunpack.c.h.b16 %v679
    %v1770 = vunpack.c.l.b16 %v680
    %v1771 = vunpack.c.h.b16 %v680
    %v1772 = vunpack.c.l.b16 %v681
    %v1773 = vunpack.c.h.b16 %v681
    %v1774 = vunpack.c.l.b16 %v682
    %v1775 = vunpack.c.h.b16 %v682
    %v1776 = vunpack.c.l.b16 %v683
    %v1777 = vunpack.c.h.b16 %v683
    %v1778 = vunpack.c.l.b16 %v684
    %v1779 = vunpack.c.h.b16 %v684
    %v1780 = vunpack.c.l.b16 %v685
    %v1781 = vunpack.c.h.b16 %v685
    %v1782 = vunpack.c.l.b16 %v686
    %v1783 = vunpack.c.h.b16 %v686
    %v1784 = vunpack.c.l.b16 %v687
    %v1785 = vunpack.c.h.b16 %v687
    %v1786 = vunpack.c.l.b16 %v688
    %v1787 = vunpack.c.h.b16 %v688
    %v1788 = vunpack.c.l.b16 %v689
    %v1789 = vunpack.c.h.b16 %v689
    %v1790 = vunpack.c.l.b16 %v690
    %v1791 = vunpack.c.h.b16 %v690
    %v1792 = vunpack.c.l.b16 %v691
    %v1793 = vunpack.c.h.b16 %v691
    %v1794 = vunpack.c.l.b16 %v692
    %v1795 = vunpack.c.h.b16 %v692
    %v1796 = vunpack.c.l.b16 %v693
    %v1797 = vunpack.c.h.b16 %v693
    %v1798 = vunpack.c.l.b16 %v694
    %v1799 = vunpack.c.h.b16 %v694
    %v1800 = vunpack.c.l.b16 %v695
    %v1801 = vunpack.c.h.b16 %v695
    %v1802 = vunpack.c.l.b16 %v696
    %v1803 = vunpack.c.h.b16 %v696
    %v1804 = vunpack.c.l.b16 %v697
    %v1805 = vunpack.c.h.b16 %v697
    %v1806 = vunpack.c.l.b16 %v698
    %v1807 = vunpack.c.h.b16 %v698
    %v1808 = vunpack.c.l.b16 %v699
    %v1809 = vunpack.c.h.b16 %v699
    %v1810 = vunpack.c.l.b16 %v700
    %v1811 = vunpack.c.h.b16 %v700
    %v1812 = vunpack.c.l.b16 %v701
    %v1813 = vunpack.c.h.b16 %v701
    %v1814 = vunpack.c.l.b16 %v702
    %v1815 = vunpack.c.h.b16 %v702
    %v1816 = vunpack.c.l.b16 %v703
    %v1817 = vunpack.c.h.b16 %v703
    %v1818 = vunpack.c.l.b16 %v704
    %v1819 = vunpack.c.h.b16 %v704
    %v1820 = vunpack.c.l.b16 %v705
    %v1821 = vunpack.c.h.b16 %v705
    %v1822 = vunpack.c.l.b16 %v706
    %v1823 = vunpack.c.h.b16 %v706
    %v1824 = vunpack.c.l.b16 %v707
    %v1825 = vunpack.c.h.b16 %v707
    %v1826 = vunpack.c.l.b16 %v708
    %v1827 = vunpack.c.h.b16 %v708
    %v1828 = vunpack.c.l.b16 %v709
    %v1829 = vunpack.c.h.b16 %v709
    %v1830 = vunpack.c.l.b16 %v710
    %v1831 = vunpack.c.h.b16 %v710
    %v1832 = vunpack.c.l.b16 %v711
    %v1833 = vunpack.c.h.b16 %v711
    %v1834 = vunpack.c.l.b16 %v712
    %v1835 = vunpack.c.h.b16 %v712
    %v1836 = vunpack.c.l.b16 %v713
    %v1837 = vunpack.c.h.b16 %v713
    %v1838 = vunpack.c.l.b16 %v714
    %v1839 = vunpack.c.h.b16 %v714
    %v1840 = vunpack.c.l.b16 %v715
    %v1841 = vunpack.c.h.b16 %v715
    %v1842 = vunpack.c.l.b16 %v716
    %v1843 = vunpack.c.h.b16 %v716
    %v1844 = vunpack.c.l.b16 %v717
    %v1845 = vunpack.c.h.b16 %v717
    %v1846 = vunpack.c.l.b16 %v718
    %v1847 = vunpack.c.h.b16 %v718
    %v1848 = vunpack.c.l.b16 %v719
    %v1849 = vunpack.c.h.b16 %v719
    %v1850 = vunpack.c.l.b16 %v720
    %v1851 = vunpack.c.h.b16 %v720
    %v1852 = vunpack.c.l.b16 %v721
    %v1853 = vunpack.c.h.b16 %v721
    %v1854 = vunpack.c.l.b16 %v722
    %v1855 = vunpack.c.h.b16 %v722
    %v1856 = vunpack.c.l.b16 %v723
    %v1857 = vunpack.c.h.b16 %v723
    %v1858 = vunpack.c.l.b16 %v724
    %v1859 = vunpack.c.h.b16 %v724
    %v1860 = vunpack.c.l.b16 %v725
    %v1861 = vunpack.c.h.b16 %v725
    %v1862 = vunpack.c.l.b16 %v726
    %v1863 = vunpack.c.h.b16 %v726
    %v1864 = vunpack.c.l.b16 %v727
    %v1865 = vunpack.c.h.b16 %v727
    %v1866 = vunpack.c.l.b16 %v728
    %v1867 = vunpack.c.h.b16 %v728
    %v1868 = vunpack.c.l.b16 %v729
    %v1869 = vunpack.c.h.b16 %v729
    %v1870 = vunpack.c.l.b16 %v730
    %v1871 = vunpack.c.h.b16 %v730
    %v1872 = vunpack.c.l.b16 %v731
    %v1873 = vunpack.c.h.b16 %v731
    %v1874 = vunpack.c.l.b16 %v732
    %v1875 = vunpack.c.h.b16 %v732
    %v1876 = vunpack.c.l.b16 %v733
    %v1877 = vunpack.c.h.b16 %v733
    %v1878 = vunpack.c.l.b16 %v734
    %v1879 = vunpack.c.h.b16 %v734
    %v1880 = vunpack.c.l.b16 %v735
    %v1881 = vunpack.c.h.b16 %v735
    %v1882 = vunpack.c.l.b16 %v736
    %v1883 = vunpack.c.h.b16 %v736
    %v1884 = vunpack.c.l.b16 %v737
    %v1885 = vunpack.c.h.b16 %v737
    %v1886 = vunpack.c.l.b16 %v738
    %v1887 = vunpack.c.h.b16 %v738
    %v1888 = vunpack.c.l.b16 %v739
    %v1889 = vunpack.c.h.b16 %v739
    %v1890 = vunpack.c.l.b16 %v740
    %v1891 = vunpack.c.h.b16 %v740
    %v1892 = vunpack.c.l.b16 %v741
    %v1893 = vunpack.c.h.b16 %v741
    %v1894 = vunpack.c.l.b16 %v742
    %v1895 = vunpack.c.h.b16 %v742
    %v1896 = vunpack.c.l.b16 %v743
    %v1897 = vunpack.c.h.b16 %v743
    %v1898 = vunpack.c.l.b16 %v744
    %v1899 = vunpack.c.h.b16 %v744
    %v1900 = vunpack.c.l.b16 %v745
    %v1901 = vunpack.c.h.b16 %v745
    %v1902 = vunpack.c.l.b16 %v746
    %v1903 = vunpack.c.h.b16 %v746
    %v1904 = vunpack.c.l.b16 %v747
    %v1905 = vunpack.c.h.b16 %v747
    %v1906 = vunpack.c.l.b16 %v748
    %v1907 = vunpack.c.h.b16 %v748
    %v1908 = vunpack.c.l.b16 %v749
    %v1909 = vunpack.c.h.b16 %v749
    %v1910 = vunpack.c.l.b16 %v750
    %v1911 = vunpack.c.h.b16 %v750
    %v1912 = vunpack.c.l.b16 %v751
    %v1913 = vunpack.c.h.b16 %v751
    %v1914 = vunpack.c.l.b16 %v752
    %v1915 = vunpack.c.h.b16 %v752
    %v1916 = vunpack.c.l.b16 %v753
    %v1917 = vunpack.c.h.b16 %v753
    %v1918 = vunpack.c.l.b16 %v754
    %v1919 = vunpack.c.h.b16 %v754
    %v1920 = vunpack.c.l.b16 %v755
    %v1921 = vunpack.c.h.b16 %v755
    %v1922 = vunpack.c.l.b16 %v756
    %v1923 = vunpack.c.h.b16 %v756
    %v1924 = vunpack.c.l.b16 %v757
    %v1925 = vunpack.c.h.b16 %v757
    %v1926 = vunpack.c.l.b16 %v758
    %v1927 = vunpack.c.h.b16 %v758
    %v1928 = vunpack.c.l.b16 %v759
    %v1929 = vunpack.c.h.b16 %v759
    %v1930 = vunpack.c.l.b16 %v760
    %v1931 = vunpack.c.h.b16 %v760
    %v1932 = vunpack.c.l.b16 %v761
    %v1933 = vunpack.c.h.b16 %v761
    %v1934 = vunpack.c.l.b16 %v762
    %v1935 = vunpack.c.h.b16 %v762
    %v1936 = vunpack.c.l.b16 %v763
    %v1937 = vunpack.c.h.b16 %v763
    %v1938 = vunpack.c.l.b16 %v764
    %v1939 = vunpack.c.h.b16 %v764
    %v1940 = vunpack.c.l.b16 %v765
    %v1941 = vunpack.c.h.b16 %v765
    %v1942 = vunpack.c.l.b16 %v766
    %v1943 = vunpack.c.h.b16 %v766
    %v1944 = vunpack.c.l.b16 %v767
    %v1945 = vunpack.c.h.b16 %v767
    %v1946 = vunpack.c.l.b16 %v768
    %v1947 = vunpack.c.h.b16 %v768
    %v1948 = vunpack.c.l.b16 %v769
    %v1949 = vunpack.c.h.b16 %v769
    %v1950 = vunpack.c.l.b16 %v770
    %v1951 = vunpack.c.h.b16 %v770
    %v1952 = vunpack.c.l.b16 %v771
    %v1953 = vunpack.c.h.b16 %v771
    %v1954 = vunpack.c.l.b16 %v772
    %v1955 = vunpack.c.h.b16 %v772
    %v1956 = vunpack.c.l.b16 %v773
    %v1957 = vunpack.c.h.b16 %v773
    %v1958 = vunpack.c.l.b16 %v774
    %v1959 = vunpack.c.h.b16 %v774
    %v1960 = vunpack.c.l.b16 %v775
    %v1961 = vunpack.c.h.b16 %v775
    %v1962 = vunpack.c.l.b16 %v776
    %v1963 = vunpack.c.h.b16 %v776
    %v1964 = vunpack.c.l.b16 %v777
    %v1965 = vunpack.c.h.b16 %v777
    %v1966 = vunpack.c.l.b16 %v778
    %v1967 = vunpack.c.h.b16 %v778
    %v1968 = vunpack.c.l.b16 %v779
    %v1969 = vunpack.c.h.b16 %v779
    %v1970 = vunpack.c.l.b16 %v780
    %v1971 = vunpack.c.h.b16 %v780
    %v1972 = vunpack.c.l.b16 %v781
    %v1973 = vunpack.c.h.b16 %v781
    %v1974 = vunpack.c.l.b16 %v782
    %v1975 = vunpack.c.h.b16 %v782
    %v1976 = vunpack.c.l.b16 %v783
    %v1977 = vunpack.c.h.b16 %v783
    %v1978 = vunpack.c.l.b16 %v784
    %v1979 = vunpack.c.h.b16 %v784
    %v1980 = vunpack.c.l.b16 %v785
    %v1981 = vunpack.c.h.b16 %v785
    %v1982 = vunpack.c.l.b16 %v786
    %v1983 = vunpack.c.h.b16 %v786
    %v1984 = vunpack.c.l.b16 %v787
    %v1985 = vunpack.c.h.b16 %v787
    %v1986 = vunpack.c.l.b16 %v788
    %v1987 = vunpack.c.h.b16 %v788
    %v1988 = vunpack.c.l.b16 %v789
    %v1989 = vunpack.c.h.b16 %v789
    %v1990 = vunpack.c.l.b16 %v790
    %v1991 = vunpack.c.h.b16 %v790
    %v1992 = vunpack.c.l.b16 %v791
    %v1993 = vunpack.c.h.b16 %v791
    %v1994 = vunpack.c.l.b16 %v792
    %v1995 = vunpack.c.h.b16 %v792
    %v1996 = vunpack.c.l.b16 %v793
    %v1997 = vunpack.c.h.b16 %v793
    %v1998 = vunpack.c.l.b16 %v794
    %v1999 = vunpack.c.h.b16 %v794
    %v2000 = vunpack.c.l.b16 %v795
    %v2001 = vunpack.c.h.b16 %v795
    %v2002 = vunpack.c.l.b16 %v796
    %v2003 = vunpack.c.h.b16 %v796
    %v2004 = vunpack.c.l.b16 %v797
    %v2005 = vunpack.c.h.b16 %v797
    %v2006 = vunpack.c.l.b16 %v798
    %v2007 = vunpack.c.h.b16 %v798
    %v2008 = vunpack.c.l.b16 %v799
    %v2009 = vunpack.c.h.b16 %v799
    %v2010 = vunpack.c.l.b16 %v800
    %v2011 = vunpack.c.h.b16 %v800
    %v2012 = vunpack.c.l.b16 %v801
    %v2013 = vunpack.c.h.b16 %v801
    %v2014 = vunpack.c.l.b16 %v802
    %v2015 = vunpack.c.h.b16 %v802
    %v2016 = vunpack.c.l.b16 %v803
    %v2017 = vunpack.c.h.b16 %v803
    %v2018 = vunpack.c.l.b16 %v804
    %v2019 = vunpack.c.h.b16 %v804
    %v2020 = vunpack.c.l.b16 %v805
    %v2021 = vunpack.c.h.b16 %v805
    %v2022 = vunpack.c.l.b16 %v806
    %v2023 = vunpack.c.h.b16 %v806
    %v2024 = vunpack.c.l.b16 %v807
    %v2025 = vunpack.c.h.b16 %v807
    %v2026 = vunpack.c.l.b16 %v808
    %v2027 = vunpack.c.h.b16 %v808
    %v2028 = vunpack.c.l.b16 %v809
    %v2029 = vunpack.c.h.b16 %v809
    %v2030 = vunpack.c.l.b16 %v810
    %v2031 = vunpack.c.h.b16 %v810
    %v2032 = vunpack.c.l.b16 %v811
    %v2033 = vunpack.c.h.b16 %v811
    %v2034 = vunpack.c.l.b16 %v812
    %v2035 = vunpack.c.h.b16 %v812
    %v2036 = vunpack.c.l.b16 %v813
    %v2037 = vunpack.c.h.b16 %v813
    %v2038 = vunpack.c.l.b16 %v814
    %v2039 = vunpack.c.h.b16 %v814
    %v2040 = vunpack.c.l.b16 %v815
    %v2041 = vunpack.c.h.b16 %v815
    %v2042 = vunpack.c.l.b16 %v816
    %v2043 = vunpack.c.h.b16 %v816
    %v2044 = vunpack.c.l.b16 %v817
    %v2045 = vunpack.c.h.b16 %v817
    %v2046 = vunpack.c.l.b16 %v818
    %v2047 = vunpack.c.h.b16 %v818
    %v2048 = vunpack.c.l.b16 %v819
    %v2049 = vunpack.c.h.b16 %v819
    %v2050 = vunpack.c.l.b16 %v820
    %v2051 = vunpack.c.h.b16 %v820
    %v2052 = vunpack.c.l.b16 %v821
    %v2053 = vunpack.c.h.b16 %v821
    %v2054 = vunpack.c.l.b16 %v822
    %v2055 = vunpack.c.h.b16 %v822
    %v2056 = vunpack.c.l.b16 %v823
    %v2057 = vunpack.c.h.b16 %v823
    %v2058 = vunpack.c.l.b16 %v824
    %v2059 = vunpack.c.h.b16 %v824
    %v2060 = vunpack.c.l.b16 %v825
    %v2061 = vunpack.c.h.b16 %v825
    %v2062 = vunpack.c.l.b16 %v826
    %v2063 = vunpack.c.h.b16 %v826
    %v2064 = vunpack.c.l.b16 %v827
    %v2065 = vunpack.c.h.b16 %v827
    %v2066 = vunpack.c.l.b16 %v828
    %v2067 = vunpack.c.h.b16 %v828
    %v2068 = vunpack.c.l.b16 %v829
    %v2069 = vunpack.c.h.b16 %v829
    %v2070 = vunpack.c.l.b16 %v830
    %v2071 = vunpack.c.h.b16 %v830
    %v2072 = vunpack.c.l.b16 %v831
    %v2073 = vunpack.c.h.b16 %v831
    %v2074 = vunpack.c.l.b16 %v832
    %v2075 = vunpack.c.h.b16 %v832
    %v2076 = vunpack.c.l.b16 %v833
    %v2077 = vunpack.c.h.b16 %v833
    %v2078 = vunpack.c.l.b16 %v834
    %v2079 = vunpack.c.h.b16 %v834
    %v2080 = vunpack.c.l.b16 %v835
    %v2081 = vunpack.c.h.b16 %v835
    %v2082 = vunpack.c.l.b16 %v836
    %v2083 = vunpack.c.h.b16 %v836
    %v2084 = vunpack.c.l.b16 %v837
    %v2085 = vunpack.c.h.b16 %v837
    %v2086 = vunpack.c.l.b16 %v838
    %v2087 = vunpack.c.h.b16 %v838
    %v2088 = vunpack.c.l.b16 %v839
    %v2089 = vunpack.c.h.b16 %v839
    %v2090 = vunpack.c.l.b16 %v840
    %v2091 = vunpack.c.h.b16 %v840
    %v2092 = vunpack.c.l.b16 %v841
    %v2093 = vunpack.c.h.b16 %v841
    %v2094 = vunpack.c.l.b16 %v842
    %v2095 = vunpack.c.h.b16 %v842
    %v2096 = vunpack.c.l.b16 %v843
    %v2097 = vunpack.c.h.b16 %v843
    %v2098 = vunpack.c.l.b16 %v844
    %v2099 = vunpack.c.h.b16 %v844
    %v2100 = vunpack.c.l.b16 %v845
    %v2101 = vunpack.c.h.b16 %v845
    %v2102 = vunpack.c.l.b16 %v846
    %v2103 = vunpack.c.h.b16 %v846
    %v2104 = vunpack.c.l.b16 %v847
    %v2105 = vunpack.c.h.b16 %v847
    %v2106 = vunpack.c.l.b16 %v848
    %v2107 = vunpack.c.h.b16 %v848
    %v2108 = vunpack.c.l.b16 %v849
    %v2109 = vunpack.c.h.b16 %v849
    %v2110 = vunpack.c.l.b16 %v850
    %v2111 = vunpack.c.h.b16 %v850
    %v2112 = vunpack.c.l.b16 %v851
    %v2113 = vunpack.c.h.b16 %v851
    %v2114 = vunpack.c.l.b16 %v852
    %v2115 = vunpack.c.h.b16 %v852
    %v2116 = vunpack.c.l.b16 %v853
    %v2117 = vunpack.c.h.b16 %v853
    %v2118 = vunpack.c.l.b16 %v854
    %v2119 = vunpack.c.h.b16 %v854
    %v2120 = vunpack.c.l.b16 %v855
    %v2121 = vunpack.c.h.b16 %v855
    %v2122 = vunpack.c.l.b16 %v856
    %v2123 = vunpack.c.h.b16 %v856
    %v2124 = vunpack.c.l.b16 %v857
    %v2125 = vunpack.c.h.b16 %v857
    %v2126 = vunpack.c.l.b16 %v858
    %v2127 = vunpack.c.h.b16 %v858
    %v2128 = vunpack.c.l.b16 %v859
    %v2129 = vunpack.c.h.b16 %v859
    %v2130 = vunpack.c.l.b16 %v860
    %v2131 = vunpack.c.h.b16 %v860
    %v2132 = vunpack.c.l.b16 %v861
    %v2133 = vunpack.c.h.b16 %v861
    %v2134 = vunpack.c.l.b16 %v862
    %v2135 = vunpack.c.h.b16 %v862
    %v2136 = vunpack.c.l.b16 %v863
    %v2137 = vunpack.c.h.b16 %v863
    %v2138 = vunpack.c.l.b16 %v864
    %v2139 = vunpack.c.h.b16 %v864
    %v2140 = vunpack.c.l.b16 %v865
    %v2141 = vunpack.c.h.b16 %v865
    %v2142 = vunpack.c.l.b16 %v866
    %v2143 = vunpack.c.h.b16 %v866
    %v2144 = vunpack.c.l.b16 %v867
    %v2145 = vunpack.c.h.b16 %v867
    %v2146 = vunpack.c.l.b16 %v868
    %v2147 = vunpack.c.h.b16 %v868
    %v2148 = vunpack.c.l.b16 %v869
    %v2149 = vunpack.c.h.b16 %v869
    %v2150 = vunpack.c.l.b16 %v870
    %v2151 = vunpack.c.h.b16 %v870
    %v2152 = vunpack.c.l.b16 %v871
    %v2153 = vunpack.c.h.b16 %v871
    %v2154 = vunpack.c.l.b16 %v872
    %v2155 = vunpack.c.h.b16 %v872
    %v2156 = vunpack.c.l.b16 %v873
    %v2157 = vunpack.c.h.b16 %v873
    %v2158 = vunpack.c.l.b16 %v874
    %v2159 = vunpack.c.h.b16 %v874
    %v2160 = vunpack.c.l.b16 %v875
    %v2161 = vunpack.c.h.b16 %v875
    %v2162 = vunpack.c.l.b16 %v876
    %v2163 = vunpack.c.h.b16 %v876
    %v2164 = vunpack.c.l.b16 %v877
    %v2165 = vunpack.c.h.b16 %v877
    %v2166 = vunpack.c.l.b16 %v878
    %v2167 = vunpack.c.h.b16 %v878
    %v2168 = vunpack.c.l.b16 %v879
    %v2169 = vunpack.c.h.b16 %v879
    %v2170 = vunpack.c.l.b16 %v880
    %v2171 = vunpack.c.h.b16 %v880
    %v2172 = vunpack.c.l.b16 %v881
    %v2173 = vunpack.c.h.b16 %v881
    %v2174 = vunpack.c.l.b16 %v882
    %v2175 = vunpack.c.h.b16 %v882
    %v2176 = vunpack.c.l.b16 %v883
    %v2177 = vunpack.c.h.b16 %v883
    %v2178 = vunpack.c.l.b16 %v884
    %v2179 = vunpack.c.h.b16 %v884
    %v2180 = vunpack.c.l.b16 %v885
    %v2181 = vunpack.c.h.b16 %v885
    %v2182 = vunpack.c.l.b16 %v886
    %v2183 = vunpack.c.h.b16 %v886
    %v2184 = vunpack.c.l.b16 %v887
    %v2185 = vunpack.c.h.b16 %v887
    %v2186 = vunpack.c.l.b16 %v888
    %v2187 = vunpack.c.h.b16 %v888
    %v2188 = vunpack.c.l.b16 %v889
    %v2189 = vunpack.c.h.b16 %v889
    %v2190 = vunpack.c.l.b16 %v890
    %v2191 = vunpack.c.h.b16 %v890
    %v2192 = vunpack.c.l.b16 %v891
    %v2193 = vunpack.c.h.b16 %v891
    %v2194 = vunpack.c.l.b16 %v892
    %v2195 = vunpack.c.h.b16 %v892
    %v2196 = vunpack.c.l.b16 %v893
    %v2197 = vunpack.c.h.b16 %v893
    %v2198 = vunpack.c.l.b16 %v894
    %v2199 = vunpack.c.h.b16 %v894
    %v2200 = vunpack.c.l.b16 %v895
    %v2201 = vunpack.c.h.b16 %v895
    %v2202 = vunpack.c.l.b16 %v896
    %v2203 = vunpack.c.h.b16 %v896
    %v2204 = vunpack.c.l.b16 %v897
    %v2205 = vunpack.c.h.b16 %v897
    %v2206 = vunpack.c.l.b16 %v898
    %v2207 = vunpack.c.h.b16 %v898
    %v2208 = vunpack.c.l.b16 %v899
    %v2209 = vunpack.c.h.b16 %v899
    %v2210 = vunpack.c.l.b16 %v900
    %v2211 = vunpack.c.h.b16 %v900
    %v2212 = vunpack.c.l.b16 %v901
    %v2213 = vunpack.c.h.b16 %v901
    %v2214 = vunpack.c.l.b16 %v902
    %v2215 = vunpack.c.h.b16 %v902
    %v2216 = vunpack.c.l.b16 %v903
    %v2217 = vunpack.c.h.b16 %v903
    %v2218 = vunpack.c.l.b16 %v904
    %v2219 = vunpack.c.h.b16 %v904
    %v2220 = vunpack.c.l.b16 %v905
    %v2221 = vunpack.c.h.b16 %v905
    %v2222 = vunpack.c.l.b16 %v906
    %v2223 = vunpack.c.h.b16 %v906
    %v2224 = vunpack.c.l.b16 %v907
    %v2225 = vunpack.c.h.b16 %v907
    %v2226 = vunpack.c.l.b16 %v908
    %v2227 = vunpack.c.h.b16 %v908
    %v2228 = vunpack.c.l.b16 %v909
    %v2229 = vunpack.c.h.b16 %v909
    %v2230 = vunpack.c.l.b16 %v910
    %v2231 = vunpack.c.h.b16 %v910
    %v2232 = vunpack.c.l.b16 %v911
    %v2233 = vunpack.c.h.b16 %v911
    %v2234 = vunpack.c.l.b16 %v912
    %v2235 = vunpack.c.h.b16 %v912
    %v2236 = vunpack.c.l.b16 %v913
    %v2237 = vunpack.c.h.b16 %v913
    %v2238 = vunpack.c.l.b16 %v914
    %v2239 = vunpack.c.h.b16 %v914
    %v2240 = vunpack.c.l.b16 %v915
    %v2241 = vunpack.c.h.b16 %v915
    %v2242 = vunpack.c.l.b16 %v916
    %v2243 = vunpack.c.h.b16 %v916
    %v2244 = vunpack.c.l.b16 %v917
    %v2245 = vunpack.c.h.b16 %v917
    %v2246 = vunpack.c.l.b16 %v918
    %v2247 = vunpack.c.h.b16 %v918
    %v2248 = vunpack.c.l.b16 %v919
    %v2249 = vunpack.c.h.b16 %v919
    %v2250 = vunpack.c.l.b16 %v920
    %v2251 = vunpack.c.h.b16 %v920
    %v2252 = vunpack.c.l.b16 %v921
    %v2253 = vunpack.c.h.b16 %v921
    %v2254 = vunpack.c.l.b16 %v922
    %v2255 = vunpack.c.h.b16 %v922
    %v2256 = vunpack.c.l.b16 %v923
    %v2257 = vunpack.c.h.b16 %v923
    %v2258 = vunpack.c.l.b16 %v924
    %v2259 = vunpack.c.h.b16 %v924
    %v2260 = vunpack.c.l.b16 %v925
    %v2261 = vunpack.c.h.b16 %v925
    %v2262 = vunpack.c.l.b16 %v926
    %v2263 = vunpack.c.h.b16 %v926
    %v2264 = vunpack.c.l.b16 %v927
    %v2265 = vunpack.c.h.b16 %v927
    %v2266 = vunpack.c.l.b16 %v928
    %v2267 = vunpack.c.h.b16 %v928
    %v2268 = vunpack.c.l.b16 %v929
    %v2269 = vunpack.c.h.b16 %v929
    %v2270 = vunpack.c.l.b16 %v930
    %v2271 = vunpack.c.h.b16 %v930
    %v2272 = vunpack.c.l.b16 %v931
    %v2273 = vunpack.c.h.b16 %v931
    %v2274 = vunpack.c.l.b16 %v932
    %v2275 = vunpack.c.h.b16 %v932
    %v2276 = vunpack.c.l.b16 %v933
    %v2277 = vunpack.c.h.b16 %v933
    %v2278 = vunpack.c.l.b16 %v934
    %v2279 = vunpack.c.h.b16 %v934
    %v2280 = vunpack.c.l.b16 %v935
    %v2281 = vunpack.c.h.b16 %v935
    %v2282 = vunpack.c.l.b16 %v936
    %v2283 = vunpack.c.h.b16 %v936
    %v2284 = vunpack.c.l.b16 %v937
    %v2285 = vunpack.c.h.b16 %v937
    %v2286 = vunpack.c.l.b16 %v938
    %v2287 = vunpack.c.h.b16 %v938
    %v2288 = vunpack.c.l.b16 %v939
    %v2289 = vunpack.c.h.b16 %v939
    %v2290 = vunpack.c.l.b16 %v940
    %v2291 = vunpack.c.h.b16 %v940
    %v2292 = vunpack.c.l.b16 %v941
    %v2293 = vunpack.c.h.b16 %v941
    %v2294 = vunpack.c.l.b16 %v942
    %v2295 = vunpack.c.h.b16 %v942
    %v2296 = vunpack.c.l.b16 %v943
    %v2297 = vunpack.c.h.b16 %v943
    %v2298 = vunpack.c.l.b16 %v944
    %v2299 = vunpack.c.h.b16 %v944
    %v2300 = vunpack.c.l.b16 %v945
    %v2301 = vunpack.c.h.b16 %v945
    %v2302 = vunpack.c.l.b16 %v946
    %v2303 = vunpack.c.h.b16 %v946
    %v2304 = vunpack.c.l.b16 %v947
    %v2305 = vunpack.c.h.b16 %v947
    %v2306 = vunpack.c.l.b16 %v948
    %v2307 = vunpack.c.h.b16 %v948
    %v2308 = vunpack.c.l.b16 %v949
    %v2309 = vunpack.c.h.b16 %v949
    %v2310 = vunpack.c.l.b16 %v950
    %v2311 = vunpack.c.h.b16 %v950
    %v2312 = vunpack.c.l.b16 %v951
    %v2313 = vunpack.c.h.b16 %v951
    %v2314 = vunpack.c.l.b16 %v952
    %v2315 = vunpack.c.h.b16 %v952
    %v2316 = vunpack.c.l.b16 %v953
    %v2317 = vunpack.c.h.b16 %v953
    %v2318 = vunpack.c.l.b16 %v954
    %v2319 = vunpack.c.h.b16 %v954
    %v2320 = vunpack.c.l.b16 %v955
    %v2321 = vunpack.c.h.b16 %v955
    %v2322 = vunpack.c.l.b16 %v956
    %v2323 = vunpack.c.h.b16 %v956
    %v2324 = vunpack.c.l.b16 %v957
    %v2325 = vunpack.c.h.b16 %v957
    %v2326 = vunpack.c.l.b16 %v958
    %v2327 = vunpack.c.h.b16 %v958
    %v2328 = vunpack.c.l.b16 %v959
    %v2329 = vunpack.c.h.b16 %v959
    %v2330 = vunpack.c.l.b16 %v960
    %v2331 = vunpack.c.h.b16 %v960
    %v2332 = vunpack.c.l.b16 %v961
    %v2333 = vunpack.c.h.b16 %v961
    %v2334 = vpack.c.b16 %v1438, %v1434
    %v2335 = vpack.c.b16 %v1439, %v1435
    %v2336 = vpack.c.b16 %v1440, %v1436
    %v2337 = vpack.c.b16 %v1441, %v1437
    %v2338 = vpack.c.b16 %v1446, %v1442
    %v2339 = vpack.c.b16 %v1447, %v1443
    %v2340 = vpack.c.b16 %v1448, %v1444
    %v2341 = vpack.c.b16 %v1449, %v1445
    %v2342 = vpack.c.b16 %v1454, %v1450
    %v2343 = vpack.c.b16 %v1455, %v1451
    %v2344 = vpack.c.b16 %v1456, %v1452
    %v2345 = vpack.c.b16 %v1457, %v1453
    %v2346 = vpack.c.b16 %v1462, %v1458
    %v2347 = vpack.c.b16 %v1463, %v1459
    %v2348 = vpack.c.b16 %v1464, %v1460
    %v2349 = vpack.c.b16 %v1465, %v1461
    %v2350 = vpack.c.b16 %v1470, %v1466
    %v2351 = vpack.c.b16 %v1471, %v1467
    %v2352 = vpack.c.b16 %v1472, %v1468
    %v2353 = vpack.c.b16 %v1473, %v1469
    %v2354 = vpack.c.b16 %v1478, %v1474
    %v2355 = vpack.c.b16 %v1479, %v1475
    %v2356 = vpack.c.b16 %v1480, %v1476
    %v2357 = vpack.c.b16 %v1481, %v1477
    %v2358 = vpack.c.b16 %v1486, %v1482
    %v2359 = vpack.c.b16 %v1487, %v1483
    %v2360 = vpack.c.b16 %v1488, %v1484
    %v2361 = vpack.c.b16 %v1489, %v1485
    %v2362 = vpack.c.b16 %v1494, %v1490
    %v2363 = vpack.c.b16 %v1495, %v1491
    %v2364 = vpack.c.b16 %v1496, %v1492
    %v2365 = vpack.c.b16 %v1497, %v1493
    %v2366 = vpack.c.b16 %v1502, %v1498
    %v2367 = vpack.c.b16 %v1503, %v1499
    %v2368 = vpack.c.b16 %v1504, %v1500
    %v2369 = vpack.c.b16 %v1505, %v1501
    %v2370 = vpack.c.b16 %v1510, %v1506
    %v2371 = vpack.c.b16 %v1511, %v1507
    %v2372 = vpack.c.b16 %v1512, %v1508
    %v2373 = vpack.c.b16 %v1513, %v1509
    %v2374 = vpack.c.b16 %v1518, %v1514
    %v2375 = vpack.c.b16 %v1519, %v1515
    %v2376 = vpack.c.b16 %v1520, %v1516
    %v2377 = vpack.c.b16 %v1521, %v1517
    %v2378 = vpack.c.b16 %v1526, %v1522
    %v2379 = vpack.c.b16 %v1527, %v1523
    %v2380 = vpack.c.b16 %v1528, %v1524
    %v2381 = vpack.c.b16 %v1529, %v1525
    %v2382 = vpack.c.b16 %v1534, %v1530
    %v2383 = vpack.c.b16 %v1535, %v1531
    %v2384 = vpack.c.b16 %v1536, %v1532
    %v2385 = vpack.c.b16 %v1537, %v1533
    %v2386 = vpack.c.b16 %v1542, %v1538
    %v2387 = vpack.c.b16 %v1543, %v1539
    %v2388 = vpack.c.b16 %v1544, %v1540
    %v2389 = vpack.c.b16 %v1545, %v1541
    %v2390 = vpack.c.b16 %v1550, %v1546
    %v2391 = vpack.c.b16 %v1551, %v1547
    %v2392 = vpack.c.b16 %v1552, %v1548
    %v2393 = vpack.c.b16 %v1553, %v1549
    %v2394 = vpack.c.b16 %v1558, %v1554
    %v2395 = vpack.c.b16 %v1559, %v1555
    %v2396 = vpack.c.b16 %v1560, %v1556
    %v2397 = vpack.c.b16 %v1561, %v1557
    %v2398 = vpack.c.b16 %v1566, %v1562
    %v2399 = vpack.c.b16 %v1567, %v1563
    %v2400 = vpack.c.b16 %v1568, %v1564
    %v2401 = vpack.c.b16 %v1569, %v1565
    %v2402 = vpack.c.b16 %v1574, %v1570
    %v2403 = vpack.c.b16 %v1575, %v1571
    %v2404 = vpack.c.b16 %v1576, %v1572
    %v2405 = vpack.c.b16 %v1577, %v1573
    %v2406 = vpack.c.b16 %v1582, %v1578
    %v2407 = vpack.c.b16 %v1583, %v1579
    %v2408 = vpack.c.b16 %v1584, %v1580
    %v2409 = vpack.c.b16 %v1585, %v1581
    %v2410 = vpack.c.b16 %v1590, %v1586
    %v2411 = vpack.c.b16 %v1591, %v1587
    %v2412 = vpack.c.b16 %v1592, %v1588
    %v2413 = vpack.c.b16 %v1593, %v1589
    %v2414 = vpack.c.b16 %v1598, %v1594
    %v2415 = vpack.c.b16 %v1599, %v1595
    %v2416 = vpack.c.b16 %v1600, %v1596
    %v2417 = vpack.c.b16 %v1601, %v1597
    %v2418 = vpack.c.b16 %v1606, %v1602
    %v2419 = vpack.c.b16 %v1607, %v1603
    %v2420 = vpack.c.b16 %v1608, %v1604
    %v2421 = vpack.c.b16 %v1609, %v1605
    %v2422 = vpack.c.b16 %v1614, %v1610
    %v2423 = vpack.c.b16 %v1615, %v1611
    %v2424 = vpack.c.b16 %v1616, %v1612
    %v2425 = vpack.c.b16 %v1617, %v1613
    %v2426 = vpack.c.b16 %v1622, %v1618
    %v2427 = vpack.c.b16 %v1623, %v1619
    %v2428 = vpack.c.b16 %v1624, %v1620
    %v2429 = vpack.c.b16 %v1625, %v1621
    %v2430 = vpack.c.b16 %v1630, %v1626
    %v2431 = vpack.c.b16 %v1631, %v1627
    %v2432 = vpack.c.b16 %v1632, %v1628
    %v2433 = vpack.c.b16 %v1633, %v1629
    %v2434 = vpack.c.b16 %v1638, %v1634
    %v2435 = vpack.c.b16 %v1639, %v1635
    %v2436 = vpack.c.b16 %v1640, %v1636
    %v2437 = vpack.c.b16 %v1641, %v1637
    %v2438 = vpack.c.b16 %v1646, %v1642
    %v2439 = vpack.c.b16 %v1647, %v1643
    %v2440 = vpack.c.b16 %v1648, %v1644
    %v2441 = vpack.c.b16 %v1649, %v1645
    %v2442 = vpack.c.b16 %v1654, %v1650
    %v2443 = vpack.c.b16 %v1655, %v1651
    %v2444 = vpack.c.b16 %v1656, %v1652
    %v2445 = vpack.c.b16 %v1657, %v1653
    %v2446 = vpack.c.b16 %v1662, %v1658
    %v2447 = vpack.c.b16 %v1663, %v1659
    %v2448 = vpack.c.b16 %v1664, %v1660
    %v2449 = vpack.c.b16 %v1665, %v1661
    %v2450 = vpack.c.b16 %v1670, %v1666
    %v2451 = vpack.c.b16 %v1671, %v1667
    %v2452 = vpack.c.b16 %v1672, %v1668
    %v2453 = vpack.c.b16 %v1673, %v1669
    %v2454 = vpack.c.b16 %v1678, %v1674
    %v2455 = vpack.c.b16 %v1679, %v1675
    %v2456 = vpack.c.b16 %v1680, %v1676
    %v2457 = vpack.c.b16 %v1681, %v1677
    %v2458 = vpack.c.b16 %v1686, %v1682
    %v2459 = vpack.c.b16 %v1687, %v1683
    %v2460 = vpack.c.b16 %v1688, %v1684
    %v2461 = vpack.c.b16 %v1689, %v1685
    %v2462 = vpack.c.b16 %v1694, %v1690
    %v2463 = vpack.c.b16 %v1695, %v1691
    %v2464 = vpack.c.b16 %v1696, %v1692
    %v2465 = vpack.c.b16 %v1697, %v1693
    %v2466 = vpack.c.b16 %v1702, %v1698
    %v2467 = vpack.c.b16 %v1703, %v1699
    %v2468 = vpack.c.b16 %v1704, %v1700
    %v2469 = vpack.c.b16 %v1705, %v1701
    %v2470 = vpack.c.b16 %v1710, %v1706
    %v2471 = vpack.c.b16 %v1711, %v1707
    %v2472 = vpack.c.b16 %v1712, %v1708
    %v2473 = vpack.c.b16 %v1713, %v1709
    %v2474 = vpack.c.b16 %v1718, %v1714
    %v2475 = vpack.c.b16 %v1719, %v1715
    %v2476 = vpack.c.b16 %v1720, %v1716
    %v2477 = vpack.c.b16 %v1721, %v1717
    %v2478 = vpack.c.b16 %v1726, %v1722
    %v2479 = vpack.c.b16 %v1727, %v1723
    %v2480 = vpack.c.b16 %v1728, %v1724
    %v2481 = vpack.c.b16 %v1729, %v1725
    %v2482 = vpack.c.b16 %v1734, %v1730
    %v2483 = vpack.c.b16 %v1735, %v1731
    %v2484 = vpack.c.b16 %v1736, %v1732
    %v2485 = vpack.c.b16 %v1737, %v1733
    %v2486 = vpack.c.b16 %v1742, %v1738
    %v2487 = vpack.c.b16 %v1743, %v1739
    %v2488 = vpack.c.b16 %v1744, %v1740
    %v2489 = vpack.c.b16 %v1745, %v1741
    %v2490 = vpack.c.b16 %v1750, %v1746
    %v2491 = vpack.c.b16 %v1751, %v1747
    %v2492 = vpack.c.b16 %v1752, %v1748
    %v2493 = vpack.c.b16 %v1753, %v1749
    %v2494 = vpack.c.b16 %v1758, %v1754
    %v2495 = vpack.c.b16 %v1759, %v1755
    %v2496 = vpack.c.b16 %v1760, %v1756
    %v2497 = vpack.c.b16 %v1761, %v1757
    %v2498 = vpack.c.b16 %v1766, %v1762
    %v2499 = vpack.c.b16 %v1767, %v1763
    %v2500 = vpack.c.b16 %v1768, %v1764
    %v2501 = vpack.c.b16 %v1769, %v1765
    %v2502 = vpack.c.b16 %v1774, %v1770
    %v2503 = vpack.c.b16 %v1775, %v1771
    %v2504 = vpack.c.b16 %v1776, %v1772
    %v2505 = vpack.c.b16 %v1777, %v1773
    %v2506 = vpack.c.b16 %v1782, %v1778
    %v2507 = vpack.c.b16 %v1783, %v1779
    %v2508 = vpack.c.b16 %v1784, %v1780
    %v2509 = vpack.c.b16 %v1785, %v1781
    %v2510 = vpack.c.b16 %v1790, %v1786
    %v2511 = vpack.c.b16 %v1791, %v1787
    %v2512 = vpack.c.b16 %v1792, %v1788
    %v2513 = vpack.c.b16 %v1793, %v1789
    %v2514 = vpack.c.b16 %v1798, %v1794
    %v2515 = vpack.c.b16 %v1799, %v1795
    %v2516 = vpack.c.b16 %v1800, %v1796
    %v2517 = vpack.c.b16 %v1801, %v1797
    %v2518 = vpack.c.b16 %v1806, %v1802
    %v2519 = vpack.c.b16 %v1807, %v1803
    %v2520 = vpack.c.b16 %v1808, %v1804
    %v2521 = vpack.c.b16 %v1809, %v1805
    %v2522 = vpack.c.b16 %v1814, %v1810
    %v2523 = vpack.c.b16 %v1815, %v1811
    %v2524 = vpack.c.b16 %v1816, %v1812
    %v2525 = vpack.c.b16 %v1817, %v1813
    %v2526 = vpack.c.b16 %v1822, %v1818
    %v2527 = vpack.c.b16 %v1823, %v1819
    %v2528 = vpack.c.b16 %v1824, %v1820
    %v2529 = vpack.c.b16 %v1825, %v1821
    %v2530 = vpack.c.b16 %v1830, %v1826
    %v2531 = vpack.c.b16 %v1831, %v1827
    %v2532 = vpack.c.b16 %v1832, %v1828
    %v2533 = vpack.c.b16 %v1833, %v1829
    %v2534 = vpack.c.b16 %v1838, %v1834
    %v2535 = vpack.c.b16 %v1839, %v1835
    %v2536 = vpack.c.b16 %v1840, %v1836
    %v2537 = vpack.c.b16 %v1841, %v1837
    %v2538 = vpack.c.b16 %v1846, %v1842
    %v2539 = vpack.c.b16 %v1847, %v1843
    %v2540 = vpack.c.b16 %v1848, %v1844
    %v2541 = vpack.c.b16 %v1849, %v1845
    %v2542 = vpack.c.b16 %v1854, %v1850
    %v2543 = vpack.c.b16 %v1855, %v1851
    %v2544 = vpack.c.b16 %v1856, %v1852
    %v2545 = vpack.c.b16 %v1857, %v1853
    %v2546 = vpack.c.b16 %v1862, %v1858
    %v2547 = vpack.c.b16 %v1863, %v1859
    %v2548 = vpack.c.b16 %v1864, %v1860
    %v2549 = vpack.c.b16 %v1865, %v1861
    %v2550 = vpack.c.b16 %v1870, %v1866
    %v2551 = vpack.c.b16 %v1871, %v1867
    %v2552 = vpack.c.b16 %v1872, %v1868
    %v2553 = vpack.c.b16 %v1873, %v1869
    %v2554 = vpack.c.b16 %v1878, %v1874
    %v2555 = vpack.c.b16 %v1879, %v1875
    %v2556 = vpack.c.b16 %v1880, %v1876
    %v2557 = vpack.c.b16 %v1881, %v1877
    %v2558 = vpack.c.b16 %v1886, %v1882
    %v2559 = vpack.c.b16 %v1887, %v1883
    %v2560 = vpack.c.b16 %v1888, %v1884
    %v2561 = vpack.c.b16 %v1889, %v1885
    %v2562 = vpack.c.b16 %v1894, %v1890
    %v2563 = vpack.c.b16 %v1895, %v1891
    %v2564 = vpack.c.b16 %v1896, %v1892
    %v2565 = vpack.c.b16 %v1897, %v1893
    %v2566 = vpack.c.b16 %v1902, %v1898
    %v2567 = vpack.c.b16 %v1903, %v1899
    %v2568 = vpack.c.b16 %v1904, %v1900
    %v2569 = vpack.c.b16 %v1905, %v1901
    %v2570 = vpack.c.b16 %v1910, %v1906
    %v2571 = vpack.c.b16 %v1911, %v1907
    %v2572 = vpack.c.b16 %v1912, %v1908
    %v2573 = vpack.c.b16 %v1913, %v1909
    %v2574 = vpack.c.b16 %v1918, %v1914
    %v2575 = vpack.c.b16 %v1919, %v1915
    %v2576 = vpack.c.b16 %v1920, %v1916
    %v2577 = vpack.c.b16 %v1921, %v1917
    %v2578 = vpack.c.b16 %v1926, %v1922
    %v2579 = vpack.c.b16 %v1927, %v1923
    %v2580 = vpack.c.b16 %v1928, %v1924
    %v2581 = vpack.c.b16 %v1929, %v1925
    %v2582 = vpack.c.b16 %v1934, %v1930
    %v2583 = vpack.c.b16 %v1935, %v1931
    %v2584 = vpack.c.b16 %v1936, %v1932
    %v2585 = vpack.c.b16 %v1937, %v1933
    %v2586 = vpack.c.b16 %v1942, %v1938
    %v2587 = vpack.c.b16 %v1943, %v1939
    %v2588 = vpack.c.b16 %v1944, %v1940
    %v2589 = vpack.c.b16 %v1945, %v1941
    %v2590 = vpack.c.b16 %v1950, %v1946
    %v2591 = vpack.c.b16 %v1951, %v1947
    %v2592 = vpack.c.b16 %v1952, %v1948
    %v2593 = vpack.c.b16 %v1953, %v1949
    %v2594 = vpack.c.b16 %v1958, %v1954
    %v2595 = vpack.c.b16 %v1959, %v1955
    %v2596 = vpack.c.b16 %v1960, %v1956
    %v2597 = vpack.c.b16 %v1961, %v1957
    %v2598 = vpack.c.b16 %v1966, %v1962
    %v2599 = vpack.c.b16 %v1967, %v1963
    %v2600 = vpack.c.b16 %v1968, %v1964
    %v2601 = vpack.c.b16 %v1969, %v1965
    %v2602 = vpack.c.b16 %v1974, %v1970
    %v2603 = vpack.c.b16 %v1975, %v1971
    %v2604 = vpack.c.b16 %v1976, %v1972
    %v2605 = vpack.c.b16 %v1977, %v1973
    %v2606 = vpack.c.b16 %v1982, %v1978
    %v2607 = vpack.c.b16 %v1983, %v1979
    %v2608 = vpack.c.b16 %v1984, %v1980
    %v2609 = vpack.c.b16 %v1985, %v1981
    %v2610 = vpack.c.b16 %v1990, %v1986
    %v2611 = vpack.c.b16 %v1991, %v1987
    %v2612 = vpack.c.b16 %v1992, %v1988
    %v2613 = vpack.c.b16 %v1993, %v1989
    %v2614 = vpack.c.b16 %v1998, %v1994
    %v2615 = vpack.c.b16 %v1999, %v1995
    %v2616 = vpack.c.b16 %v2000, %v1996
    %v2617 = vpack.c.b16 %v2001, %v1997
    %v2618 = vpack.c.b16 %v2006, %v2002
    %v2619 = vpack.c.b16 %v2007, %v2003
    %v2620 = vpack.c.b16 %v2008, %v2004
    %v2621 = vpack.c.b16 %v2009, %v2005
    %v2622 = vpack.c.b16 %v2014, %v2010
    %v2623 = vpack.c.b16 %v2015, %v2011
    %v2624 = vpack.c.b16 %v2016, %v2012
    %v2625 = vpack.c.b16 %v2017, %v2013
    %v2626 = vpack.c.b16 %v2022, %v2018
    %v2627 = vpack.c.b16 %v2023, %v2019
    %v2628 = vpack.c.b16 %v2024, %v2020
    %v2629 = vpack.c.b16 %v2025, %v2021
    %v2630 = vpack.c.b16 %v2030, %v2026
    %v2631 = vpack.c.b16 %v2031, %v2027
    %v2632 = vpack.c.b16 %v2032, %v2028
    %v2633 = vpack.c.b16 %v2033, %v2029
    %v2634 = vpack.c.b16 %v2038, %v2034
    %v2635 = vpack.c.b16 %v2039, %v2035
    %v2636 = vpack.c.b16 %v2040, %v2036
    %v2637 = vpack.c.b16 %v2041, %v2037
    %v2638 = vpack.c.b16 %v2046, %v2042
    %v2639 = vpack.c.b16 %v2047, %v2043
    %v2640 = vpack.c.b16 %v2048, %v2044
    %v2641 = vpack.c.b16 %v2049, %v2045
    %v2642 = vpack.c.b16 %v2054, %v2050
    %v2643 = vpack.c.b16 %v2055, %v2051
    %v2644 = vpack.c.b16 %v2056, %v2052
    %v2645 = vpack.c.b16 %v2057, %v2053
    %v2646 = vpack.c.b16 %v2062, %v2058
    %v2647 = vpack.c.b16 %v2063, %v2059
    %v2648 = vpack.c.b16 %v2064, %v2060
    %v2649 = vpack.c.b16 %v2065, %v2061
    %v2650 = vpack.c.b16 %v2070, %v2066
    %v2651 = vpack.c.b16 %v2071, %v2067
    %v2652 = vpack.c.b16 %v2072, %v2068
    %v2653 = vpack.c.b16 %v2073, %v2069
    %v2654 = vpack.c.b16 %v2078, %v2074
    %v2655 = vpack.c.b16 %v2079, %v2075
    %v2656 = vpack.c.b16 %v2080, %v2076
    %v2657 = vpack.c.b16 %v2081, %v2077
    %v2658 = vpack.c.b16 %v2086, %v2082
    %v2659 = vpack.c.b16 %v2087, %v2083
    %v2660 = vpack.c.b16 %v2088, %v2084
    %v2661 = vpack.c.b16 %v2089, %v2085
    %v2662 = vpack.c.b16 %v2094, %v2090
    %v2663 = vpack.c.b16 %v2095, %v2091
    %v2664 = vpack.c.b16 %v2096, %v2092
    %v2665 = vpack.c.b16 %v2097, %v2093
    %v2666 = vpack.c.b16 %v2102, %v2098
    %v2667 = vpack.c.b16 %v2103, %v2099
    %v2668 = vpack.c.b16 %v2104, %v2100
    %v2669 = vpack.c.b16 %v2105, %v2101
    %v2670 = vpack.c.b16 %v2110, %v2106
    %v2671 = vpack.c.b16 %v2111, %v2107
    %v2672 = vpack.c.b16 %v2112, %v2108
    %v2673 = vpack.c.b16 %v2113, %v2109
    %v2674 = vpack.c.b16 %v2118, %v2114
    %v2675 = vpack.c.b16 %v2119, %v2115
    %v2676 = vpack.c.b16 %v2120, %v2116
    %v2677 = vpack.c.b16 %v2121, %v2117
    %v2678 = vpack.c.b16 %v2126, %v2122
    %v2679 = vpack.c.b16 %v2127, %v2123
    %v2680 = vpack.c.b16 %v2128, %v2124
    %v2681 = vpack.c.b16 %v2129, %v2125
    %v2682 = vpack.c.b16 %v2134, %v2130
    %v2683 = vpack.c.b16 %v2135, %v2131
    %v2684 = vpack.c.b16 %v2136, %v2132
    %v2685 = vpack.c.b16 %v2137, %v2133
    %v2686 = vpack.c.b16 %v2142, %v2138
    %v2687 = vpack.c.b16 %v2143, %v2139
    %v2688 = vpack.c.b16 %v2144, %v2140
    %v2689 = vpack.c.b16 %v2145, %v2141
    %v2690 = vpack.c.b16 %v2150, %v2146
    %v2691 = vpack.c.b16 %v2151, %v2147
    %v2692 = vpack.c.b16 %v2152, %v2148
    %v2693 = vpack.c.b16 %v2153, %v2149
    %v2694 = vpack.c.b16 %v2158, %v2154
    %v2695 = vpack.c.b16 %v2159, %v2155
    %v2696 = vpack.c.b16 %v2160, %v2156
    %v2697 = vpack.c.b16 %v2161, %v2157
    %v2698 = vpack.c.b16 %v2166, %v2162
    %v2699 = vpack.c.b16 %v2167, %v2163
    %v2700 = vpack.c.b16 %v2168, %v2164
    %v2701 = vpack.c.b16 %v2169, %v2165
    %v2702 = vpack.c.b16 %v2174, %v2170
    %v2703 = vpack.c.b16 %v2175, %v2171
    %v2704 = vpack.c.b16 %v2176, %v2172
    %v2705 = vpack.c.b16 %v2177, %v2173
    %v2706 = vpack.c.b16 %v2182, %v2178
    %v2707 = vpack.c.b16 %v2183, %v2179
    %v2708 = vpack.c.b16 %v2184, %v2180
    %v2709 = vpack.c.b16 %v2185, %v2181
    %v2710 = vpack.c.b16 %v2190, %v2186
    %v2711 = vpack.c.b16 %v2191, %v2187
    %v2712 = vpack.c.b16 %v2192, %v2188
    %v2713 = vpack.c.b16 %v2193, %v2189
    %v2714 = vpack.c.b16 %v2198, %v2194
    %v2715 = vpack.c.b16 %v2199, %v2195
    %v2716 = vpack.c.b16 %v2200, %v2196
    %v2717 = vpack.c.b16 %v2201, %v2197
    %v2718 = vpack.c.b16 %v2206, %v2202
    %v2719 = vpack.c.b16 %v2207, %v2203
    %v2720 = vpack.c.b16 %v2208, %v2204
    %v2721 = vpack.c.b16 %v2209, %v2205
    %v2722 = vpack.c.b16 %v2214, %v2210
    %v2723 = vpack.c.b16 %v2215, %v2211
    %v2724 = vpack.c.b16 %v2216, %v2212
    %v2725 = vpack.c.b16 %v2217, %v2213
    %v2726 = vpack.c.b16 %v2222, %v2218
    %v2727 = vpack.c.b16 %v2223, %v2219
    %v2728 = vpack.c.b16 %v2224, %v2220
    %v2729 = vpack.c.b16 %v2225, %v2221
    %v2730 = vpack.c.b16 %v2230, %v2226
    %v2731 = vpack.c.b16 %v2231, %v2227
    %v2732 = vpack.c.b16 %v2232, %v2228
    %v2733 = vpack.c.b16 %v2233, %v2229
    %v2734 = vpack.c.b16 %v2238, %v2234
    %v2735 = vpack.c.b16 %v2239, %v2235
    %v2736 = vpack.c.b16 %v2240, %v2236
    %v2737 = vpack.c.b16 %v2241, %v2237
    %v2738 = vpack.c.b16 %v2246, %v2242
    %v2739 = vpack.c.b16 %v2247, %v2243
    %v2740 = vpack.c.b16 %v2248, %v2244
    %v2741 = vpack.c.b16 %v2249, %v2245
    %v2742 = vpack.c.b16 %v2254, %v2250
    %v2743 = vpack.c.b16 %v2255, %v2251
    %v2744 = vpack.c.b16 %v2256, %v2252
    %v2745 = vpack.c.b16 %v2257, %v2253
    %v2746 = vpack.c.b16 %v2262, %v2258
    %v2747 = vpack.c.b16 %v2263, %v2259
    %v2748 = vpack.c.b16 %v2264, %v2260
    %v2749 = vpack.c.b16 %v2265, %v2261
    %v2750 = vpack.c.b16 %v2270, %v2266
    %v2751 = vpack.c.b16 %v2271, %v2267
    %v2752 = vpack.c.b16 %v2272, %v2268
    %v2753 = vpack.c.b16 %v2273, %v2269
    %v2754 = vpack.c.b16 %v2278, %v2274
    %v2755 = vpack.c.b16 %v2279, %v2275
    %v2756 = vpack.c.b16 %v2280, %v2276
    %v2757 = vpack.c.b16 %v2281, %v2277
    %v2758 = vpack.c.b16 %v2286, %v2282
    %v2759 = vpack.c.b16 %v2287, %v2283
    %v2760 = vpack.c.b16 %v2288, %v2284
    %v2761 = vpack.c.b16 %v2289, %v2285
    %v2762 = vpack.c.b16 %v2294, %v2290
    %v2763 = vpack.c.b16 %v2295, %v2291
    %v2764 = vpack.c.b16 %v2296, %v2292
    %v2765 = vpack.c.b16 %v2297, %v2293
    %v2766 = vpack.c.b16 %v2302, %v2298
    %v2767 = vpack.c.b16 %v2303, %v2299
    %v2768 = vpack.c.b16 %v2304, %v2300
    %v2769 = vpack.c.b16 %v2305, %v2301
    %v2770 = vpack.c.b16 %v2310, %v2306
    %v2771 = vpack.c.b16 %v2311, %v2307
    %v2772 = vpack.c.b16 %v2312, %v2308
    %v2773 = vpack.c.b16 %v2313, %v2309
    %v2774 = vpack.c.b16 %v2318, %v2314
    %v2775 = vpack.c.b16 %v2319, %v2315
    %v2776 = vpack.c.b16 %v2320, %v2316
    %v2777 = vpack.c.b16 %v2321, %v2317
    %v2778 = vpack.c.b16 %v2326, %v2322
    %v2779 = vpack.c.b16 %v2327, %v2323
    %v2780 = vpack.c.b16 %v2328, %v2324
    %v2781 = vpack.c.b16 %v2329, %v2325
    %v2782 = vpack.c.b16 %v2330, %v2330
    %v2783 = vpack.c.b16 %v2331, %v2331
    %v2784 = vpack.c.b16 %v2332, %v2332
    %v2785 = vpack.c.b16 %v2333, %v2333
    %vm3234 = vcmask 64512
    %v3236 = vsel %vm3234, %v511, 0
    %vm3238 = vcmask 1043456
    %v3240 = vsel %vm3238, %v2782, 0
    %v3243 = vsel %vm3238, %v2783, 0
    %v3246 = vsel %vm3238, %v2784, 0
    %v3249 = vsel %vm3238, %v2785, 0
    %3251 = vmatprep.subr.bf16.mxu0 %v2335
    %3252 = vmatpush1.bf16.msra.mxu0 %v2334
    %3253 = vmatprep.subr.bf16.mxu0 %v2339
    %3254 = vmatpush1.bf16.msra.mxu0 %v2338
    %3255 = vmatprep.subr.bf16.mxu0 %v2343
    %3256 = vmatpush1.bf16.msra.mxu0 %v2342
    %3257 = vmatprep.subr.bf16.mxu0 %v2347
    %3258 = vmatpush1.bf16.msra.mxu0 %v2346
    %3259 = vmatprep.subr.bf16.mxu0 %v2351
    %3260 = vmatpush1.bf16.msra.mxu0 %v2350
    %3261 = vmatprep.subr.bf16.mxu0 %v2355
    %3262 = vmatpush1.bf16.msra.mxu0 %v2354
    %3263 = vmatprep.subr.bf16.mxu0 %v2359
    %3264 = vmatpush1.bf16.msra.mxu0 %v2358
    %3265 = vmatprep.subr.bf16.mxu0 %v2363
    %3266 = vmatpush1.bf16.msra.mxu0 %v2362
    %3267 = vmatprep.subr.bf16.mxu0 %v2367
    %3268 = vmatpush1.bf16.msra.mxu0 %v2366
    %3269 = vmatprep.subr.bf16.mxu0 %v2371
    %3270 = vmatpush1.bf16.msra.mxu0 %v2370
    %3271 = vmatprep.subr.bf16.mxu0 %v2375
    %3272 = vmatpush1.bf16.msra.mxu0 %v2374
    %3273 = vmatprep.subr.bf16.mxu0 %v2379
    %3274 = vmatpush1.bf16.msra.mxu0 %v2378
    %3275 = vmatprep.subr.bf16.mxu0 %v2383
    %3276 = vmatpush1.bf16.msra.mxu0 %v2382
    %3277 = vmatprep.subr.bf16.mxu0 %v2387
    %3278 = vmatpush1.bf16.msra.mxu0 %v2386
    %3279 = vmatprep.subr.bf16.mxu0 %v2391
    %3280 = vmatpush1.bf16.msra.mxu0 %v2390
    %3281 = vmatprep.subr.bf16.mxu0 %v2395
    %3282 = vmatpush1.bf16.msra.mxu0 %v2394
    %3283 = vmatprep.mubr.bf16.mxu0 %v498
    %3284 = vmatmul.mubr.bf16.gmra.mrb[0].mxu0 %v497
    %v3285 = vpop.f32.mrb[0].mxu0
    %v3286 = vadd.f32 %v967, %v3285
    %v3287 = vpop.f32.mrb[0].mxu0
    %v3288 = vadd.f32 %v971, %v3287
    %v3289 = vpop.f32.mrb[0].mxu0
    %v3290 = vadd.f32 %v967, %v3289
    %v3291 = vpop.f32.mrb[0].mxu0
    %v3292 = vadd.f32 %v971, %v3291
    %3293 = vdwg.mxu0
    %3294 = vmatprep.subr.bf16.mxu0 %v2399
    %3295 = vmatpush1.bf16.msra.mxu0 %v2398
    %3296 = vmatprep.subr.bf16.mxu0 %v2403
    %3297 = vmatpush1.bf16.msra.mxu0 %v2402
    %3298 = vmatprep.subr.bf16.mxu0 %v2407
    %3299 = vmatpush1.bf16.msra.mxu0 %v2406
    %3300 = vmatprep.subr.bf16.mxu0 %v2411
    %3301 = vmatpush1.bf16.msra.mxu0 %v2410
    %3302 = vmatprep.subr.bf16.mxu0 %v2415
    %3303 = vmatpush1.bf16.msra.mxu0 %v2414
    %3304 = vmatprep.subr.bf16.mxu0 %v2419
    %3305 = vmatpush1.bf16.msra.mxu0 %v2418
    %3306 = vmatprep.subr.bf16.mxu0 %v2423
    %3307 = vmatpush1.bf16.msra.mxu0 %v2422
    %3308 = vmatprep.subr.bf16.mxu0 %v2427
    %3309 = vmatpush1.bf16.msra.mxu0 %v2426
    %3310 = vmatprep.subr.bf16.mxu0 %v2431
    %3311 = vmatpush1.bf16.msra.mxu0 %v2430
    %3312 = vmatprep.subr.bf16.mxu0 %v2435
    %3313 = vmatpush1.bf16.msra.mxu0 %v2434
    %3314 = vmatprep.subr.bf16.mxu0 %v2439
    %3315 = vmatpush1.bf16.msra.mxu0 %v2438
    %3316 = vmatprep.subr.bf16.mxu0 %v2443
    %3317 = vmatpush1.bf16.msra.mxu0 %v2442
    %3318 = vmatprep.subr.bf16.mxu0 %v2447
    %3319 = vmatpush1.bf16.msra.mxu0 %v2446
    %3320 = vmatprep.subr.bf16.mxu0 %v2451
    %3321 = vmatpush1.bf16.msra.mxu0 %v2450
    %3322 = vmatprep.subr.bf16.mxu0 %v2455
    %3323 = vmatpush1.bf16.msra.mxu0 %v2454
    %3324 = vmatprep.subr.bf16.mxu0 %v2459
    %3325 = vmatpush1.bf16.msra.mxu0 %v2458
    %3326 = vmatprep.mubr.bf16.mxu0 %v500
    %3327 = vmatmul.mubr.bf16.gmra.mrb[0].mxu0 %v499
    %v3328 = vpop.f32.mrb[0].mxu0
    %v3329 = vadd.f32 %v3286, %v3328
    %v3330 = vpop.f32.mrb[0].mxu0
    %v3331 = vadd.f32 %v3288, %v3330
    %v3332 = vpop.f32.mrb[0].mxu0
    %v3333 = vadd.f32 %v3290, %v3332
    %v3334 = vpop.f32.mrb[0].mxu0
    %v3335 = vadd.f32 %v3292, %v3334
    %3336 = vdwg.mxu0
    %3337 = vmatprep.subr.bf16.mxu0 %v2463
    %3338 = vmatpush1.bf16.msra.mxu0 %v2462
    %3339 = vmatprep.subr.bf16.mxu0 %v2467
    %3340 = vmatpush1.bf16.msra.mxu0 %v2466
    %3341 = vmatprep.subr.bf16.mxu0 %v2471
    %3342 = vmatpush1.bf16.msra.mxu0 %v2470
    %3343 = vmatprep.subr.bf16.mxu0 %v2475
    %3344 = vmatpush1.bf16.msra.mxu0 %v2474
    %3345 = vmatprep.subr.bf16.mxu0 %v2479
    %3346 = vmatpush1.bf16.msra.mxu0 %v2478
    %3347 = vmatprep.subr.bf16.mxu0 %v2483
    %3348 = vmatpush1.bf16.msra.mxu0 %v2482
    %3349 = vmatprep.subr.bf16.mxu0 %v2487
    %3350 = vmatpush1.bf16.msra.mxu0 %v2486
    %3351 = vmatprep.subr.bf16.mxu0 %v2491
    %3352 = vmatpush1.bf16.msra.mxu0 %v2490
    %3353 = vmatprep.subr.bf16.mxu0 %v2495
    %3354 = vmatpush1.bf16.msra.mxu0 %v2494
    %3355 = vmatprep.subr.bf16.mxu0 %v2499
    %3356 = vmatpush1.bf16.msra.mxu0 %v2498
    %3357 = vmatprep.subr.bf16.mxu0 %v2503
    %3358 = vmatpush1.bf16.msra.mxu0 %v2502
    %3359 = vmatprep.subr.bf16.mxu0 %v2507
    %3360 = vmatpush1.bf16.msra.mxu0 %v2506
    %3361 = vmatprep.subr.bf16.mxu0 %v2511
    %3362 = vmatpush1.bf16.msra.mxu0 %v2510
    %3363 = vmatprep.subr.bf16.mxu0 %v2515
    %3364 = vmatpush1.bf16.msra.mxu0 %v2514
    %3365 = vmatprep.subr.bf16.mxu0 %v2519
    %3366 = vmatpush1.bf16.msra.mxu0 %v2518
    %3367 = vmatprep.subr.bf16.mxu0 %v2523
    %3368 = vmatpush1.bf16.msra.mxu0 %v2522
    %3369 = vmatprep.mubr.bf16.mxu0 %v502
    %3370 = vmatmul.mubr.bf16.gmra.mrb[0].mxu0 %v501
    %v3371 = vpop.f32.mrb[0].mxu0
    %v3372 = vadd.f32 %v3329, %v3371
    %v3373 = vpop.f32.mrb[0].mxu0
    %v3374 = vadd.f32 %v3331, %v3373
    %v3375 = vpop.f32.mrb[0].mxu0
    %v3376 = vadd.f32 %v3333, %v3375
    %v3377 = vpop.f32.mrb[0].mxu0
    %v3378 = vadd.f32 %v3335, %v3377
    %3379 = vdwg.mxu0
    %3380 = vmatprep.subr.bf16.mxu0 %v2527
    %3381 = vmatpush1.bf16.msra.mxu0 %v2526
    %3382 = vmatprep.subr.bf16.mxu0 %v2531
    %3383 = vmatpush1.bf16.msra.mxu0 %v2530
    %3384 = vmatprep.subr.bf16.mxu0 %v2535
    %3385 = vmatpush1.bf16.msra.mxu0 %v2534
    %3386 = vmatprep.subr.bf16.mxu0 %v2539
    %3387 = vmatpush1.bf16.msra.mxu0 %v2538
    %3388 = vmatprep.subr.bf16.mxu0 %v2543
    %3389 = vmatpush1.bf16.msra.mxu0 %v2542
    %3390 = vmatprep.subr.bf16.mxu0 %v2547
    %3391 = vmatpush1.bf16.msra.mxu0 %v2546
    %3392 = vmatprep.subr.bf16.mxu0 %v2551
    %3393 = vmatpush1.bf16.msra.mxu0 %v2550
    %3394 = vmatprep.subr.bf16.mxu0 %v2555
    %3395 = vmatpush1.bf16.msra.mxu0 %v2554
    %3396 = vmatprep.subr.bf16.mxu0 %v2559
    %3397 = vmatpush1.bf16.msra.mxu0 %v2558
    %3398 = vmatprep.subr.bf16.mxu0 %v2563
    %3399 = vmatpush1.bf16.msra.mxu0 %v2562
    %3400 = vmatprep.subr.bf16.mxu0 %v2567
    %3401 = vmatpush1.bf16.msra.mxu0 %v2566
    %3402 = vmatprep.subr.bf16.mxu0 %v2571
    %3403 = vmatpush1.bf16.msra.mxu0 %v2570
    %3404 = vmatprep.subr.bf16.mxu0 %v2575
    %3405 = vmatpush1.bf16.msra.mxu0 %v2574
    %3406 = vmatprep.subr.bf16.mxu0 %v2579
    %3407 = vmatpush1.bf16.msra.mxu0 %v2578
    %3408 = vmatprep.subr.bf16.mxu0 %v2583
    %3409 = vmatpush1.bf16.msra.mxu0 %v2582
    %3410 = vmatprep.subr.bf16.mxu0 %v2587
    %3411 = vmatpush1.bf16.msra.mxu0 %v2586
    %3412 = vmatprep.mubr.bf16.mxu0 %v504
    %3413 = vmatmul.mubr.bf16.gmra.mrb[0].mxu0 %v503
    %v3414 = vpop.f32.mrb[0].mxu0
    %v3415 = vadd.f32 %v3372, %v3414
    %v3416 = vpop.f32.mrb[0].mxu0
    %v3417 = vadd.f32 %v3374, %v3416
    %v3418 = vpop.f32.mrb[0].mxu0
    %v3419 = vadd.f32 %v3376, %v3418
    %v3420 = vpop.f32.mrb[0].mxu0
    %v3421 = vadd.f32 %v3378, %v3420
    %3422 = vdwg.mxu0
    %3423 = vmatprep.subr.bf16.mxu0 %v2591
    %3424 = vmatpush1.bf16.msra.mxu0 %v2590
    %3425 = vmatprep.subr.bf16.mxu0 %v2595
    %3426 = vmatpush1.bf16.msra.mxu0 %v2594
    %3427 = vmatprep.subr.bf16.mxu0 %v2599
    %3428 = vmatpush1.bf16.msra.mxu0 %v2598
    %3429 = vmatprep.subr.bf16.mxu0 %v2603
    %3430 = vmatpush1.bf16.msra.mxu0 %v2602
    %3431 = vmatprep.subr.bf16.mxu0 %v2607
    %3432 = vmatpush1.bf16.msra.mxu0 %v2606
    %3433 = vmatprep.subr.bf16.mxu0 %v2611
    %3434 = vmatpush1.bf16.msra.mxu0 %v2610
    %3435 = vmatprep.subr.bf16.mxu0 %v2615
    %3436 = vmatpush1.bf16.msra.mxu0 %v2614
    %3437 = vmatprep.subr.bf16.mxu0 %v2619
    %3438 = vmatpush1.bf16.msra.mxu0 %v2618
    %3439 = vmatprep.subr.bf16.mxu0 %v2623
    %3440 = vmatpush1.bf16.msra.mxu0 %v2622
    %3441 = vmatprep.subr.bf16.mxu0 %v2627
    %3442 = vmatpush1.bf16.msra.mxu0 %v2626
    %3443 = vmatprep.subr.bf16.mxu0 %v2631
    %3444 = vmatpush1.bf16.msra.mxu0 %v2630
    %3445 = vmatprep.subr.bf16.mxu0 %v2635
    %3446 = vmatpush1.bf16.msra.mxu0 %v2634
    %3447 = vmatprep.subr.bf16.mxu0 %v2639
    %3448 = vmatpush1.bf16.msra.mxu0 %v2638
    %3449 = vmatprep.subr.bf16.mxu0 %v2643
    %3450 = vmatpush1.bf16.msra.mxu0 %v2642
    %3451 = vmatprep.subr.bf16.mxu0 %v2647
    %3452 = vmatpush1.bf16.msra.mxu0 %v2646
    %3453 = vmatprep.subr.bf16.mxu0 %v2651
    %3454 = vmatpush1.bf16.msra.mxu0 %v2650
    %3455 = vmatprep.mubr.bf16.mxu0 %v506
    %3456 = vmatmul.mubr.bf16.gmra.mrb[0].mxu0 %v505
    %v3457 = vpop.f32.mrb[0].mxu0
    %v3458 = vadd.f32 %v3415, %v3457
    %v3459 = vpop.f32.mrb[0].mxu0
    %v3460 = vadd.f32 %v3417, %v3459
    %v3461 = vpop.f32.mrb[0].mxu0
    %v3462 = vadd.f32 %v3419, %v3461
    %v3463 = vpop.f32.mrb[0].mxu0
    %v3464 = vadd.f32 %v3421, %v3463
    %3465 = vdwg.mxu0
    %3466 = vmatprep.subr.bf16.mxu0 %v2655
    %3467 = vmatpush1.bf16.msra.mxu0 %v2654
    %3468 = vmatprep.subr.bf16.mxu0 %v2659
    %3469 = vmatpush1.bf16.msra.mxu0 %v2658
    %3470 = vmatprep.subr.bf16.mxu0 %v2663
    %3471 = vmatpush1.bf16.msra.mxu0 %v2662
    %3472 = vmatprep.subr.bf16.mxu0 %v2667
    %3473 = vmatpush1.bf16.msra.mxu0 %v2666
    %3474 = vmatprep.subr.bf16.mxu0 %v2671
    %3475 = vmatpush1.bf16.msra.mxu0 %v2670
    %3476 = vmatprep.subr.bf16.mxu0 %v2675
    %3477 = vmatpush1.bf16.msra.mxu0 %v2674
    %3478 = vmatprep.subr.bf16.mxu0 %v2679
    %3479 = vmatpush1.bf16.msra.mxu0 %v2678
    %3480 = vmatprep.subr.bf16.mxu0 %v2683
    %3481 = vmatpush1.bf16.msra.mxu0 %v2682
    %3482 = vmatprep.subr.bf16.mxu0 %v2687
    %3483 = vmatpush1.bf16.msra.mxu0 %v2686
    %3484 = vmatprep.subr.bf16.mxu0 %v2691
    %3485 = vmatpush1.bf16.msra.mxu0 %v2690
    %3486 = vmatprep.subr.bf16.mxu0 %v2695
    %3487 = vmatpush1.bf16.msra.mxu0 %v2694
    %3488 = vmatprep.subr.bf16.mxu0 %v2699
    %3489 = vmatpush1.bf16.msra.mxu0 %v2698
    %3490 = vmatprep.subr.bf16.mxu0 %v2703
    %3491 = vmatpush1.bf16.msra.mxu0 %v2702
    %3492 = vmatprep.subr.bf16.mxu0 %v2707
    %3493 = vmatpush1.bf16.msra.mxu0 %v2706
    %3494 = vmatprep.subr.bf16.mxu0 %v2711
    %3495 = vmatpush1.bf16.msra.mxu0 %v2710
    %3496 = vmatprep.subr.bf16.mxu0 %v2715
    %3497 = vmatpush1.bf16.msra.mxu0 %v2714
    %3498 = vmatprep.mubr.bf16.mxu0 %v508
    %3499 = vmatmul.mubr.bf16.gmra.mrb[0].mxu0 %v507
    %v3500 = vpop.f32.mrb[0].mxu0
    %v3501 = vadd.f32 %v3458, %v3500
    %v3502 = vpop.f32.mrb[0].mxu0
    %v3503 = vadd.f32 %v3460, %v3502
    %v3504 = vpop.f32.mrb[0].mxu0
    %v3505 = vadd.f32 %v3462, %v3504
    %v3506 = vpop.f32.mrb[0].mxu0
    %v3507 = vadd.f32 %v3464, %v3506
    %3508 = vdwg.mxu0
    %3509 = vmatprep.subr.bf16.mxu0 %v2719
    %3510 = vmatpush1.bf16.msra.mxu0 %v2718
    %3511 = vmatprep.subr.bf16.mxu0 %v2723
    %3512 = vmatpush1.bf16.msra.mxu0 %v2722
    %3513 = vmatprep.subr.bf16.mxu0 %v2727
    %3514 = vmatpush1.bf16.msra.mxu0 %v2726
    %3515 = vmatprep.subr.bf16.mxu0 %v2731
    %3516 = vmatpush1.bf16.msra.mxu0 %v2730
    %3517 = vmatprep.subr.bf16.mxu0 %v2735
    %3518 = vmatpush1.bf16.msra.mxu0 %v2734
    %3519 = vmatprep.subr.bf16.mxu0 %v2739
    %3520 = vmatpush1.bf16.msra.mxu0 %v2738
    %3521 = vmatprep.subr.bf16.mxu0 %v2743
    %3522 = vmatpush1.bf16.msra.mxu0 %v2742
    %3523 = vmatprep.subr.bf16.mxu0 %v2747
    %3524 = vmatpush1.bf16.msra.mxu0 %v2746
    %3525 = vmatprep.subr.bf16.mxu0 %v2751
    %3526 = vmatpush1.bf16.msra.mxu0 %v2750
    %3527 = vmatprep.subr.bf16.mxu0 %v2755
    %3528 = vmatpush1.bf16.msra.mxu0 %v2754
    %3529 = vmatprep.subr.bf16.mxu0 %v2759
    %3530 = vmatpush1.bf16.msra.mxu0 %v2758
    %3531 = vmatprep.subr.bf16.mxu0 %v2763
    %3532 = vmatpush1.bf16.msra.mxu0 %v2762
    %3533 = vmatprep.subr.bf16.mxu0 %v2767
    %3534 = vmatpush1.bf16.msra.mxu0 %v2766
    %3535 = vmatprep.subr.bf16.mxu0 %v2771
    %3536 = vmatpush1.bf16.msra.mxu0 %v2770
    %3537 = vmatprep.subr.bf16.mxu0 %v2775
    %3538 = vmatpush1.bf16.msra.mxu0 %v2774
    %3539 = vmatprep.subr.bf16.mxu0 %v2779
    %3540 = vmatpush1.bf16.msra.mxu0 %v2778
    %3541 = vmatprep.mubr.bf16.mxu0 %v510
    %3542 = vmatmul.mubr.bf16.gmra.mrb[0].mxu0 %v509
    %v3543 = vpop.f32.mrb[0].mxu0
    %v3544 = vadd.f32 %v3501, %v3543
    %v3545 = vpop.f32.mrb[0].mxu0
    %v3546 = vadd.f32 %v3503, %v3545
    %v3547 = vpop.f32.mrb[0].mxu0
    %v3548 = vadd.f32 %v3505, %v3547
    %v3549 = vpop.f32.mrb[0].mxu0
    %v3550 = vadd.f32 %v3507, %v3549
    %3551 = vdwg.mxu0
    %3552 = vmatprep.subr.bf16.mxu0 %v3243
    %3553 = vmatpush1.bf16.msra.mxu0 %v3240
    %3554 = vmatprep.subr.bf16.mxu0 0
    %3555 = vmatpush1.bf16.msra.mxu0 0
    %3556 = vmatprep.subr.bf16.mxu0 0
    %3557 = vmatpush1.bf16.msra.mxu0 0
    %3558 = vmatprep.subr.bf16.mxu0 0
    %3559 = vmatpush1.bf16.msra.mxu0 0
    %3560 = vmatprep.subr.bf16.mxu0 0
    %3561 = vmatpush1.bf16.msra.mxu0 0
    %3562 = vmatprep.subr.bf16.mxu0 0
    %3563 = vmatpush1.bf16.msra.mxu0 0
    %3564 = vmatprep.subr.bf16.mxu0 0
    %3565 = vmatpush1.bf16.msra.mxu0 0
    %3566 = vmatprep.subr.bf16.mxu0 0
    %3567 = vmatpush1.bf16.msra.mxu0 0
    %3568 = vmatprep.subr.bf16.mxu0 0
    %3569 = vmatpush1.bf16.msra.mxu0 0
    %3570 = vmatprep.subr.bf16.mxu0 0
    %3571 = vmatpush1.bf16.msra.mxu0 0
    %3572 = vmatprep.subr.bf16.mxu0 0
    %3573 = vmatpush1.bf16.msra.mxu0 0
    %3574 = vmatprep.subr.bf16.mxu0 0
    %3575 = vmatpush1.bf16.msra.mxu0 0
    %3576 = vmatprep.subr.bf16.mxu0 0
    %3577 = vmatpush1.bf16.msra.mxu0 0
    %3578 = vmatprep.subr.bf16.mxu0 0
    %3579 = vmatpush1.bf16.msra.mxu0 0
    %3580 = vmatprep.subr.bf16.mxu0 0
    %3581 = vmatpush1.bf16.msra.mxu0 0
    %3582 = vmatprep.subr.bf16.mxu0 0
    %3583 = vmatpush1.bf16.msra.mxu0 0
    %3584 = vmatprep.mubr.bf16.mxu0 0
    %3585 = vmatmul.mubr.bf16.gmra.mrb[0].mxu0 %v3236
    %v3586 = vpop.f32.mrb[0].mxu0
    %v3587 = vadd.f32 %v3544, %v3586
    %v3588 = vpop.f32.mrb[0].mxu0
    %v3589 = vadd.f32 %v3546, %v3588
    %v3590 = vpop.f32.mrb[0].mxu0
    %v3591 = vadd.f32 %v3548, %v3590
    %v3592 = vpop.f32.mrb[0].mxu0
    %v3593 = vadd.f32 %v3550, %v3592
    %3594 = vdwg.mxu0
    %3595 = vmatprep.subr.bf16.mxu0 %v2337
    %3596 = vmatpush1.bf16.msra.mxu0 %v2336
    %3597 = vmatprep.subr.bf16.mxu0 %v2341
    %3598 = vmatpush1.bf16.msra.mxu0 %v2340
    %3599 = vmatprep.subr.bf16.mxu0 %v2345
    %3600 = vmatpush1.bf16.msra.mxu0 %v2344
    %3601 = vmatprep.subr.bf16.mxu0 %v2349
    %3602 = vmatpush1.bf16.msra.mxu0 %v2348
    %3603 = vmatprep.subr.bf16.mxu0 %v2353
    %3604 = vmatpush1.bf16.msra.mxu0 %v2352
    %3605 = vmatprep.subr.bf16.mxu0 %v2357
    %3606 = vmatpush1.bf16.msra.mxu0 %v2356
    %3607 = vmatprep.subr.bf16.mxu0 %v2361
    %3608 = vmatpush1.bf16.msra.mxu0 %v2360
    %3609 = vmatprep.subr.bf16.mxu0 %v2365
    %3610 = vmatpush1.bf16.msra.mxu0 %v2364
    %3611 = vmatprep.subr.bf16.mxu0 %v2369
    %3612 = vmatpush1.bf16.msra.mxu0 %v2368
    %3613 = vmatprep.subr.bf16.mxu0 %v2373
    %3614 = vmatpush1.bf16.msra.mxu0 %v2372
    %3615 = vmatprep.subr.bf16.mxu0 %v2377
    %3616 = vmatpush1.bf16.msra.mxu0 %v2376
    %3617 = vmatprep.subr.bf16.mxu0 %v2381
    %3618 = vmatpush1.bf16.msra.mxu0 %v2380
    %3619 = vmatprep.subr.bf16.mxu0 %v2385
    %3620 = vmatpush1.bf16.msra.mxu0 %v2384
    %3621 = vmatprep.subr.bf16.mxu0 %v2389
    %3622 = vmatpush1.bf16.msra.mxu0 %v2388
    %3623 = vmatprep.subr.bf16.mxu0 %v2393
    %3624 = vmatpush1.bf16.msra.mxu0 %v2392
    %3625 = vmatprep.subr.bf16.mxu0 %v2397
    %3626 = vmatpush1.bf16.msra.mxu0 %v2396
    %3627 = vmatprep.mubr.bf16.mxu0 %v498
    %3628 = vmatmul.mubr.bf16.gmra.mrb[0].mxu0 %v497
    %v3629 = vpop.f32.mrb[0].mxu0
    %v3630 = vadd.f32 %v975, %v3629
    %v3631 = vpop.f32.mrb[0].mxu0
    %v3632 = vadd.f32 %v979, %v3631
    %v3633 = vpop.f32.mrb[0].mxu0
    %v3634 = vadd.f32 %v975, %v3633
    %v3635 = vpop.f32.mrb[0].mxu0
    %v3636 = vadd.f32 %v979, %v3635
    %3637 = vdwg.mxu0
    %3638 = vmatprep.subr.bf16.mxu0 %v2401
    %3639 = vmatpush1.bf16.msra.mxu0 %v2400
    %3640 = vmatprep.subr.bf16.mxu0 %v2405
    %3641 = vmatpush1.bf16.msra.mxu0 %v2404
    %3642 = vmatprep.subr.bf16.mxu0 %v2409
    %3643 = vmatpush1.bf16.msra.mxu0 %v2408
    %3644 = vmatprep.subr.bf16.mxu0 %v2413
    %3645 = vmatpush1.bf16.msra.mxu0 %v2412
    %3646 = vmatprep.subr.bf16.mxu0 %v2417
    %3647 = vmatpush1.bf16.msra.mxu0 %v2416
    %3648 = vmatprep.subr.bf16.mxu0 %v2421
    %3649 = vmatpush1.bf16.msra.mxu0 %v2420
    %3650 = vmatprep.subr.bf16.mxu0 %v2425
    %3651 = vmatpush1.bf16.msra.mxu0 %v2424
    %3652 = vmatprep.subr.bf16.mxu0 %v2429
    %3653 = vmatpush1.bf16.msra.mxu0 %v2428
    %3654 = vmatprep.subr.bf16.mxu0 %v2433
    %3655 = vmatpush1.bf16.msra.mxu0 %v2432
    %3656 = vmatprep.subr.bf16.mxu0 %v2437
    %3657 = vmatpush1.bf16.msra.mxu0 %v2436
    %3658 = vmatprep.subr.bf16.mxu0 %v2441
    %3659 = vmatpush1.bf16.msra.mxu0 %v2440
    %3660 = vmatprep.subr.bf16.mxu0 %v2445
    %3661 = vmatpush1.bf16.msra.mxu0 %v2444
    %3662 = vmatprep.subr.bf16.mxu0 %v2449
    %3663 = vmatpush1.bf16.msra.mxu0 %v2448
    %3664 = vmatprep.subr.bf16.mxu0 %v2453
    %3665 = vmatpush1.bf16.msra.mxu0 %v2452
    %3666 = vmatprep.subr.bf16.mxu0 %v2457
    %3667 = vmatpush1.bf16.msra.mxu0 %v2456
    %3668 = vmatprep.subr.bf16.mxu0 %v2461
    %3669 = vmatpush1.bf16.msra.mxu0 %v2460
    %3670 = vmatprep.mubr.bf16.mxu0 %v500
    %3671 = vmatmul.mubr.bf16.gmra.mrb[0].mxu0 %v499
    %v3672 = vpop.f32.mrb[0].mxu0
    %v3673 = vadd.f32 %v3630, %v3672
    %v3674 = vpop.f32.mrb[0].mxu0
    %v3675 = vadd.f32 %v3632, %v3674
    %v3676 = vpop.f32.mrb[0].mxu0
    %v3677 = vadd.f32 %v3634, %v3676
    %v3678 = vpop.f32.mrb[0].mxu0
    %v3679 = vadd.f32 %v3636, %v3678
    %3680 = vdwg.mxu0
    %3681 = vmatprep.subr.bf16.mxu0 %v2465
    %3682 = vmatpush1.bf16.msra.mxu0 %v2464
    %3683 = vmatprep.subr.bf16.mxu0 %v2469
    %3684 = vmatpush1.bf16.msra.mxu0 %v2468
    %3685 = vmatprep.subr.bf16.mxu0 %v2473
    %3686 = vmatpush1.bf16.msra.mxu0 %v2472
    %3687 = vmatprep.subr.bf16.mxu0 %v2477
    %3688 = vmatpush1.bf16.msra.mxu0 %v2476
    %3689 = vmatprep.subr.bf16.mxu0 %v2481
    %3690 = vmatpush1.bf16.msra.mxu0 %v2480
    %3691 = vmatprep.subr.bf16.mxu0 %v2485
    %3692 = vmatpush1.bf16.msra.mxu0 %v2484
    %3693 = vmatprep.subr.bf16.mxu0 %v2489
    %3694 = vmatpush1.bf16.msra.mxu0 %v2488
    %3695 = vmatprep.subr.bf16.mxu0 %v2493
    %3696 = vmatpush1.bf16.msra.mxu0 %v2492
    %3697 = vmatprep.subr.bf16.mxu0 %v2497
    %3698 = vmatpush1.bf16.msra.mxu0 %v2496
    %3699 = vmatprep.subr.bf16.mxu0 %v2501
    %3700 = vmatpush1.bf16.msra.mxu0 %v2500
    %3701 = vmatprep.subr.bf16.mxu0 %v2505
    %3702 = vmatpush1.bf16.msra.mxu0 %v2504
    %3703 = vmatprep.subr.bf16.mxu0 %v2509
    %3704 = vmatpush1.bf16.msra.mxu0 %v2508
    %3705 = vmatprep.subr.bf16.mxu0 %v2513
    %3706 = vmatpush1.bf16.msra.mxu0 %v2512
    %3707 = vmatprep.subr.bf16.mxu0 %v2517
    %3708 = vmatpush1.bf16.msra.mxu0 %v2516
    %3709 = vmatprep.subr.bf16.mxu0 %v2521
    %3710 = vmatpush1.bf16.msra.mxu0 %v2520
    %3711 = vmatprep.subr.bf16.mxu0 %v2525
    %3712 = vmatpush1.bf16.msra.mxu0 %v2524
    %3713 = vmatprep.mubr.bf16.mxu0 %v502
    %3714 = vmatmul.mubr.bf16.gmra.mrb[0].mxu0 %v501
    %v3715 = vpop.f32.mrb[0].mxu0
    %v3716 = vadd.f32 %v3673, %v3715
    %v3717 = vpop.f32.mrb[0].mxu0
    %v3718 = vadd.f32 %v3675, %v3717
    %v3719 = vpop.f32.mrb[0].mxu0
    %v3720 = vadd.f32 %v3677, %v3719
    %v3721 = vpop.f32.mrb[0].mxu0
    %v3722 = vadd.f32 %v3679, %v3721
    %3723 = vdwg.mxu0
    %3724 = vmatprep.subr.bf16.mxu0 %v2529
    %3725 = vmatpush1.bf16.msra.mxu0 %v2528
    %3726 = vmatprep.subr.bf16.mxu0 %v2533
    %3727 = vmatpush1.bf16.msra.mxu0 %v2532
    %3728 = vmatprep.subr.bf16.mxu0 %v2537
    %3729 = vmatpush1.bf16.msra.mxu0 %v2536
    %3730 = vmatprep.subr.bf16.mxu0 %v2541
    %3731 = vmatpush1.bf16.msra.mxu0 %v2540
    %3732 = vmatprep.subr.bf16.mxu0 %v2545
    %3733 = vmatpush1.bf16.msra.mxu0 %v2544
    %3734 = vmatprep.subr.bf16.mxu0 %v2549
    %3735 = vmatpush1.bf16.msra.mxu0 %v2548
    %3736 = vmatprep.subr.bf16.mxu0 %v2553
    %3737 = vmatpush1.bf16.msra.mxu0 %v2552
    %3738 = vmatprep.subr.bf16.mxu0 %v2557
    %3739 = vmatpush1.bf16.msra.mxu0 %v2556
    %3740 = vmatprep.subr.bf16.mxu0 %v2561
    %3741 = vmatpush1.bf16.msra.mxu0 %v2560
    %3742 = vmatprep.subr.bf16.mxu0 %v2565
    %3743 = vmatpush1.bf16.msra.mxu0 %v2564
    %3744 = vmatprep.subr.bf16.mxu0 %v2569
    %3745 = vmatpush1.bf16.msra.mxu0 %v2568
    %3746 = vmatprep.subr.bf16.mxu0 %v2573
    %3747 = vmatpush1.bf16.msra.mxu0 %v2572
    %3748 = vmatprep.subr.bf16.mxu0 %v2577
    %3749 = vmatpush1.bf16.msra.mxu0 %v2576
    %3750 = vmatprep.subr.bf16.mxu0 %v2581
    %3751 = vmatpush1.bf16.msra.mxu0 %v2580
    %3752 = vmatprep.subr.bf16.mxu0 %v2585
    %3753 = vmatpush1.bf16.msra.mxu0 %v2584
    %3754 = vmatprep.subr.bf16.mxu0 %v2589
    %3755 = vmatpush1.bf16.msra.mxu0 %v2588
    %3756 = vmatprep.mubr.bf16.mxu0 %v504
    %3757 = vmatmul.mubr.bf16.gmra.mrb[0].mxu0 %v503
    %v3758 = vpop.f32.mrb[0].mxu0
    %v3759 = vadd.f32 %v3716, %v3758
    %v3760 = vpop.f32.mrb[0].mxu0
    %v3761 = vadd.f32 %v3718, %v3760
    %v3762 = vpop.f32.mrb[0].mxu0
    %v3763 = vadd.f32 %v3720, %v3762
    %v3764 = vpop.f32.mrb[0].mxu0
    %v3765 = vadd.f32 %v3722, %v3764
    %3766 = vdwg.mxu0
    %3767 = vmatprep.subr.bf16.mxu0 %v2593
    %3768 = vmatpush1.bf16.msra.mxu0 %v2592
    %3769 = vmatprep.subr.bf16.mxu0 %v2597
    %3770 = vmatpush1.bf16.msra.mxu0 %v2596
    %3771 = vmatprep.subr.bf16.mxu0 %v2601
    %3772 = vmatpush1.bf16.msra.mxu0 %v2600
    %3773 = vmatprep.subr.bf16.mxu0 %v2605
    %3774 = vmatpush1.bf16.msra.mxu0 %v2604
    %3775 = vmatprep.subr.bf16.mxu0 %v2609
    %3776 = vmatpush1.bf16.msra.mxu0 %v2608
    %3777 = vmatprep.subr.bf16.mxu0 %v2613
    %3778 = vmatpush1.bf16.msra.mxu0 %v2612
    %3779 = vmatprep.subr.bf16.mxu0 %v2617
    %3780 = vmatpush1.bf16.msra.mxu0 %v2616
    %3781 = vmatprep.subr.bf16.mxu0 %v2621
    %3782 = vmatpush1.bf16.msra.mxu0 %v2620
    %3783 = vmatprep.subr.bf16.mxu0 %v2625
    %3784 = vmatpush1.bf16.msra.mxu0 %v2624
    %3785 = vmatprep.subr.bf16.mxu0 %v2629
    %3786 = vmatpush1.bf16.msra.mxu0 %v2628
    %3787 = vmatprep.subr.bf16.mxu0 %v2633
    %3788 = vmatpush1.bf16.msra.mxu0 %v2632
    %3789 = vmatprep.subr.bf16.mxu0 %v2637
    %3790 = vmatpush1.bf16.msra.mxu0 %v2636
    %3791 = vmatprep.subr.bf16.mxu0 %v2641
    %3792 = vmatpush1.bf16.msra.mxu0 %v2640
    %3793 = vmatprep.subr.bf16.mxu0 %v2645
    %3794 = vmatpush1.bf16.msra.mxu0 %v2644
    %3795 = vmatprep.subr.bf16.mxu0 %v2649
    %3796 = vmatpush1.bf16.msra.mxu0 %v2648
    %3797 = vmatprep.subr.bf16.mxu0 %v2653
    %3798 = vmatpush1.bf16.msra.mxu0 %v2652
    %3799 = vmatprep.mubr.bf16.mxu0 %v506
    %3800 = vmatmul.mubr.bf16.gmra.mrb[0].mxu0 %v505
    %v3801 = vpop.f32.mrb[0].mxu0
    %v3802 = vadd.f32 %v3759, %v3801
    %v3803 = vpop.f32.mrb[0].mxu0
    %v3804 = vadd.f32 %v3761, %v3803
    %v3805 = vpop.f32.mrb[0].mxu0
    %v3806 = vadd.f32 %v3763, %v3805
    %v3807 = vpop.f32.mrb[0].mxu0
    %v3808 = vadd.f32 %v3765, %v3807
    %3809 = vdwg.mxu0
    %3810 = vmatprep.subr.bf16.mxu0 %v2657
    %3811 = vmatpush1.bf16.msra.mxu0 %v2656
    %3812 = vmatprep.subr.bf16.mxu0 %v2661
    %3813 = vmatpush1.bf16.msra.mxu0 %v2660
    %3814 = vmatprep.subr.bf16.mxu0 %v2665
    %3815 = vmatpush1.bf16.msra.mxu0 %v2664
    %3816 = vmatprep.subr.bf16.mxu0 %v2669
    %3817 = vmatpush1.bf16.msra.mxu0 %v2668
    %3818 = vmatprep.subr.bf16.mxu0 %v2673
    %3819 = vmatpush1.bf16.msra.mxu0 %v2672
    %3820 = vmatprep.subr.bf16.mxu0 %v2677
    %3821 = vmatpush1.bf16.msra.mxu0 %v2676
    %3822 = vmatprep.subr.bf16.mxu0 %v2681
    %3823 = vmatpush1.bf16.msra.mxu0 %v2680
    %3824 = vmatprep.subr.bf16.mxu0 %v2685
    %3825 = vmatpush1.bf16.msra.mxu0 %v2684
    %3826 = vmatprep.subr.bf16.mxu0 %v2689
    %3827 = vmatpush1.bf16.msra.mxu0 %v2688
    %3828 = vmatprep.subr.bf16.mxu0 %v2693
    %3829 = vmatpush1.bf16.msra.mxu0 %v2692
    %3830 = vmatprep.subr.bf16.mxu0 %v2697
    %3831 = vmatpush1.bf16.msra.mxu0 %v2696
    %3832 = vmatprep.subr.bf16.mxu0 %v2701
    %3833 = vmatpush1.bf16.msra.mxu0 %v2700
    %3834 = vmatprep.subr.bf16.mxu0 %v2705
    %3835 = vmatpush1.bf16.msra.mxu0 %v2704
    %3836 = vmatprep.subr.bf16.mxu0 %v2709
    %3837 = vmatpush1.bf16.msra.mxu0 %v2708
    %3838 = vmatprep.subr.bf16.mxu0 %v2713
    %3839 = vmatpush1.bf16.msra.mxu0 %v2712
    %3840 = vmatprep.subr.bf16.mxu0 %v2717
    %3841 = vmatpush1.bf16.msra.mxu0 %v2716
    %3842 = vmatprep.mubr.bf16.mxu0 %v508
    %3843 = vmatmul.mubr.bf16.gmra.mrb[0].mxu0 %v507
    %v3844 = vpop.f32.mrb[0].mxu0
    %v3845 = vadd.f32 %v3802, %v3844
    %v3846 = vpop.f32.mrb[0].mxu0
    %v3847 = vadd.f32 %v3804, %v3846
    %v3848 = vpop.f32.mrb[0].mxu0
    %v3849 = vadd.f32 %v3806, %v3848
    %v3850 = vpop.f32.mrb[0].mxu0
    %v3851 = vadd.f32 %v3808, %v3850
    %3852 = vdwg.mxu0
    %3853 = vmatprep.subr.bf16.mxu0 %v2721
    %3854 = vmatpush1.bf16.msra.mxu0 %v2720
    %3855 = vmatprep.subr.bf16.mxu0 %v2725
    %3856 = vmatpush1.bf16.msra.mxu0 %v2724
    %3857 = vmatprep.subr.bf16.mxu0 %v2729
    %3858 = vmatpush1.bf16.msra.mxu0 %v2728
    %3859 = vmatprep.subr.bf16.mxu0 %v2733
    %3860 = vmatpush1.bf16.msra.mxu0 %v2732
    %3861 = vmatprep.subr.bf16.mxu0 %v2737
    %3862 = vmatpush1.bf16.msra.mxu0 %v2736
    %3863 = vmatprep.subr.bf16.mxu0 %v2741
    %3864 = vmatpush1.bf16.msra.mxu0 %v2740
    %3865 = vmatprep.subr.bf16.mxu0 %v2745
    %3866 = vmatpush1.bf16.msra.mxu0 %v2744
    %3867 = vmatprep.subr.bf16.mxu0 %v2749
    %3868 = vmatpush1.bf16.msra.mxu0 %v2748
    %3869 = vmatprep.subr.bf16.mxu0 %v2753
    %3870 = vmatpush1.bf16.msra.mxu0 %v2752
    %3871 = vmatprep.subr.bf16.mxu0 %v2757
    %3872 = vmatpush1.bf16.msra.mxu0 %v2756
    %3873 = vmatprep.subr.bf16.mxu0 %v2761
    %3874 = vmatpush1.bf16.msra.mxu0 %v2760
    %3875 = vmatprep.subr.bf16.mxu0 %v2765
    %3876 = vmatpush1.bf16.msra.mxu0 %v2764
    %3877 = vmatprep.subr.bf16.mxu0 %v2769
    %3878 = vmatpush1.bf16.msra.mxu0 %v2768
    %3879 = vmatprep.subr.bf16.mxu0 %v2773
    %3880 = vmatpush1.bf16.msra.mxu0 %v2772
    %3881 = vmatprep.subr.bf16.mxu0 %v2777
    %3882 = vmatpush1.bf16.msra.mxu0 %v2776
    %3883 = vmatprep.subr.bf16.mxu0 %v2781
    %3884 = vmatpush1.bf16.msra.mxu0 %v2780
    %3885 = vmatprep.mubr.bf16.mxu0 %v510
    %3886 = vmatmul.mubr.bf16.gmra.mrb[0].mxu0 %v509
    %v3887 = vpop.f32.mrb[0].mxu0
    %v3888 = vadd.f32 %v3845, %v3887
    %v3889 = vpop.f32.mrb[0].mxu0
    %v3890 = vadd.f32 %v3847, %v3889
    %v3891 = vpop.f32.mrb[0].mxu0
    %v3892 = vadd.f32 %v3849, %v3891
    %v3893 = vpop.f32.mrb[0].mxu0
    %v3894 = vadd.f32 %v3851, %v3893
    %3895 = vdwg.mxu0
    %3896 = vmatprep.subr.bf16.mxu0 %v3249
    %3897 = vmatpush1.bf16.msra.mxu0 %v3246
    %3898 = vmatprep.subr.bf16.mxu0 0
    %3899 = vmatpush1.bf16.msra.mxu0 0
    %3900 = vmatprep.subr.bf16.mxu0 0
    %3901 = vmatpush1.bf16.msra.mxu0 0
    %3902 = vmatprep.subr.bf16.mxu0 0
    %3903 = vmatpush1.bf16.msra.mxu0 0
    %3904 = vmatprep.subr.bf16.mxu0 0
    %3905 = vmatpush1.bf16.msra.mxu0 0
    %3906 = vmatprep.subr.bf16.mxu0 0
    %3907 = vmatpush1.bf16.msra.mxu0 0
    %3908 = vmatprep.subr.bf16.mxu0 0
    %3909 = vmatpush1.bf16.msra.mxu0 0
    %3910 = vmatprep.subr.bf16.mxu0 0
    %3911 = vmatpush1.bf16.msra.mxu0 0
    %3912 = vmatprep.subr.bf16.mxu0 0
    %3913 = vmatpush1.bf16.msra.mxu0 0
    %3914 = vmatprep.subr.bf16.mxu0 0
    %3915 = vmatpush1.bf16.msra.mxu0 0
    %3916 = vmatprep.subr.bf16.mxu0 0
    %3917 = vmatpush1.bf16.msra.mxu0 0
    %3918 = vmatprep.subr.bf16.mxu0 0
    %3919 = vmatpush1.bf16.msra.mxu0 0
    %3920 = vmatprep.subr.bf16.mxu0 0
    %3921 = vmatpush1.bf16.msra.mxu0 0
    %3922 = vmatprep.subr.bf16.mxu0 0
    %3923 = vmatpush1.bf16.msra.mxu0 0
    %3924 = vmatprep.subr.bf16.mxu0 0
    %3925 = vmatpush1.bf16.msra.mxu0 0
    %3926 = vmatprep.subr.bf16.mxu0 0
    %3927 = vmatpush1.bf16.msra.mxu0 0
    %3928 = vmatprep.mubr.bf16.mxu0 0
    %3929 = vmatmul.mubr.bf16.gmra.mrb[0].mxu0 %v3236
    %v3930 = vpop.f32.mrb[0].mxu0
    %v3931 = vadd.f32 %v3888, %v3930
    %v3932 = vpop.f32.mrb[0].mxu0
    %v3933 = vadd.f32 %v3890, %v3932
    %v3934 = vpop.f32.mrb[0].mxu0
    %v3935 = vadd.f32 %v3892, %v3934
    %v3936 = vpop.f32.mrb[0].mxu0
    %v3937 = vadd.f32 %v3894, %v3936
    %3938 = vdwg.mxu0
    %v3939 = vmax.f32 %v3587, 0.0
    %v3940 = vmax.f32 %v3589, 0.0
    %v3941 = vmax.f32 %v3931, 0.0
    %v3942 = vmax.f32 %v3933, 0.0
    %v3943 = vmax.f32 %v3591, 0.0
    %v3944 = vmax.f32 %v3593, 0.0
    %v3945 = vmax.f32 %v3935, 0.0
    %v3946 = vmax.f32 %v3937, 0.0
    %v3947 = vpack.c.bf16 %v3943, %v3939
    %v3948 = vpack.c.bf16 %v3944, %v3940
    %v3949 = vpack.c.bf16 %v3945, %v3941
    %v3950 = vpack.c.bf16 %v3946, %v3942
    %v3951 = vld [vmem:[#allocation8] sm:$0xf]
    %v3952 = vld [vmem:[#allocation8 + $0x4] sm:$0xf]
    %v3953 = vld [vmem:[#allocation8 + $0x8] sm:$0xf]
    %v3954 = vld [vmem:[#allocation8 + $0xc] sm:$0xf]
    %v3955 = vld [vmem:[#allocation8 + $0x10] sm:$0xf]
    %v3956 = vld [vmem:[#allocation8 + $0x14] sm:$0xf]
    %v3957 = vld [vmem:[#allocation8 + $0x18] sm:$0xf]
    %v3958 = vld [vmem:[#allocation8 + $0x1c] sm:$0xf]
    %v3959 = vld [vmem:[#allocation8 + $0x20] sm:$0xf]
    %v3960 = vld [vmem:[#allocation8 + $0x24] sm:$0xf]
    %v3961 = vld [vmem:[#allocation8 + $0x28] sm:$0xf]
    %v3962 = vld [vmem:[#allocation8 + $0x2c] sm:$0xf]
    %v3963 = vld [vmem:[#allocation8 + $0x30] sm:$0xf]
    %v3964 = vld [vmem:[#allocation8 + $0x34] sm:$0xf]
    %v3965 = vld [vmem:[#allocation8 + $0x38] sm:$0xf]
    %v3966 = vld [vmem:[#allocation8 + $0x3c] sm:$0xf]
    %v3967 = vld [vmem:[#allocation8 + $0x40] sm:$0xf]
    %v3968 = vld [vmem:[#allocation8 + $0x44] sm:$0xf]
    %v3969 = vld [vmem:[#allocation8 + $0x48] sm:$0xf]
    %v3970 = vld [vmem:[#allocation8 + $0x4c] sm:$0xf]
    %v3971 = vld [vmem:[#allocation8 + $0x50] sm:$0xf]
    %v3972 = vld [vmem:[#allocation8 + $0x54] sm:$0xf]
    %v3973 = vld [vmem:[#allocation8 + $0x58] sm:$0xf]
    %v3974 = vld [vmem:[#allocation8 + $0x5c] sm:$0xf]
    %v3975 = vld [vmem:[#allocation8 + $0x60] sm:$0xf]
    %v3976 = vld [vmem:[#allocation8 + $0x64] sm:$0xf]
    %v3977 = vld [vmem:[#allocation8 + $0x68] sm:$0xf]
    %v3978 = vld [vmem:[#allocation8 + $0x6c] sm:$0xf]
    %v3979 = vld [vmem:[#allocation8 + $0x70] sm:$0xf]
    %v3980 = vld [vmem:[#allocation8 + $0x74] sm:$0xf]
    %v3981 = vld [vmem:[#allocation8 + $0x78] sm:$0xf]
    %v3982 = vld [vmem:[#allocation8 + $0x7c] sm:$0xf]
    %v3983 = vld [vmem:[#allocation8 + $0x80] sm:$0xf]
    %v3984 = vld [vmem:[#allocation8 + $0x84] sm:$0xf]
    %v3985 = vld [vmem:[#allocation8 + $0x88] sm:$0xf]
    %v3986 = vld [vmem:[#allocation8 + $0x8c] sm:$0xf]
    %v3987 = vld [vmem:[#allocation8 + $0x90] sm:$0xf]
    %v3988 = vld [vmem:[#allocation8 + $0x94] sm:$0xf]
    %v3989 = vld [vmem:[#allocation8 + $0x98] sm:$0xf]
    %v3990 = vld [vmem:[#allocation8 + $0x9c] sm:$0xf]
    %v3991 = vld [vmem:[#allocation8 + $0xa0] sm:$0xf]
    %v3992 = vld [vmem:[#allocation8 + $0xa4] sm:$0xf]
    %v3993 = vld [vmem:[#allocation8 + $0xa8] sm:$0xf]
    %v3994 = vld [vmem:[#allocation8 + $0xac] sm:$0xf]
    %v3995 = vld [vmem:[#allocation8 + $0xb0] sm:$0xf]
    %v3996 = vld [vmem:[#allocation8 + $0xb4] sm:$0xf]
    %v3997 = vld [vmem:[#allocation8 + $0xb8] sm:$0xf]
    %v3998 = vld [vmem:[#allocation8 + $0xbc] sm:$0xf]
    %v3999 = vld [vmem:[#allocation8 + $0xc0] sm:$0xf]
    %v4000 = vld [vmem:[#allocation8 + $0xc4] sm:$0xf]
    %v4001 = vld [vmem:[#allocation8 + $0xc8] sm:$0xf]
    %v4002 = vld [vmem:[#allocation8 + $0xcc] sm:$0xf]
    %v4003 = vld [vmem:[#allocation8 + $0xd0] sm:$0xf]
    %v4004 = vld [vmem:[#allocation8 + $0xd4] sm:$0xf]
    %v4005 = vld [vmem:[#allocation8 + $0xd8] sm:$0xf]
    %v4006 = vld [vmem:[#allocation8 + $0xdc] sm:$0xf]
    %v4007 = vld [vmem:[#allocation8 + $0xe0] sm:$0xf]
    %v4008 = vld [vmem:[#allocation8 + $0xe4] sm:$0xf]
    %v4009 = vld [vmem:[#allocation8 + $0xe8] sm:$0xf]
    %v4010 = vld [vmem:[#allocation8 + $0xec] sm:$0xf]
    %v4011 = vld [vmem:[#allocation8 + $0xf0] sm:$0xf]
    %v4012 = vld [vmem:[#allocation8 + $0xf4] sm:$0xf]
    %v4013 = vld [vmem:[#allocation8 + $0xf8] sm:$0xf]
    %v4014 = vld [vmem:[#allocation8 + $0xfc] sm:$0xf]
    %v4015 = vld [vmem:[#allocation10] sm:$0x1]
    %v4017 = vlaneseq
    %v4018 = vshrl.u32 %v4017, 7
    %v4019 = vsub.s32 0, %v4018
    %v4020 = vrot.slane %v4015, %v4019
    %v4086 = vunpack.c.l.b16 %v3951
    %v4087 = vunpack.c.l.b16 %v3952
    %v4088 = vunpack.c.l.b16 %v3953
    %v4089 = vunpack.c.l.b16 %v3954
    %v4090 = vunpack.c.l.b16 %v3955
    %v4091 = vunpack.c.l.b16 %v3956
    %v4092 = vunpack.c.l.b16 %v3957
    %v4093 = vunpack.c.l.b16 %v3958
    %v4094 = vunpack.c.l.b16 %v3959
    %v4095 = vunpack.c.l.b16 %v3960
    %v4096 = vunpack.c.l.b16 %v3961
    %v4097 = vunpack.c.l.b16 %v3962
    %v4098 = vunpack.c.l.b16 %v3963
    %v4099 = vunpack.c.l.b16 %v3964
    %v4100 = vunpack.c.l.b16 %v3965
    %v4101 = vunpack.c.l.b16 %v3966
    %v4102 = vunpack.c.l.b16 %v3967
    %v4103 = vunpack.c.l.b16 %v3968
    %v4104 = vunpack.c.l.b16 %v3969
    %v4105 = vunpack.c.l.b16 %v3970
    %v4106 = vunpack.c.l.b16 %v3971
    %v4107 = vunpack.c.l.b16 %v3972
    %v4108 = vunpack.c.l.b16 %v3973
    %v4109 = vunpack.c.l.b16 %v3974
    %v4110 = vunpack.c.l.b16 %v3975
    %v4111 = vunpack.c.l.b16 %v3976
    %v4112 = vunpack.c.l.b16 %v3977
    %v4113 = vunpack.c.l.b16 %v3978
    %v4114 = vunpack.c.l.b16 %v3979
    %v4115 = vunpack.c.l.b16 %v3980
    %v4116 = vunpack.c.l.b16 %v3981
    %v4117 = vunpack.c.l.b16 %v3982
    %v4118 = vunpack.c.l.b16 %v3983
    %v4119 = vunpack.c.l.b16 %v3984
    %v4120 = vunpack.c.l.b16 %v3985
    %v4121 = vunpack.c.l.b16 %v3986
    %v4122 = vunpack.c.l.b16 %v3987
    %v4123 = vunpack.c.l.b16 %v3988
    %v4124 = vunpack.c.l.b16 %v3989
    %v4125 = vunpack.c.l.b16 %v3990
    %v4126 = vunpack.c.l.b16 %v3991
    %v4127 = vunpack.c.l.b16 %v3992
    %v4128 = vunpack.c.l.b16 %v3993
    %v4129 = vunpack.c.l.b16 %v3994
    %v4130 = vunpack.c.l.b16 %v3995
    %v4131 = vunpack.c.l.b16 %v3996
    %v4132 = vunpack.c.l.b16 %v3997
    %v4133 = vunpack.c.l.b16 %v3998
    %v4134 = vunpack.c.l.b16 %v3999
    %v4135 = vunpack.c.l.b16 %v4000
    %v4136 = vunpack.c.l.b16 %v4001
    %v4137 = vunpack.c.l.b16 %v4002
    %v4138 = vunpack.c.l.b16 %v4003
    %v4139 = vunpack.c.l.b16 %v4004
    %v4140 = vunpack.c.l.b16 %v4005
    %v4141 = vunpack.c.l.b16 %v4006
    %v4142 = vunpack.c.l.b16 %v4007
    %v4143 = vunpack.c.l.b16 %v4008
    %v4144 = vunpack.c.l.b16 %v4009
    %v4145 = vunpack.c.l.b16 %v4010
    %v4146 = vunpack.c.l.b16 %v4011
    %v4147 = vunpack.c.l.b16 %v4012
    %v4148 = vunpack.c.l.b16 %v4013
    %v4149 = vunpack.c.l.b16 %v4014
    %v4150 = vpack.c.b16 %v4087, %v4086
    %v4151 = vpack.c.b16 %v4089, %v4088
    %v4152 = vpack.c.b16 %v4091, %v4090
    %v4153 = vpack.c.b16 %v4093, %v4092
    %v4154 = vpack.c.b16 %v4095, %v4094
    %v4155 = vpack.c.b16 %v4097, %v4096
    %v4156 = vpack.c.b16 %v4099, %v4098
    %v4157 = vpack.c.b16 %v4101, %v4100
    %v4158 = vpack.c.b16 %v4103, %v4102
    %v4159 = vpack.c.b16 %v4105, %v4104
    %v4160 = vpack.c.b16 %v4107, %v4106
    %v4161 = vpack.c.b16 %v4109, %v4108
    %v4162 = vpack.c.b16 %v4111, %v4110
    %v4163 = vpack.c.b16 %v4113, %v4112
    %v4164 = vpack.c.b16 %v4115, %v4114
    %v4165 = vpack.c.b16 %v4117, %v4116
    %v4166 = vpack.c.b16 %v4119, %v4118
    %v4167 = vpack.c.b16 %v4121, %v4120
    %v4168 = vpack.c.b16 %v4123, %v4122
    %v4169 = vpack.c.b16 %v4125, %v4124
    %v4170 = vpack.c.b16 %v4127, %v4126
    %v4171 = vpack.c.b16 %v4129, %v4128
    %v4172 = vpack.c.b16 %v4131, %v4130
    %v4173 = vpack.c.b16 %v4133, %v4132
    %v4174 = vpack.c.b16 %v4135, %v4134
    %v4175 = vpack.c.b16 %v4137, %v4136
    %v4176 = vpack.c.b16 %v4139, %v4138
    %v4177 = vpack.c.b16 %v4141, %v4140
    %v4178 = vpack.c.b16 %v4143, %v4142
    %v4179 = vpack.c.b16 %v4145, %v4144
    %v4180 = vpack.c.b16 %v4147, %v4146
    %v4181 = vpack.c.b16 %v4149, %v4148
    %4214 = vmatprep.subr.bf16.mxu0 0
    %4215 = vmatpush1.bf16.msra.mxu0 %v4150
    %4216 = vmatprep.subr.bf16.mxu0 0
    %4217 = vmatpush1.bf16.msra.mxu0 %v4151
    %4218 = vmatprep.subr.bf16.mxu0 0
    %4219 = vmatpush1.bf16.msra.mxu0 %v4152
    %4220 = vmatprep.subr.bf16.mxu0 0
    %4221 = vmatpush1.bf16.msra.mxu0 %v4153
    %4222 = vmatprep.subr.bf16.mxu0 0
    %4223 = vmatpush1.bf16.msra.mxu0 %v4154
    %4224 = vmatprep.subr.bf16.mxu0 0
    %4225 = vmatpush1.bf16.msra.mxu0 %v4155
    %4226 = vmatprep.subr.bf16.mxu0 0
    %4227 = vmatpush1.bf16.msra.mxu0 %v4156
    %4228 = vmatprep.subr.bf16.mxu0 0
    %4229 = vmatpush1.bf16.msra.mxu0 %v4157
    %4230 = vmatprep.subr.bf16.mxu0 0
    %4231 = vmatpush1.bf16.msra.mxu0 %v4158
    %4232 = vmatprep.subr.bf16.mxu0 0
    %4233 = vmatpush1.bf16.msra.mxu0 %v4159
    %4234 = vmatprep.subr.bf16.mxu0 0
    %4235 = vmatpush1.bf16.msra.mxu0 %v4160
    %4236 = vmatprep.subr.bf16.mxu0 0
    %4237 = vmatpush1.bf16.msra.mxu0 %v4161
    %4238 = vmatprep.subr.bf16.mxu0 0
    %4239 = vmatpush1.bf16.msra.mxu0 %v4162
    %4240 = vmatprep.subr.bf16.mxu0 0
    %4241 = vmatpush1.bf16.msra.mxu0 %v4163
    %4242 = vmatprep.subr.bf16.mxu0 0
    %4243 = vmatpush1.bf16.msra.mxu0 %v4164
    %4244 = vmatprep.subr.bf16.mxu0 0
    %4245 = vmatpush1.bf16.msra.mxu0 %v4165
    %4246 = vmatprep.mubr.bf16.mxu0 %v3948
    %4247 = vmatmul.mubr.bf16.gmra.mrb[0].mxu0 %v3947
    %v4248 = vpop.f32.mrb[0].mxu0
    %v4249 = vadd.f32 %v4020, %v4248
    %v4250 = vpop.f32.mrb[0].mxu0
    %v4251 = vpop.f32.mrb[0].mxu0
    %v4252 = vadd.f32 %v4020, %v4251
    %v4253 = vpop.f32.mrb[0].mxu0
    %4254 = vdwg.mxu0
    %4255 = vmatprep.subr.bf16.mxu0 0
    %4256 = vmatpush1.bf16.msra.mxu0 %v4166
    %4257 = vmatprep.subr.bf16.mxu0 0
    %4258 = vmatpush1.bf16.msra.mxu0 %v4167
    %4259 = vmatprep.subr.bf16.mxu0 0
    %4260 = vmatpush1.bf16.msra.mxu0 %v4168
    %4261 = vmatprep.subr.bf16.mxu0 0
    %4262 = vmatpush1.bf16.msra.mxu0 %v4169
    %4263 = vmatprep.subr.bf16.mxu0 0
    %4264 = vmatpush1.bf16.msra.mxu0 %v4170
    %4265 = vmatprep.subr.bf16.mxu0 0
    %4266 = vmatpush1.bf16.msra.mxu0 %v4171
    %4267 = vmatprep.subr.bf16.mxu0 0
    %4268 = vmatpush1.bf16.msra.mxu0 %v4172
    %4269 = vmatprep.subr.bf16.mxu0 0
    %4270 = vmatpush1.bf16.msra.mxu0 %v4173
    %4271 = vmatprep.subr.bf16.mxu0 0
    %4272 = vmatpush1.bf16.msra.mxu0 %v4174
    %4273 = vmatprep.subr.bf16.mxu0 0
    %4274 = vmatpush1.bf16.msra.mxu0 %v4175
    %4275 = vmatprep.subr.bf16.mxu0 0
    %4276 = vmatpush1.bf16.msra.mxu0 %v4176
    %4277 = vmatprep.subr.bf16.mxu0 0
    %4278 = vmatpush1.bf16.msra.mxu0 %v4177
    %4279 = vmatprep.subr.bf16.mxu0 0
    %4280 = vmatpush1.bf16.msra.mxu0 %v4178
    %4281 = vmatprep.subr.bf16.mxu0 0
    %4282 = vmatpush1.bf16.msra.mxu0 %v4179
    %4283 = vmatprep.subr.bf16.mxu0 0
    %4284 = vmatpush1.bf16.msra.mxu0 %v4180
    %4285 = vmatprep.subr.bf16.mxu0 0
    %4286 = vmatpush1.bf16.msra.mxu0 %v4181
    %4287 = vmatprep.mubr.bf16.mxu0 %v3950
    %4288 = vmatmul.mubr.bf16.gmra.mrb[0].mxu0 %v3949
    %v4289 = vpop.f32.mrb[0].mxu0
    %v4290 = vadd.f32 %v4249, %v4289
    %v4291 = vpop.f32.mrb[0].mxu0
    %v4292 = vpop.f32.mrb[0].mxu0
    %v4293 = vadd.f32 %v4252, %v4292
    %v4294 = vpop.f32.mrb[0].mxu0
    %4295 = vdwg.mxu0
    %v4296 = vmax.f32 %v4290, 0.0
    %v4297 = vmax.f32 %v4293, 0.0
    %v4298 = vpack.c.bf16 %v4297, %v4296
    %v4299 = vld [vmem:[#allocation11] sm:$0xf]
    %v4300 = vld [vmem:[#allocation11 + $0x4] sm:$0xf]
    %v4301 = vld [vmem:[#allocation11 + $0x8] sm:$0xf]
    %v4302 = vld [vmem:[#allocation11 + $0xc] sm:$0xf]
    %v4303 = vld [vmem:[#allocation11 + $0x10] sm:$0xf]
    %v4304 = vld [vmem:[#allocation11 + $0x14] sm:$0xf]
    %v4305 = vld [vmem:[#allocation11 + $0x18] sm:$0xf]
    %v4306 = vld [vmem:[#allocation11 + $0x1c] sm:$0xf]
    %v4307 = vld [vmem:[#allocation11 + $0x20] sm:$0xf]
    %v4308 = vld [vmem:[#allocation11 + $0x24] sm:$0xf]
    %v4309 = vld [vmem:[#allocation11 + $0x28] sm:$0xf]
    %v4310 = vld [vmem:[#allocation11 + $0x2c] sm:$0xf]
    %v4311 = vld [vmem:[#allocation11 + $0x30] sm:$0xf]
    %v4312 = vld [vmem:[#allocation11 + $0x34] sm:$0xf]
    %v4313 = vld [vmem:[#allocation11 + $0x38] sm:$0xf]
    %v4314 = vld [vmem:[#allocation11 + $0x3c] sm:$0xf]
    %v4315 = vld [vmem:[#allocation13] sm:$0x1]
    %v4317 = vlaneseq
    %v4318 = vshrl.u32 %v4317, 7
    %v4319 = vsub.s32 0, %v4318
    %v4320 = vrot.slane %v4315, %v4319
    %v4338 = vunpack.c.l.b16 %v4299
    %v4339 = vunpack.c.l.b16 %v4300
    %v4340 = vunpack.c.l.b16 %v4301
    %v4341 = vunpack.c.l.b16 %v4302
    %v4342 = vunpack.c.l.b16 %v4303
    %v4343 = vunpack.c.l.b16 %v4304
    %v4344 = vunpack.c.l.b16 %v4305
    %v4345 = vunpack.c.l.b16 %v4306
    %v4346 = vunpack.c.l.b16 %v4307
    %v4347 = vunpack.c.l.b16 %v4308
    %v4348 = vunpack.c.l.b16 %v4309
    %v4349 = vunpack.c.l.b16 %v4310
    %v4350 = vunpack.c.l.b16 %v4311
    %v4351 = vunpack.c.l.b16 %v4312
    %v4352 = vunpack.c.l.b16 %v4313
    %v4353 = vunpack.c.l.b16 %v4314
    %v4354 = vpack.c.b16 %v4339, %v4338
    %v4355 = vpack.c.b16 %v4341, %v4340
    %v4356 = vpack.c.b16 %v4343, %v4342
    %v4357 = vpack.c.b16 %v4345, %v4344
    %v4358 = vpack.c.b16 %v4347, %v4346
    %v4359 = vpack.c.b16 %v4349, %v4348
    %v4360 = vpack.c.b16 %v4351, %v4350
    %v4361 = vpack.c.b16 %v4353, %v4352
    %4370 = vmatprep.subr.bf16.mxu0 0
    %4371 = vmatpush1.bf16.msra.mxu0 %v4354
    %4372 = vmatprep.subr.bf16.mxu0 0
    %4373 = vmatpush1.bf16.msra.mxu0 %v4355
    %4374 = vmatprep.subr.bf16.mxu0 0
    %4375 = vmatpush1.bf16.msra.mxu0 %v4356
    %4376 = vmatprep.subr.bf16.mxu0 0
    %4377 = vmatpush1.bf16.msra.mxu0 %v4357
    %4378 = vmatprep.subr.bf16.mxu0 0
    %4379 = vmatpush1.bf16.msra.mxu0 %v4358
    %4380 = vmatprep.subr.bf16.mxu0 0
    %4381 = vmatpush1.bf16.msra.mxu0 %v4359
    %4382 = vmatprep.subr.bf16.mxu0 0
    %4383 = vmatpush1.bf16.msra.mxu0 %v4360
    %4384 = vmatprep.subr.bf16.mxu0 0
    %4385 = vmatpush1.bf16.msra.mxu0 %v4361
    %4386 = vmatprep.subr.bf16.mxu0 0
    %4387 = vmatpush1.bf16.msra.mxu0 0
    %4388 = vmatprep.subr.bf16.mxu0 0
    %4389 = vmatpush1.bf16.msra.mxu0 0
    %4390 = vmatprep.subr.bf16.mxu0 0
    %4391 = vmatpush1.bf16.msra.mxu0 0
    %4392 = vmatprep.subr.bf16.mxu0 0
    %4393 = vmatpush1.bf16.msra.mxu0 0
    %4394 = vmatprep.subr.bf16.mxu0 0
    %4395 = vmatpush1.bf16.msra.mxu0 0
    %4396 = vmatprep.subr.bf16.mxu0 0
    %4397 = vmatpush1.bf16.msra.mxu0 0
    %4398 = vmatprep.subr.bf16.mxu0 0
    %4399 = vmatpush1.bf16.msra.mxu0 0
    %4400 = vmatprep.subr.bf16.mxu0 0
    %4401 = vmatpush1.bf16.msra.mxu0 0
    %4402 = vmatprep.mubr.bf16.mxu0 0
    %4403 = vmatmul.mubr.bf16.gmra.mrb[0].mxu0 %v4298
    %v4404 = vpop.f32.mrb[0].mxu0
    %v4405 = vadd.f32 %v4320, %v4404
    %v4406 = vpop.f32.mrb[0].mxu0
    %v4407 = vpop.f32.mrb[0].mxu0
    %v4408 = vadd.f32 %v4320, %v4407
    %v4409 = vpop.f32.mrb[0].mxu0
    %4410 = vdwg.mxu0
    %4411 = vst [vmem:[#allocation14] sm:$0xff] %v4405
    %4412 = vst [vmem:[#allocation14 + $0x8] sm:$0xff] %v4408
    // Predicated region
    $region58: #{tpu_custom_call.1} parent=1 // pred_check
      _
    $region59: #{tpu_custom_call.1} parent=1 // pred_check_branch
      %4414 = sbr.rel (0) target = $region61
    $region60: #{tpu_custom_call.1} parent=1 // pred_region
      %s4416 = ssub.s32 256, 32
      %4417 = vsyncadd [#allocation4], %s4416
      %s4418 = sshll.u32 [#allocation14], 4
      %s4419 = int_to_ptr.vmem [resolvable:$true] %s4418
      %4424 = dma.vmem_to_hbm [thread:$0]  %s4419, 32, %s7, [#allocation4], 32, 32, 2
    $region61: #{tpu_custom_call.1} parent=1 // pred_fallthru
      _
    // Predicated region
    $region62: #{tpu_custom_call.1} parent=1 // pred_check
      _
    $region63: #{tpu_custom_call.1} parent=1 // pred_check_branch
      %4426 = sbr.rel (0) target = $region65
    $region64: #{tpu_custom_call.1} parent=1 // pred_region
      %4427 = dma.done [#allocation4], 256
    $region65: #{tpu_custom_call.1} parent=1 // pred_fallthru
      _
    %4428 = vsyncpa [#allocation3], 1
    %4429 = vsyncpa [#allocation6], 1
    %4430 = vsyncpa [#allocation9], 1
    %4431 = vsyncpa [#allocation12], 1
    %4432 = vsyncpa [#allocation4], 1

</llo_original>
